<compile_context>
chip_gen: v5e
topology: v5e:2x2
jax: 0.10.0
libtpu: 0.0.40
codegen_flags: <defaults>
</compile_context>

<pallas_src>
import functools
import math

import jax
import jax.numpy as jnp
from jax.experimental import pallas as pl
from jax.experimental.pallas import tpu as pltpu

NEG_SLOPE = 0.01      # F.leaky_relu default
MASK_BIAS = -1e30     # additive bias for non-edges
M_FLOOR = -1e20       # running-max floor:  MASK_BIAS << M_FLOOR << any real logit


def _gat_kernel(num_heads, el_ref, er_ref, z_ref, adj_ref, out_ref,
                m_sc, l_sc, acc_sc):
    # el_ref:  (H, TK)   f32   src attention logits for this source tile
    # er_ref:  (TQ, H)   f32   dst attention logits for this destination tile
    # z_ref:   (H, TK, D) bf16 projected features for this source tile
    # adj_ref: (TQ, TK)  int8  adjacency tile, adj[dst, src] in {0, 1}
    # out_ref: (TQ, H*D) f32   lane-dense merged output tile (written at the last k step)
    # m_sc/l_sc: (H, TQ, 1)    online-softmax running max / denominator
    # acc_sc:  (H, TQ, D)      online-softmax running numerator
    k = pl.program_id(1)

    @pl.when(k == 0)
    def _():
        m_sc[...] = jnp.full(m_sc.shape, M_FLOOR, jnp.float32)
        l_sc[...] = jnp.zeros(l_sc.shape, jnp.float32)
        acc_sc[...] = jnp.zeros(acc_sc.shape, jnp.float32)

    # Head-independent additive mask: 0 for edges, -1e30 for non-edges.
    # (one cast + sub + mul per element per TILE, replacing 2 selects + 1 compare per HEAD)
    bias = (adj_ref[...].astype(jnp.float32) - 1.0) * 1e30          # (TQ, TK)

    er = er_ref[...]                                                # (TQ, H)
    el = el_ref[...]                                                # (H, TK)

    for hd in range(num_heads):                                     # small static head loop
        # e[dst, src] = leaky_relu(el[src] + er[dst]) + bias
        e = er[:, hd:hd + 1] + el[hd:hd + 1, :]                     # (TQ, TK)
        e = jnp.where(e > 0, e, NEG_SLOPE * e)                      # leaky_relu
        e = e + bias

        # online (streaming) softmax over source tiles
        m_prev = m_sc[hd]                                           # (TQ, 1)
        m_new = jnp.maximum(m_prev, jnp.max(e, axis=1, keepdims=True))
        a = jnp.exp(m_prev - m_new)                                 # rescale old partials
        p = jnp.exp(e - m_new)                                      # masked entries -> 0
        l_sc[hd] = a * l_sc[hd] + jnp.sum(p, axis=1, keepdims=True)
        acc_sc[hd] = a * acc_sc[hd] + jnp.dot(
            p.astype(jnp.bfloat16), z_ref[hd],                      # bf16 MXU, f32 acc
            preferred_element_type=jnp.float32)                     # (TQ, D)
        m_sc[hd] = m_new

    @pl.when(k == pl.num_programs(1) - 1)
    def _():
        # Normalize after aggregation, then store all heads as ONE full-width write.
        parts = []
        for hd in range(num_heads):
            inv = pl.reciprocal(jnp.maximum(l_sc[hd], 1e-30), approx=True)
            parts.append(acc_sc[hd] * inv)
        out_ref[...] = jnp.concatenate(parts, axis=1).astype(out_ref.dtype)


def _round_up(x, m):
    return ((x + m - 1) // m) * m


def multi_head_gat(h, W, A, adj, *, row_tile=128, src_tile=512):
    """h: (N, in_dim), W: (H, out_dim, in_dim), A: (H, 2, out_dim),
    adj: (N, N) with adj[dst, src] != 0 for an edge src -> dst.
    Returns (N, H * out_dim)   (merge='cat')."""
    num_heads, out_dim, in_dim = W.shape
    N = h.shape[0]
    HD = num_heads * out_dim

    h = h.astype(jnp.float32)
    Wf = W.astype(jnp.float32)
    Af = A.astype(jnp.float32)

    # ---- grid-invariant work hoisted out of the kernel (runs exactly once) ----
    z = jnp.einsum('nk,hdk->hnd', h, Wf)                   # (H, N, D)  fused projection
    el = jnp.einsum('hnd,hd->hn', z, Af[:, 0, :])          # (H, N)     source logits
    er = jnp.einsum('hnd,hd->nh', z, Af[:, 1, :])          # (N, H)     destination logits
    z_b = z.astype(jnp.bfloat16)                           # bf16 MXU operand for aggregation
    adj_i8 = (adj != 0).astype(jnp.int8)                   # 1 B/elem dominant HBM stream

    # ---- tiling: dst rows (parallel) x src cols (arbitrary, online softmax) ----
    tq = min(row_tile, _round_up(N, 8))
    tk = min(src_tile, _round_up(N, 128))
    np_dst = _round_up(N, tq)
    np_src = _round_up(N, tk)
    if np_dst > N:                                         # never fall back to tq = N
        adj_i8 = jnp.pad(adj_i8, ((0, np_dst - N), (0, 0)))
        er = jnp.pad(er, ((0, np_dst - N), (0, 0)))
    if np_src > N:
        adj_i8 = jnp.pad(adj_i8, ((0, 0), (0, np_src - N)))
        el = jnp.pad(el, ((0, 0), (0, np_src - N)))
        z_b = jnp.pad(z_b, ((0, 0), (0, np_src - N), (0, 0)))

    grid = (np_dst // tq, np_src // tk)
    kernel = functools.partial(_gat_kernel, num_heads)

    out = pl.pallas_call(
        kernel,
        out_shape=jax.ShapeDtypeStruct((np_dst, HD), jnp.float32),
        grid_spec=pltpu.PrefetchScalarGridSpec(
            num_scalar_prefetch=0,
            grid=grid,
            in_specs=[
                pl.BlockSpec((num_heads, tk), lambda i, k: (0, k)),              # el
                pl.BlockSpec((tq, num_heads), lambda i, k: (i, 0)),              # er
                pl.BlockSpec((num_heads, tk, out_dim), lambda i, k: (0, k, 0)),  # z (bf16)
                pl.BlockSpec((tq, tk), lambda i, k: (i, k)),                     # adj (int8)
            ],
            out_specs=pl.BlockSpec((tq, HD), lambda i, k: (i, 0)),
            scratch_shapes=[
                pltpu.VMEM((num_heads, tq, 1), jnp.float32),         # running max
                pltpu.VMEM((num_heads, tq, 1), jnp.float32),         # running denominator
                pltpu.VMEM((num_heads, tq, out_dim), jnp.float32),   # running numerator
            ],
        ),
        compiler_params=pltpu.CompilerParams(
            dimension_semantics=("parallel", "arbitrary")),
    )(el, er, z_b, adj_i8)

    return out[:N]


def _reference(h, W, A, adj):
    """Plain-JAX reference of the same forward pass (sanity check)."""
    outs = []
    for hd in range(W.shape[0]):
        z = h @ W[hd].T
        el = z @ A[hd, 0]
        er = z @ A[hd, 1]
        e = er[:, None] + el[None, :]
        e = jnp.where(e > 0, e, NEG_SLOPE * e)
        e = jnp.where(adj > 0, e, -1e30)
        alpha = jax.nn.softmax(e, axis=1)
        alpha = jnp.where(adj > 0, alpha, 0.0)
        outs.append(alpha @ z)
    return jnp.concatenate(outs, axis=1)


if __name__ == "__main__":
    # H * out_dim = 128 -> the merged output tile is exactly one full lane width.
    N, in_dim, out_dim, num_heads = 256, 32, 32, 4

    key = jax.random.PRNGKey(0)
    k_h, k_w, k_a, k_e = jax.random.split(key, 4)

    # node features
    h = jax.random.normal(k_h, (N, in_dim), dtype=jnp.float32)

    # deterministic xavier_normal_ init, gain = calculate_gain('relu') = sqrt(2)
    gain = math.sqrt(2.0)
    std_fc = gain * math.sqrt(2.0 / (in_dim + out_dim))        # fc.weight (out_dim, in_dim)
    std_at = gain * math.sqrt(2.0 / (2 * out_dim + 1))         # attn_fc.weight (1, 2*out_dim)
    W = std_fc * jax.random.normal(k_w, (num_heads, out_dim, in_dim), dtype=jnp.float32)
    A = std_at * jax.random.normal(k_a, (num_heads, 2, out_dim), dtype=jnp.float32)

    # synthetic graph: random edges + self-loops so every node has >= 1 in-edge
    rnd = jax.random.uniform(k_e, (N, N))
    adj = (rnd < 0.1).astype(jnp.float32)
    adj = jnp.maximum(adj, jnp.eye(N, dtype=jnp.float32))      # adj[dst, src]

    out = jax.block_until_ready(multi_head_gat(h, W, A, adj))

    ref = _reference(h, W, A, adj)
    assert out.shape == (N, num_heads * out_dim)
    # tolerance accounts for bf16 MXU operands (~1e-3 rel) + approx reciprocal (~2^-12)
    assert jnp.allclose(out, ref, atol=1e-2, rtol=1e-2), float(jnp.max(jnp.abs(out - ref)))

    print("KERNEL_OK")
</pallas_src>

<mosaic_0001>
module attributes {stable_mosaic.version = 11 : i64} {
  func.func @_gat_kernel(%arg0: i32, %arg1: i32, %arg2: memref<4x256xf32, #tpu.memory_space<vmem>>, %arg3: memref<128x4xf32, #tpu.memory_space<vmem>>, %arg4: memref<4x256x32xbf16, #tpu.memory_space<vmem>>, %arg5: memref<128x256xi8, #tpu.memory_space<vmem>>, %arg6: memref<128x128xf32, #tpu.memory_space<vmem>>, %arg7: memref<4x128x1xf32, #tpu.memory_space<vmem>>, %arg8: memref<4x128x1xf32, #tpu.memory_space<vmem>>, %arg9: memref<4x128x32xf32, #tpu.memory_space<vmem>>) attributes {dimension_semantics = [#tpu.dimension_semantics<parallel>, #tpu.dimension_semantics<arbitrary>], iteration_bounds = array<i64: 2, 1>, scalar_prefetch = 0 : i64, scratch_operands = 3 : i64, tpu.core_type = #tpu.core_type<tc>, window_params = [{transform_indices = @transform_0, window_bounds = array<i64: 4, 256>}, {transform_indices = @transform_1, window_bounds = array<i64: 128, 4>}, {transform_indices = @transform_2, window_bounds = array<i64: 4, 256, 32>}, {transform_indices = @transform_3, window_bounds = array<i64: 128, 256>}, {transform_indices = @transform_4, window_bounds = array<i64: 128, 128>}]} {
    %c0_i32 = arith.constant 0 : i32
    %0 = arith.cmpi eq, %arg1, %c0_i32 : i32
    %1 = arith.extui %0 : i1 to i32
    %c0_i32_0 = arith.constant 0 : i32
    %2 = arith.cmpi ne, %1, %c0_i32_0 : i32
    scf.if %2 {
      %cst_110 = arith.constant -1.000000e+20 : f32
      %194 = vector.broadcast %cst_110 : f32 to vector<4x128x1xf32>
      %c0_111 = arith.constant 0 : index
      %c0_112 = arith.constant 0 : index
      %c0_113 = arith.constant 0 : index
      %195 = vector.load %arg7[%c0_111, %c0_112, %c0_113] : memref<4x128x1xf32, #tpu.memory_space<vmem>>, vector<4x128x1xf32>
      tpu.vector_store %arg7[%c0_111, %c0_112, %c0_113], %194 {strides = array<i32>} : memref<4x128x1xf32, #tpu.memory_space<vmem>>, vector<4x128x1xf32>,
      %cst_114 = arith.constant 0.000000e+00 : f32
      %196 = vector.broadcast %cst_114 : f32 to vector<4x128x1xf32>
      %c0_115 = arith.constant 0 : index
      %c0_116 = arith.constant 0 : index
      %c0_117 = arith.constant 0 : index
      %197 = vector.load %arg8[%c0_115, %c0_116, %c0_117] : memref<4x128x1xf32, #tpu.memory_space<vmem>>, vector<4x128x1xf32>
      tpu.vector_store %arg8[%c0_115, %c0_116, %c0_117], %196 {strides = array<i32>} : memref<4x128x1xf32, #tpu.memory_space<vmem>>, vector<4x128x1xf32>,
      %cst_118 = arith.constant 0.000000e+00 : f32
      %198 = vector.broadcast %cst_118 : f32 to vector<4x128x32xf32>
      %c0_119 = arith.constant 0 : index
      %c0_120 = arith.constant 0 : index
      %c0_121 = arith.constant 0 : index
      %199 = vector.load %arg9[%c0_119, %c0_120, %c0_121] : memref<4x128x32xf32, #tpu.memory_space<vmem>>, vector<4x128x32xf32>
      tpu.vector_store %arg9[%c0_119, %c0_120, %c0_121], %198 {strides = array<i32>} : memref<4x128x32xf32, #tpu.memory_space<vmem>>, vector<4x128x32xf32>,
    } else {
    }
    %c0 = arith.constant 0 : index
    %c0_1 = arith.constant 0 : index
    %3 = vector.load %arg5[%c0, %c0_1] : memref<128x256xi8, #tpu.memory_space<vmem>>, vector<128x256xi8>
    %4 = arith.sitofp %3 : vector<128x256xi8> to vector<128x256xf32>
    %cst = arith.constant 1.000000e+00 : f32
    %5 = vector.broadcast %cst : f32 to vector<128x256xf32>
    %6 = arith.subf %4, %5 : vector<128x256xf32>
    %cst_2 = arith.constant 1.000000e+30 : f32
    %7 = vector.broadcast %cst_2 : f32 to vector<128x256xf32>
    %8 = arith.mulf %6, %7 : vector<128x256xf32>
    %c0_3 = arith.constant 0 : index
    %c0_4 = arith.constant 0 : index
    %9 = vector.load %arg3[%c0_3, %c0_4] : memref<128x4xf32, #tpu.memory_space<vmem>>, vector<128x4xf32>
    %c0_5 = arith.constant 0 : index
    %c0_6 = arith.constant 0 : index
    %10 = vector.load %arg2[%c0_5, %c0_6] : memref<4x256xf32, #tpu.memory_space<vmem>>, vector<4x256xf32>
    %11 = vector.extract_strided_slice %9 {offsets = [0, 0], sizes = [128, 1], strides = [1, 1]} : vector<128x4xf32> to vector<128x1xf32>
    %12 = vector.extract_strided_slice %10 {offsets = [0, 0], sizes = [1, 256], strides = [1, 1]} : vector<4x256xf32> to vector<1x256xf32>
    %13 = vector.broadcast %11 : vector<128x1xf32> to vector<128x256xf32>
    %14 = vector.broadcast %12 : vector<1x256xf32> to vector<128x256xf32>
    %15 = arith.addf %13, %14 : vector<128x256xf32>
    %cst_7 = arith.constant 0.000000e+00 : f32
    %16 = vector.broadcast %cst_7 : f32 to vector<128x256xf32>
    %17 = arith.cmpf ogt, %15, %16 : vector<128x256xf32>
    %cst_8 = arith.constant 0.00999999977 : f32
    %18 = vector.broadcast %cst_8 : f32 to vector<128x256xf32>
    %19 = arith.mulf %18, %15 : vector<128x256xf32>
    %20 = arith.select %17, %15, %19 : vector<128x256xi1>, vector<128x256xf32>
    %21 = arith.addf %20, %8 : vector<128x256xf32>
    %c0_9 = arith.constant 0 : index
    %c0_10 = arith.constant 0 : index
    %c0_11 = arith.constant 0 : index
    %22 = vector.load %arg7[%c0_9, %c0_10, %c0_11] : memref<4x128x1xf32, #tpu.memory_space<vmem>>, vector<1x128x1xf32>
    %23 = vector.shape_cast %22 : vector<1x128x1xf32> to vector<128x1xf32>
    %cst_12 = arith.constant dense<0xFF800000> : vector<128xf32>
    %24 = vector.multi_reduction <maximumf>, %21, %cst_12 [1] : vector<128x256xf32> to vector<128xf32>
    %25 = vector.shape_cast %24 : vector<128xf32> to vector<128x1xf32>
    %26 = arith.maximumf %23, %25 : vector<128x1xf32>
    %27 = arith.subf %23, %26 : vector<128x1xf32>
    %28 = math.exp %27 : vector<128x1xf32>
    %29 = vector.broadcast %26 : vector<128x1xf32> to vector<128x256xf32>
    %30 = arith.subf %21, %29 : vector<128x256xf32>
    %31 = math.exp %30 : vector<128x256xf32>
    %c0_13 = arith.constant 0 : index
    %c0_14 = arith.constant 0 : index
    %c0_15 = arith.constant 0 : index
    %32 = vector.load %arg8[%c0_13, %c0_14, %c0_15] : memref<4x128x1xf32, #tpu.memory_space<vmem>>, vector<1x128x1xf32>
    %33 = vector.shape_cast %32 : vector<1x128x1xf32> to vector<128x1xf32>
    %34 = arith.mulf %28, %33 : vector<128x1xf32>
    %cst_16 = arith.constant dense<0.000000e+00> : vector<128xf32>
    %35 = vector.multi_reduction <add>, %31, %cst_16 [1] : vector<128x256xf32> to vector<128xf32>
    %36 = vector.shape_cast %35 : vector<128xf32> to vector<128x1xf32>
    %37 = arith.addf %34, %36 : vector<128x1xf32>
    %c0_17 = arith.constant 0 : index
    %c0_18 = arith.constant 0 : index
    %c0_19 = arith.constant 0 : index
    %38 = vector.load %arg8[%c0_17, %c0_18, %c0_19] : memref<4x128x1xf32, #tpu.memory_space<vmem>>, vector<1x128x1xf32>
    %39 = vector.shape_cast %38 : vector<1x128x1xf32> to vector<128x1xf32>
    %40 = vector.shape_cast %37 : vector<128x1xf32> to vector<1x128x1xf32>
    tpu.vector_store %arg8[%c0_17, %c0_18, %c0_19], %40 {strides = array<i32>} : memref<4x128x1xf32, #tpu.memory_space<vmem>>, vector<1x128x1xf32>,
    %c0_20 = arith.constant 0 : index
    %c0_21 = arith.constant 0 : index
    %c0_22 = arith.constant 0 : index
    %41 = vector.load %arg9[%c0_20, %c0_21, %c0_22] : memref<4x128x32xf32, #tpu.memory_space<vmem>>, vector<1x128x32xf32>
    %42 = vector.shape_cast %41 : vector<1x128x32xf32> to vector<128x32xf32>
    %43 = vector.broadcast %28 : vector<128x1xf32> to vector<128x32xf32>
    %44 = arith.mulf %43, %42 : vector<128x32xf32>
    %45 = arith.truncf %31 : vector<128x256xf32> to vector<128x256xbf16>
    %c0_23 = arith.constant 0 : index
    %c0_24 = arith.constant 0 : index
    %c0_25 = arith.constant 0 : index
    %46 = vector.load %arg4[%c0_23, %c0_24, %c0_25] : memref<4x256x32xbf16, #tpu.memory_space<vmem>>, vector<1x256x32xbf16>
    %47 = vector.shape_cast %46 : vector<1x256x32xbf16> to vector<256x32xbf16>
    %cst_26 = arith.constant dense<0.000000e+00> : vector<128x32xf32>
    %48 = tpu.matmul %45, %47, %cst_26 {dimension_numbers = #tpu.dot_dimension_numbers<[1], [0], [0], [1], [0, 0, 1, 1], [], []>} : vector<128x256xbf16>, vector<256x32xbf16>, vector<128x32xf32> -> vector<128x32xf32>
    %49 = arith.addf %44, %48 : vector<128x32xf32>
    %c0_27 = arith.constant 0 : index
    %c0_28 = arith.constant 0 : index
    %c0_29 = arith.constant 0 : index
    %50 = vector.load %arg9[%c0_27, %c0_28, %c0_29] : memref<4x128x32xf32, #tpu.memory_space<vmem>>, vector<1x128x32xf32>
    %51 = vector.shape_cast %50 : vector<1x128x32xf32> to vector<128x32xf32>
    %52 = vector.shape_cast %49 : vector<128x32xf32> to vector<1x128x32xf32>
    tpu.vector_store %arg9[%c0_27, %c0_28, %c0_29], %52 {strides = array<i32>} : memref<4x128x32xf32, #tpu.memory_space<vmem>>, vector<1x128x32xf32>,
    %c0_30 = arith.constant 0 : index
    %c0_31 = arith.constant 0 : index
    %c0_32 = arith.constant 0 : index
    %53 = vector.load %arg7[%c0_30, %c0_31, %c0_32] : memref<4x128x1xf32, #tpu.memory_space<vmem>>, vector<1x128x1xf32>
    %54 = vector.shape_cast %53 : vector<1x128x1xf32> to vector<128x1xf32>
    %55 = vector.shape_cast %26 : vector<128x1xf32> to vector<1x128x1xf32>
    tpu.vector_store %arg7[%c0_30, %c0_31, %c0_32], %55 {strides = array<i32>} : memref<4x128x1xf32, #tpu.memory_space<vmem>>, vector<1x128x1xf32>,
    %56 = vector.extract_strided_slice %9 {offsets = [0, 1], sizes = [128, 1], strides = [1, 1]} : vector<128x4xf32> to vector<128x1xf32>
    %57 = vector.extract_strided_slice %10 {offsets = [1, 0], sizes = [1, 256], strides = [1, 1]} : vector<4x256xf32> to vector<1x256xf32>
    %58 = vector.broadcast %56 : vector<128x1xf32> to vector<128x256xf32>
    %59 = vector.broadcast %57 : vector<1x256xf32> to vector<128x256xf32>
    %60 = arith.addf %58, %59 : vector<128x256xf32>
    %cst_33 = arith.constant 0.000000e+00 : f32
    %61 = vector.broadcast %cst_33 : f32 to vector<128x256xf32>
    %62 = arith.cmpf ogt, %60, %61 : vector<128x256xf32>
    %cst_34 = arith.constant 0.00999999977 : f32
    %63 = vector.broadcast %cst_34 : f32 to vector<128x256xf32>
    %64 = arith.mulf %63, %60 : vector<128x256xf32>
    %65 = arith.select %62, %60, %64 : vector<128x256xi1>, vector<128x256xf32>
    %66 = arith.addf %65, %8 : vector<128x256xf32>
    %c1 = arith.constant 1 : index
    %c0_35 = arith.constant 0 : index
    %c0_36 = arith.constant 0 : index
    %67 = vector.load %arg7[%c1, %c0_35, %c0_36] : memref<4x128x1xf32, #tpu.memory_space<vmem>>, vector<1x128x1xf32>
    %68 = vector.shape_cast %67 : vector<1x128x1xf32> to vector<128x1xf32>
    %cst_37 = arith.constant dense<0xFF800000> : vector<128xf32>
    %69 = vector.multi_reduction <maximumf>, %66, %cst_37 [1] : vector<128x256xf32> to vector<128xf32>
    %70 = vector.shape_cast %69 : vector<128xf32> to vector<128x1xf32>
    %71 = arith.maximumf %68, %70 : vector<128x1xf32>
    %72 = arith.subf %68, %71 : vector<128x1xf32>
    %73 = math.exp %72 : vector<128x1xf32>
    %74 = vector.broadcast %71 : vector<128x1xf32> to vector<128x256xf32>
    %75 = arith.subf %66, %74 : vector<128x256xf32>
    %76 = math.exp %75 : vector<128x256xf32>
    %c1_38 = arith.constant 1 : index
    %c0_39 = arith.constant 0 : index
    %c0_40 = arith.constant 0 : index
    %77 = vector.load %arg8[%c1_38, %c0_39, %c0_40] : memref<4x128x1xf32, #tpu.memory_space<vmem>>, vector<1x128x1xf32>
    %78 = vector.shape_cast %77 : vector<1x128x1xf32> to vector<128x1xf32>
    %79 = arith.mulf %73, %78 : vector<128x1xf32>
    %cst_41 = arith.constant dense<0.000000e+00> : vector<128xf32>
    %80 = vector.multi_reduction <add>, %76, %cst_41 [1] : vector<128x256xf32> to vector<128xf32>
    %81 = vector.shape_cast %80 : vector<128xf32> to vector<128x1xf32>
    %82 = arith.addf %79, %81 : vector<128x1xf32>
    %c1_42 = arith.constant 1 : index
    %c0_43 = arith.constant 0 : index
    %c0_44 = arith.constant 0 : index
    %83 = vector.load %arg8[%c1_42, %c0_43, %c0_44] : memref<4x128x1xf32, #tpu.memory_space<vmem>>, vector<1x128x1xf32>
    %84 = vector.shape_cast %83 : vector<1x128x1xf32> to vector<128x1xf32>
    %85 = vector.shape_cast %82 : vector<128x1xf32> to vector<1x128x1xf32>
    tpu.vector_store %arg8[%c1_42, %c0_43, %c0_44], %85 {strides = array<i32>} : memref<4x128x1xf32, #tpu.memory_space<vmem>>, vector<1x128x1xf32>,
    %c1_45 = arith.constant 1 : index
    %c0_46 = arith.constant 0 : index
    %c0_47 = arith.constant 0 : index
    %86 = vector.load %arg9[%c1_45, %c0_46, %c0_47] : memref<4x128x32xf32, #tpu.memory_space<vmem>>, vector<1x128x32xf32>
    %87 = vector.shape_cast %86 : vector<1x128x32xf32> to vector<128x32xf32>
    %88 = vector.broadcast %73 : vector<128x1xf32> to vector<128x32xf32>
    %89 = arith.mulf %88, %87 : vector<128x32xf32>
    %90 = arith.truncf %76 : vector<128x256xf32> to vector<128x256xbf16>
    %c1_48 = arith.constant 1 : index
    %c0_49 = arith.constant 0 : index
    %c0_50 = arith.constant 0 : index
    %91 = vector.load %arg4[%c1_48, %c0_49, %c0_50] : memref<4x256x32xbf16, #tpu.memory_space<vmem>>, vector<1x256x32xbf16>
    %92 = vector.shape_cast %91 : vector<1x256x32xbf16> to vector<256x32xbf16>
    %cst_51 = arith.constant dense<0.000000e+00> : vector<128x32xf32>
    %93 = tpu.matmul %90, %92, %cst_51 {dimension_numbers = #tpu.dot_dimension_numbers<[1], [0], [0], [1], [0, 0, 1, 1], [], []>} : vector<128x256xbf16>, vector<256x32xbf16>, vector<128x32xf32> -> vector<128x32xf32>
    %94 = arith.addf %89, %93 : vector<128x32xf32>
    %c1_52 = arith.constant 1 : index
    %c0_53 = arith.constant 0 : index
    %c0_54 = arith.constant 0 : index
    %95 = vector.load %arg9[%c1_52, %c0_53, %c0_54] : memref<4x128x32xf32, #tpu.memory_space<vmem>>, vector<1x128x32xf32>
    %96 = vector.shape_cast %95 : vector<1x128x32xf32> to vector<128x32xf32>
    %97 = vector.shape_cast %94 : vector<128x32xf32> to vector<1x128x32xf32>
    tpu.vector_store %arg9[%c1_52, %c0_53, %c0_54], %97 {strides = array<i32>} : memref<4x128x32xf32, #tpu.memory_space<vmem>>, vector<1x128x32xf32>,
    %c1_55 = arith.constant 1 : index
    %c0_56 = arith.constant 0 : index
    %c0_57 = arith.constant 0 : index
    %98 = vector.load %arg7[%c1_55, %c0_56, %c0_57] : memref<4x128x1xf32, #tpu.memory_space<vmem>>, vector<1x128x1xf32>
    %99 = vector.shape_cast %98 : vector<1x128x1xf32> to vector<128x1xf32>
    %100 = vector.shape_cast %71 : vector<128x1xf32> to vector<1x128x1xf32>
    tpu.vector_store %arg7[%c1_55, %c0_56, %c0_57], %100 {strides = array<i32>} : memref<4x128x1xf32, #tpu.memory_space<vmem>>, vector<1x128x1xf32>,
    %101 = vector.extract_strided_slice %9 {offsets = [0, 2], sizes = [128, 1], strides = [1, 1]} : vector<128x4xf32> to vector<128x1xf32>
    %102 = vector.extract_strided_slice %10 {offsets = [2, 0], sizes = [1, 256], strides = [1, 1]} : vector<4x256xf32> to vector<1x256xf32>
    %103 = vector.broadcast %101 : vector<128x1xf32> to vector<128x256xf32>
    %104 = vector.broadcast %102 : vector<1x256xf32> to vector<128x256xf32>
    %105 = arith.addf %103, %104 : vector<128x256xf32>
    %cst_58 = arith.constant 0.000000e+00 : f32
    %106 = vector.broadcast %cst_58 : f32 to vector<128x256xf32>
    %107 = arith.cmpf ogt, %105, %106 : vector<128x256xf32>
    %cst_59 = arith.constant 0.00999999977 : f32
    %108 = vector.broadcast %cst_59 : f32 to vector<128x256xf32>
    %109 = arith.mulf %108, %105 : vector<128x256xf32>
    %110 = arith.select %107, %105, %109 : vector<128x256xi1>, vector<128x256xf32>
    %111 = arith.addf %110, %8 : vector<128x256xf32>
    %c2 = arith.constant 2 : index
    %c0_60 = arith.constant 0 : index
    %c0_61 = arith.constant 0 : index
    %112 = vector.load %arg7[%c2, %c0_60, %c0_61] : memref<4x128x1xf32, #tpu.memory_space<vmem>>, vector<1x128x1xf32>
    %113 = vector.shape_cast %112 : vector<1x128x1xf32> to vector<128x1xf32>
    %cst_62 = arith.constant dense<0xFF800000> : vector<128xf32>
    %114 = vector.multi_reduction <maximumf>, %111, %cst_62 [1] : vector<128x256xf32> to vector<128xf32>
    %115 = vector.shape_cast %114 : vector<128xf32> to vector<128x1xf32>
    %116 = arith.maximumf %113, %115 : vector<128x1xf32>
    %117 = arith.subf %113, %116 : vector<128x1xf32>
    %118 = math.exp %117 : vector<128x1xf32>
    %119 = vector.broadcast %116 : vector<128x1xf32> to vector<128x256xf32>
    %120 = arith.subf %111, %119 : vector<128x256xf32>
    %121 = math.exp %120 : vector<128x256xf32>
    %c2_63 = arith.constant 2 : index
    %c0_64 = arith.constant 0 : index
    %c0_65 = arith.constant 0 : index
    %122 = vector.load %arg8[%c2_63, %c0_64, %c0_65] : memref<4x128x1xf32, #tpu.memory_space<vmem>>, vector<1x128x1xf32>
    %123 = vector.shape_cast %122 : vector<1x128x1xf32> to vector<128x1xf32>
    %124 = arith.mulf %118, %123 : vector<128x1xf32>
    %cst_66 = arith.constant dense<0.000000e+00> : vector<128xf32>
    %125 = vector.multi_reduction <add>, %121, %cst_66 [1] : vector<128x256xf32> to vector<128xf32>
    %126 = vector.shape_cast %125 : vector<128xf32> to vector<128x1xf32>
    %127 = arith.addf %124, %126 : vector<128x1xf32>
    %c2_67 = arith.constant 2 : index
    %c0_68 = arith.constant 0 : index
    %c0_69 = arith.constant 0 : index
    %128 = vector.load %arg8[%c2_67, %c0_68, %c0_69] : memref<4x128x1xf32, #tpu.memory_space<vmem>>, vector<1x128x1xf32>
    %129 = vector.shape_cast %128 : vector<1x128x1xf32> to vector<128x1xf32>
    %130 = vector.shape_cast %127 : vector<128x1xf32> to vector<1x128x1xf32>
    tpu.vector_store %arg8[%c2_67, %c0_68, %c0_69], %130 {strides = array<i32>} : memref<4x128x1xf32, #tpu.memory_space<vmem>>, vector<1x128x1xf32>,
    %c2_70 = arith.constant 2 : index
    %c0_71 = arith.constant 0 : index
    %c0_72 = arith.constant 0 : index
    %131 = vector.load %arg9[%c2_70, %c0_71, %c0_72] : memref<4x128x32xf32, #tpu.memory_space<vmem>>, vector<1x128x32xf32>
    %132 = vector.shape_cast %131 : vector<1x128x32xf32> to vector<128x32xf32>
    %133 = vector.broadcast %118 : vector<128x1xf32> to vector<128x32xf32>
    %134 = arith.mulf %133, %132 : vector<128x32xf32>
    %135 = arith.truncf %121 : vector<128x256xf32> to vector<128x256xbf16>
    %c2_73 = arith.constant 2 : index
    %c0_74 = arith.constant 0 : index
    %c0_75 = arith.constant 0 : index
    %136 = vector.load %arg4[%c2_73, %c0_74, %c0_75] : memref<4x256x32xbf16, #tpu.memory_space<vmem>>, vector<1x256x32xbf16>
    %137 = vector.shape_cast %136 : vector<1x256x32xbf16> to vector<256x32xbf16>
    %cst_76 = arith.constant dense<0.000000e+00> : vector<128x32xf32>
    %138 = tpu.matmul %135, %137, %cst_76 {dimension_numbers = #tpu.dot_dimension_numbers<[1], [0], [0], [1], [0, 0, 1, 1], [], []>} : vector<128x256xbf16>, vector<256x32xbf16>, vector<128x32xf32> -> vector<128x32xf32>
    %139 = arith.addf %134, %138 : vector<128x32xf32>
    %c2_77 = arith.constant 2 : index
    %c0_78 = arith.constant 0 : index
    %c0_79 = arith.constant 0 : index
    %140 = vector.load %arg9[%c2_77, %c0_78, %c0_79] : memref<4x128x32xf32, #tpu.memory_space<vmem>>, vector<1x128x32xf32>
    %141 = vector.shape_cast %140 : vector<1x128x32xf32> to vector<128x32xf32>
    %142 = vector.shape_cast %139 : vector<128x32xf32> to vector<1x128x32xf32>
    tpu.vector_store %arg9[%c2_77, %c0_78, %c0_79], %142 {strides = array<i32>} : memref<4x128x32xf32, #tpu.memory_space<vmem>>, vector<1x128x32xf32>,
    %c2_80 = arith.constant 2 : index
    %c0_81 = arith.constant 0 : index
    %c0_82 = arith.constant 0 : index
    %143 = vector.load %arg7[%c2_80, %c0_81, %c0_82] : memref<4x128x1xf32, #tpu.memory_space<vmem>>, vector<1x128x1xf32>
    %144 = vector.shape_cast %143 : vector<1x128x1xf32> to vector<128x1xf32>
    %145 = vector.shape_cast %116 : vector<128x1xf32> to vector<1x128x1xf32>
    tpu.vector_store %arg7[%c2_80, %c0_81, %c0_82], %145 {strides = array<i32>} : memref<4x128x1xf32, #tpu.memory_space<vmem>>, vector<1x128x1xf32>,
    %146 = vector.extract_strided_slice %9 {offsets = [0, 3], sizes = [128, 1], strides = [1, 1]} : vector<128x4xf32> to vector<128x1xf32>
    %147 = vector.extract_strided_slice %10 {offsets = [3, 0], sizes = [1, 256], strides = [1, 1]} : vector<4x256xf32> to vector<1x256xf32>
    %148 = vector.broadcast %146 : vector<128x1xf32> to vector<128x256xf32>
    %149 = vector.broadcast %147 : vector<1x256xf32> to vector<128x256xf32>
    %150 = arith.addf %148, %149 : vector<128x256xf32>
    %cst_83 = arith.constant 0.000000e+00 : f32
    %151 = vector.broadcast %cst_83 : f32 to vector<128x256xf32>
    %152 = arith.cmpf ogt, %150, %151 : vector<128x256xf32>
    %cst_84 = arith.constant 0.00999999977 : f32
    %153 = vector.broadcast %cst_84 : f32 to vector<128x256xf32>
    %154 = arith.mulf %153, %150 : vector<128x256xf32>
    %155 = arith.select %152, %150, %154 : vector<128x256xi1>, vector<128x256xf32>
    %156 = arith.addf %155, %8 : vector<128x256xf32>
    %c3 = arith.constant 3 : index
    %c0_85 = arith.constant 0 : index
    %c0_86 = arith.constant 0 : index
    %157 = vector.load %arg7[%c3, %c0_85, %c0_86] : memref<4x128x1xf32, #tpu.memory_space<vmem>>, vector<1x128x1xf32>
    %158 = vector.shape_cast %157 : vector<1x128x1xf32> to vector<128x1xf32>
    %cst_87 = arith.constant dense<0xFF800000> : vector<128xf32>
    %159 = vector.multi_reduction <maximumf>, %156, %cst_87 [1] : vector<128x256xf32> to vector<128xf32>
    %160 = vector.shape_cast %159 : vector<128xf32> to vector<128x1xf32>
    %161 = arith.maximumf %158, %160 : vector<128x1xf32>
    %162 = arith.subf %158, %161 : vector<128x1xf32>
    %163 = math.exp %162 : vector<128x1xf32>
    %164 = vector.broadcast %161 : vector<128x1xf32> to vector<128x256xf32>
    %165 = arith.subf %156, %164 : vector<128x256xf32>
    %166 = math.exp %165 : vector<128x256xf32>
    %c3_88 = arith.constant 3 : index
    %c0_89 = arith.constant 0 : index
    %c0_90 = arith.constant 0 : index
    %167 = vector.load %arg8[%c3_88, %c0_89, %c0_90] : memref<4x128x1xf32, #tpu.memory_space<vmem>>, vector<1x128x1xf32>
    %168 = vector.shape_cast %167 : vector<1x128x1xf32> to vector<128x1xf32>
    %169 = arith.mulf %163, %168 : vector<128x1xf32>
    %cst_91 = arith.constant dense<0.000000e+00> : vector<128xf32>
    %170 = vector.multi_reduction <add>, %166, %cst_91 [1] : vector<128x256xf32> to vector<128xf32>
    %171 = vector.shape_cast %170 : vector<128xf32> to vector<128x1xf32>
    %172 = arith.addf %169, %171 : vector<128x1xf32>
    %c3_92 = arith.constant 3 : index
    %c0_93 = arith.constant 0 : index
    %c0_94 = arith.constant 0 : index
    %173 = vector.load %arg8[%c3_92, %c0_93, %c0_94] : memref<4x128x1xf32, #tpu.memory_space<vmem>>, vector<1x128x1xf32>
    %174 = vector.shape_cast %173 : vector<1x128x1xf32> to vector<128x1xf32>
    %175 = vector.shape_cast %172 : vector<128x1xf32> to vector<1x128x1xf32>
    tpu.vector_store %arg8[%c3_92, %c0_93, %c0_94], %175 {strides = array<i32>} : memref<4x128x1xf32, #tpu.memory_space<vmem>>, vector<1x128x1xf32>,
    %c3_95 = arith.constant 3 : index
    %c0_96 = arith.constant 0 : index
    %c0_97 = arith.constant 0 : index
    %176 = vector.load %arg9[%c3_95, %c0_96, %c0_97] : memref<4x128x32xf32, #tpu.memory_space<vmem>>, vector<1x128x32xf32>
    %177 = vector.shape_cast %176 : vector<1x128x32xf32> to vector<128x32xf32>
    %178 = vector.broadcast %163 : vector<128x1xf32> to vector<128x32xf32>
    %179 = arith.mulf %178, %177 : vector<128x32xf32>
    %180 = arith.truncf %166 : vector<128x256xf32> to vector<128x256xbf16>
    %c3_98 = arith.constant 3 : index
    %c0_99 = arith.constant 0 : index
    %c0_100 = arith.constant 0 : index
    %181 = vector.load %arg4[%c3_98, %c0_99, %c0_100] : memref<4x256x32xbf16, #tpu.memory_space<vmem>>, vector<1x256x32xbf16>
    %182 = vector.shape_cast %181 : vector<1x256x32xbf16> to vector<256x32xbf16>
    %cst_101 = arith.constant dense<0.000000e+00> : vector<128x32xf32>
    %183 = tpu.matmul %180, %182, %cst_101 {dimension_numbers = #tpu.dot_dimension_numbers<[1], [0], [0], [1], [0, 0, 1, 1], [], []>} : vector<128x256xbf16>, vector<256x32xbf16>, vector<128x32xf32> -> vector<128x32xf32>
    %184 = arith.addf %179, %183 : vector<128x32xf32>
    %c3_102 = arith.constant 3 : index
    %c0_103 = arith.constant 0 : index
    %c0_104 = arith.constant 0 : index
    %185 = vector.load %arg9[%c3_102, %c0_103, %c0_104] : memref<4x128x32xf32, #tpu.memory_space<vmem>>, vector<1x128x32xf32>
    %186 = vector.shape_cast %185 : vector<1x128x32xf32> to vector<128x32xf32>
    %187 = vector.shape_cast %184 : vector<128x32xf32> to vector<1x128x32xf32>
    tpu.vector_store %arg9[%c3_102, %c0_103, %c0_104], %187 {strides = array<i32>} : memref<4x128x32xf32, #tpu.memory_space<vmem>>, vector<1x128x32xf32>,
    %c3_105 = arith.constant 3 : index
    %c0_106 = arith.constant 0 : index
    %c0_107 = arith.constant 0 : index
    %188 = vector.load %arg7[%c3_105, %c0_106, %c0_107] : memref<4x128x1xf32, #tpu.memory_space<vmem>>, vector<1x128x1xf32>
    %189 = vector.shape_cast %188 : vector<1x128x1xf32> to vector<128x1xf32>
    %190 = vector.shape_cast %161 : vector<128x1xf32> to vector<1x128x1xf32>
    tpu.vector_store %arg7[%c3_105, %c0_106, %c0_107], %190 {strides = array<i32>} : memref<4x128x1xf32, #tpu.memory_space<vmem>>, vector<1x128x1xf32>,
    %c0_i32_108 = arith.constant 0 : i32
    %191 = arith.cmpi eq, %arg1, %c0_i32_108 : i32
    %192 = arith.extui %191 : i1 to i32
    %c0_i32_109 = arith.constant 0 : i32
    %193 = arith.cmpi ne, %192, %c0_i32_109 : i32
    scf.if %193 {
      %c0_110 = arith.constant 0 : index
      %c0_111 = arith.constant 0 : index
      %c0_112 = arith.constant 0 : index
      %194 = vector.load %arg8[%c0_110, %c0_111, %c0_112] : memref<4x128x1xf32, #tpu.memory_space<vmem>>, vector<1x128x1xf32>
      %195 = vector.shape_cast %194 : vector<1x128x1xf32> to vector<128x1xf32>
      %cst_113 = arith.constant 1.000000e-30 : f32
      %196 = vector.broadcast %cst_113 : f32 to vector<128x1xf32>
      %197 = arith.maximumf %195, %196 : vector<128x1xf32>
      %198 = tpu.reciprocal %197 {approx = true} : vector<128x1xf32> -> vector<128x1xf32>
      %c0_114 = arith.constant 0 : index
      %c0_115 = arith.constant 0 : index
      %c0_116 = arith.constant 0 : index
      %199 = vector.load %arg9[%c0_114, %c0_115, %c0_116] : memref<4x128x32xf32, #tpu.memory_space<vmem>>, vector<1x128x32xf32>
      %200 = vector.shape_cast %199 : vector<1x128x32xf32> to vector<128x32xf32>
      %201 = vector.broadcast %198 : vector<128x1xf32> to vector<128x32xf32>
      %202 = arith.mulf %200, %201 : vector<128x32xf32>
      %c1_117 = arith.constant 1 : index
      %c0_118 = arith.constant 0 : index
      %c0_119 = arith.constant 0 : index
      %203 = vector.load %arg8[%c1_117, %c0_118, %c0_119] : memref<4x128x1xf32, #tpu.memory_space<vmem>>, vector<1x128x1xf32>
      %204 = vector.shape_cast %203 : vector<1x128x1xf32> to vector<128x1xf32>
      %cst_120 = arith.constant 1.000000e-30 : f32
      %205 = vector.broadcast %cst_120 : f32 to vector<128x1xf32>
      %206 = arith.maximumf %204, %205 : vector<128x1xf32>
      %207 = tpu.reciprocal %206 {approx = true} : vector<128x1xf32> -> vector<128x1xf32>
      %c1_121 = arith.constant 1 : index
      %c0_122 = arith.constant 0 : index
      %c0_123 = arith.constant 0 : index
      %208 = vector.load %arg9[%c1_121, %c0_122, %c0_123] : memref<4x128x32xf32, #tpu.memory_space<vmem>>, vector<1x128x32xf32>
      %209 = vector.shape_cast %208 : vector<1x128x32xf32> to vector<128x32xf32>
      %210 = vector.broadcast %207 : vector<128x1xf32> to vector<128x32xf32>
      %211 = arith.mulf %209, %210 : vector<128x32xf32>
      %c2_124 = arith.constant 2 : index
      %c0_125 = arith.constant 0 : index
      %c0_126 = arith.constant 0 : index
      %212 = vector.load %arg8[%c2_124, %c0_125, %c0_126] : memref<4x128x1xf32, #tpu.memory_space<vmem>>, vector<1x128x1xf32>
      %213 = vector.shape_cast %212 : vector<1x128x1xf32> to vector<128x1xf32>
      %cst_127 = arith.constant 1.000000e-30 : f32
      %214 = vector.broadcast %cst_127 : f32 to vector<128x1xf32>
      %215 = arith.maximumf %213, %214 : vector<128x1xf32>
      %216 = tpu.reciprocal %215 {approx = true} : vector<128x1xf32> -> vector<128x1xf32>
      %c2_128 = arith.constant 2 : index
      %c0_129 = arith.constant 0 : index
      %c0_130 = arith.constant 0 : index
      %217 = vector.load %arg9[%c2_128, %c0_129, %c0_130] : memref<4x128x32xf32, #tpu.memory_space<vmem>>, vector<1x128x32xf32>
      %218 = vector.shape_cast %217 : vector<1x128x32xf32> to vector<128x32xf32>
      %219 = vector.broadcast %216 : vector<128x1xf32> to vector<128x32xf32>
      %220 = arith.mulf %218, %219 : vector<128x32xf32>
      %c3_131 = arith.constant 3 : index
      %c0_132 = arith.constant 0 : index
      %c0_133 = arith.constant 0 : index
      %221 = vector.load %arg8[%c3_131, %c0_132, %c0_133] : memref<4x128x1xf32, #tpu.memory_space<vmem>>, vector<1x128x1xf32>
      %222 = vector.shape_cast %221 : vector<1x128x1xf32> to vector<128x1xf32>
      %cst_134 = arith.constant 1.000000e-30 : f32
      %223 = vector.broadcast %cst_134 : f32 to vector<128x1xf32>
      %224 = arith.maximumf %222, %223 : vector<128x1xf32>
      %225 = tpu.reciprocal %224 {approx = true} : vector<128x1xf32> -> vector<128x1xf32>
      %c3_135 = arith.constant 3 : index
      %c0_136 = arith.constant 0 : index
      %c0_137 = arith.constant 0 : index
      %226 = vector.load %arg9[%c3_135, %c0_136, %c0_137] : memref<4x128x32xf32, #tpu.memory_space<vmem>>, vector<1x128x32xf32>
      %227 = vector.shape_cast %226 : vector<1x128x32xf32> to vector<128x32xf32>
      %228 = vector.broadcast %225 : vector<128x1xf32> to vector<128x32xf32>
      %229 = arith.mulf %227, %228 : vector<128x32xf32>
      %230 = tpu.concatenate %202, %211, %220, %229 in 1 : vector<128x32xf32>, vector<128x32xf32>, vector<128x32xf32>, vector<128x32xf32> -> vector<128x128xf32>
      %c0_138 = arith.constant 0 : index
      %c0_139 = arith.constant 0 : index
      %231 = vector.load %arg6[%c0_138, %c0_139] : memref<128x128xf32, #tpu.memory_space<vmem>>, vector<128x128xf32>
      tpu.vector_store %arg6[%c0_138, %c0_139], %230 {strides = array<i32>} : memref<128x128xf32, #tpu.memory_space<vmem>>, vector<128x128xf32>,
    } else {
    }
    return
  }
  func.func @transform_0(%arg0: i32, %arg1: i32) -> (i32, i32) {
    %c0_i32 = arith.constant 0 : i32
    %c0_i32_0 = arith.constant 0 : i32
    return %c0_i32, %arg1 : i32, i32
  }
  func.func @transform_1(%arg0: i32, %arg1: i32) -> (i32, i32) {
    %c0_i32 = arith.constant 0 : i32
    %c0_i32_0 = arith.constant 0 : i32
    return %arg0, %c0_i32 : i32, i32
  }
  func.func @transform_2(%arg0: i32, %arg1: i32) -> (i32, i32, i32) {
    %c0_i32 = arith.constant 0 : i32
    %c0_i32_0 = arith.constant 0 : i32
    %c0_i32_1 = arith.constant 0 : i32
    return %c0_i32, %arg1, %c0_i32_0 : i32, i32, i32
  }
  func.func @transform_3(%arg0: i32, %arg1: i32) -> (i32, i32) {
    %c0_i32 = arith.constant 0 : i32
    return %arg0, %arg1 : i32, i32
  }
  func.func @transform_4(%arg0: i32, %arg1: i32) -> (i32, i32) {
    %c0_i32 = arith.constant 0 : i32
    %c0_i32_0 = arith.constant 0 : i32
    return %arg0, %c0_i32 : i32, i32
  }
}

</mosaic_0001>

<llo_original>
// kernel: tpu_custom_call.1
$region0: #{tpu_custom_call.1}
  #allocation0 [shape = 'u32[]', space=smem, size = 0x4, offset = 0x4, fixed_abs, tag = 'smem constant byte address 0x4 - core index']
  #allocation1 [shape = 'u32[72,128]{1,0:T(1,128)}', space=vmem, size = 0x9000, scoped, tag = 'internal scratch']
  #allocation2 [shape = 'f32[4,128,1]{2,1,0:T(8,128)}', space=vmem, size = 0x40000, scoped, tag = 'scratch operand']
  #allocation3 [shape = 'f32[4,128,1]{2,1,0:T(8,128)}', space=vmem, size = 0x40000, scoped, tag = 'scratch operand']
  #allocation4 [shape = 'f32[4,128,32]{2,1,0:T(8,128)}', space=vmem, size = 0x40000, scoped, tag = 'scratch operand']
  %s0 = inlined_call_operand.vmem [shape: f32[4,256], index: 0, kind: input, shape index: {}]
  %s1 = inlined_call_operand.vmem [shape: f32[256,4], index: 1, kind: input, shape index: {}]
  %s2 = inlined_call_operand.vmem [shape: bf16[4,256,32], index: 2, kind: input, shape index: {}]
  %s3 = inlined_call_operand.vmem [shape: s8[256,256], index: 3, kind: input, shape index: {}]
  %s4 = inlined_call_operand.hbm [shape: f32[256,128], index: 4, kind: output, shape index: {}]
  %s5 = sld [smem:[#allocation0]]
  $region57: #{tpu_custom_call.1} parent=0
    _
  %s7 = ssub.s32 1, %s5
  %s8 = scalar_select 0, %s7, %s5
  $region1: #{tpu_custom_call.1} parent=0
    #allocation5 [shape = 'u8[131072]{0}', space=vmem, size = 0x20000, scoped, tag = 'output window, operand 0']
    #allocation6 [shape = 's32[2]{0}', space=sflag, size = 0x8, scoped, tag = 'scoped memory for tpu_custom_call.1']
    %9 = vsyncpa [#allocation6], 0
    %s10 = scalar_lea.sflag [#allocation6], 1
    %11 = vsyncpa %s10, 0
    loop: start=0, step=1, limit=4
    $region2: #{tpu_custom_call.1} parent=1 // loop_pre_header
      _
    $region3: #{tpu_custom_call.1} parent=1 // loop_header
      %s13 = sphi 0, %s17
      %p14 = scmp.ge.s32.totalorder %s13, 4
      %s20 = sphi 0, %s32
      %s21 = sphi 0, %s28
      %s22 = sphi 0, %s20
      %s23 = sphi 0, %s21
      %s24 = sphi 0, %s22
      %s25 = sphi 0, %s23
      %s35 = sphi 0, %s37
      %s38 = sphi 0, %s35
      %s39 = sphi 0, %s38
      %s55 = sphi 0, %s39
      %s61 = sphi 0, %s63
      %s64 = sphi 0, %s61
      %s65 = sphi 0, %s64
      %s81 = sphi 0, %s65
      %s87 = sphi 0, %s89
      %s90 = sphi 0, %s87
      %s91 = sphi 0, %s90
      %s107 = sphi 0, %s91
      %s115 = sphi 0, %s117
      %s118 = sphi 0, %s115
      %s119 = sphi 0, %s118
      %s135 = sphi 0, %s119
      %s141 = sphi 0, %s143
      %s144 = sphi 0, %s141
      %s145 = sphi 0, %s144
      %s161 = sphi 0, %s145
    $region4: #{tpu_custom_call.1} parent=1 // loop_header_branch
      %16 = sbr.rel (%p14) target = $region8
    $region5: #{tpu_custom_call.1} parent=1 // loop_body
      %s18 = ssub.s32 %s13, 1
      %s19 = ssub.s32 %s13, 2
      %s26 = sadd.s32 1, %s21
      %p27 = scmp.ge.s32.totalorder %s26, 1
      %s28 = scalar_select %p27, 0, %s26
      %s29 = sadd.s32 1, %s20
      %s30 = scalar_select %p27, %s29, %s20
      %p31 = scmp.ge.s32.totalorder %s30, 2
      %s32 = scalar_select %p31, 0, %s30
      %s33 = ssub.s32 %s21, %s28
      %p34 = scmp.eq.s32.totalorder %s33, 0
      %s36 = sadd.s32 %s35, 1
      %s37 = scalar_select %p34, %s35, %s36
      %p40 = pneg %p34
      %p41 = scmp.eq.s32.totalorder %s13, 1
      %p42 = por %p40, %p41
      %p43 = scmp.ne.s32.totalorder %s35, %s38
      %p44 = scmp.eq.s32.totalorder %s13, 0
      %p45 = por %p43, %p44
      %p46 = scmp.ne.s32.totalorder %s35, %s38
      %p47 = scmp.eq.s32.totalorder %s18, 1
      %p48 = por %p46, %p47
      %p49 = scmp.ne.s32.totalorder %s38, %s39
      %p50 = scmp.eq.s32.totalorder %s18, 0
      %p51 = por %p49, %p50
      %p52 = scmp.ne.s32.totalorder %s38, %s39
      %p53 = scmp.eq.s32.totalorder %s19, 1
      %p54 = por %p52, %p53
      %p56 = scmp.ne.s32.totalorder %s39, %s55
      %p57 = scmp.eq.s32.totalorder %s19, 0
      %p58 = por %p56, %p57
      %s59 = ssub.s32 %s20, %s32
      %p60 = scmp.eq.s32.totalorder %s59, 0
      %s62 = sadd.s32 %s61, 1
      %s63 = scalar_select %p60, %s61, %s62
      %p66 = pneg %p60
      %p67 = scmp.eq.s32.totalorder %s13, 1
      %p68 = por %p66, %p67
      %p69 = scmp.ne.s32.totalorder %s61, %s64
      %p70 = scmp.eq.s32.totalorder %s13, 0
      %p71 = por %p69, %p70
      %p72 = scmp.ne.s32.totalorder %s61, %s64
      %p73 = scmp.eq.s32.totalorder %s18, 1
      %p74 = por %p72, %p73
      %p75 = scmp.ne.s32.totalorder %s64, %s65
      %p76 = scmp.eq.s32.totalorder %s18, 0
      %p77 = por %p75, %p76
      %p78 = scmp.ne.s32.totalorder %s64, %s65
      %p79 = scmp.eq.s32.totalorder %s19, 1
      %p80 = por %p78, %p79
      %p82 = scmp.ne.s32.totalorder %s65, %s81
      %p83 = scmp.eq.s32.totalorder %s19, 0
      %p84 = por %p82, %p83
      %s85 = ssub.s32 %s21, %s28
      %p86 = scmp.eq.s32.totalorder %s85, 0
      %s88 = sadd.s32 %s87, 1
      %s89 = scalar_select %p86, %s87, %s88
      %p92 = pneg %p86
      %p93 = scmp.eq.s32.totalorder %s13, 1
      %p94 = por %p92, %p93
      %p95 = scmp.ne.s32.totalorder %s87, %s90
      %p96 = scmp.eq.s32.totalorder %s13, 0
      %p97 = por %p95, %p96
      %p98 = scmp.ne.s32.totalorder %s87, %s90
      %p99 = scmp.eq.s32.totalorder %s18, 1
      %p100 = por %p98, %p99
      %p101 = scmp.ne.s32.totalorder %s90, %s91
      %p102 = scmp.eq.s32.totalorder %s18, 0
      %p103 = por %p101, %p102
      %p104 = scmp.ne.s32.totalorder %s90, %s91
      %p105 = scmp.eq.s32.totalorder %s19, 1
      %p106 = por %p104, %p105
      %p108 = scmp.ne.s32.totalorder %s91, %s107
      %p109 = scmp.eq.s32.totalorder %s19, 0
      %p110 = por %p108, %p109
      %s111 = ssub.s32 %s20, %s32
      %s112 = ssub.s32 %s21, %s28
      %s113 = sor.u32 %s111, %s112
      %p114 = scmp.eq.s32.totalorder %s113, 0
      %s116 = sadd.s32 %s115, 1
      %s117 = scalar_select %p114, %s115, %s116
      %p120 = pneg %p114
      %p121 = scmp.eq.s32.totalorder %s13, 1
      %p122 = por %p120, %p121
      %p123 = scmp.ne.s32.totalorder %s115, %s118
      %p124 = scmp.eq.s32.totalorder %s13, 0
      %p125 = por %p123, %p124
      %p126 = scmp.ne.s32.totalorder %s115, %s118
      %p127 = scmp.eq.s32.totalorder %s18, 1
      %p128 = por %p126, %p127
      %p129 = scmp.ne.s32.totalorder %s118, %s119
      %p130 = scmp.eq.s32.totalorder %s18, 0
      %p131 = por %p129, %p130
      %p132 = scmp.ne.s32.totalorder %s118, %s119
      %p133 = scmp.eq.s32.totalorder %s19, 1
      %p134 = por %p132, %p133
      %p136 = scmp.ne.s32.totalorder %s119, %s135
      %p137 = scmp.eq.s32.totalorder %s19, 0
      %p138 = por %p136, %p137
      %s139 = ssub.s32 %s20, %s32
      %p140 = scmp.eq.s32.totalorder %s139, 0
      %s142 = sadd.s32 %s141, 1
      %s143 = scalar_select %p140, %s141, %s142
      %p146 = pneg %p140
      %p147 = scmp.eq.s32.totalorder %s13, 1
      %p148 = por %p146, %p147
      %p149 = scmp.ne.s32.totalorder %s141, %s144
      %p150 = scmp.eq.s32.totalorder %s13, 0
      %p151 = por %p149, %p150
      %p152 = scmp.ne.s32.totalorder %s141, %s144
      %p153 = scmp.eq.s32.totalorder %s18, 1
      %p154 = por %p152, %p153
      %p155 = scmp.ne.s32.totalorder %s144, %s145
      %p156 = scmp.eq.s32.totalorder %s18, 0
      %p157 = por %p155, %p156
      %p158 = scmp.ne.s32.totalorder %s144, %s145
      %p159 = scmp.eq.s32.totalorder %s19, 1
      %p160 = por %p158, %p159
      %p162 = scmp.ne.s32.totalorder %s145, %s161
      %p163 = scmp.eq.s32.totalorder %s19, 0
      %p164 = por %p162, %p163
      %p165 = scmp.le.s32.totalorder 1, %s13
      %p166 = scmp.lt.s32.totalorder %s13, 3
      %p167 = pnand %p165, %p166
      %p168 = pneg %p167
      // Predicated region
      $region9: #{tpu_custom_call.1} parent=5 // pred_check
        _
      $region10: #{tpu_custom_call.1} parent=5 // pred_check_branch
        %170 = sbr.rel (%p167) target = $region12
      $region11: #{tpu_custom_call.1} parent=5 // pred_region
        %s171 = ssub.s32 %s13, 1
        // Predicated region
        $region13: #{tpu_custom_call.1} parent=11 // pred_check
          %p172 = pneg %p51
        $region14: #{tpu_custom_call.1} parent=11 // pred_check_branch
          %174 = sbr.rel (%p172) target = $region16
        $region15: #{tpu_custom_call.1} parent=11 // pred_region
          %s175 = smul.u32 2, %s23
          %p176 = scmp.lt.s32.totalorder %s175, 1
          %s177 = scalar_select %p176, %s175, 1
          %s178 = smul.addr %s177, 4
          %s179 = scalar_lea.vmem %s0, %s178
          %s180 = smul.u32 2, %s23
        $region16: #{tpu_custom_call.1} parent=11 // pred_fallthru
          _
        // Predicated region
        $region17: #{tpu_custom_call.1} parent=11 // pred_check
          %p181 = pneg %p103
        $region18: #{tpu_custom_call.1} parent=11 // pred_check_branch
          %183 = sbr.rel (%p181) target = $region20
        $region19: #{tpu_custom_call.1} parent=11 // pred_region
          %s184 = smul.u32 32, %s23
          %p185 = scmp.lt.s32.totalorder %s184, 31
          %s186 = scalar_select %p185, %s184, 31
          %s187 = smul.addr %s186, 4
          %s188 = scalar_lea.vmem %s2, %s187
          %s189 = smul.u32 32, %s23
        $region20: #{tpu_custom_call.1} parent=11 // pred_fallthru
          _
      $region12: #{tpu_custom_call.1} parent=5 // pred_fallthru
        _
      %p190 = scmp.lt.s32.totalorder %s13, 2
      // Predicated region
      $region21: #{tpu_custom_call.1} parent=5 // pred_check
        %p191 = pneg %p190
      $region22: #{tpu_custom_call.1} parent=5 // pred_check_branch
        %193 = sbr.rel (%p191) target = $region24
      $region23: #{tpu_custom_call.1} parent=5 // pred_region
        // Predicated region
        $region25: #{tpu_custom_call.1} parent=23 // pred_check
          %p194 = pneg %p71
        $region26: #{tpu_custom_call.1} parent=23 // pred_check_branch
          %196 = sbr.rel (%p194) target = $region28
        $region27: #{tpu_custom_call.1} parent=23 // pred_region
          %s197 = smul.u32 16, %s20
          %p198 = scmp.lt.s32.totalorder %s197, 31
          %s199 = scalar_select %p198, %s197, 31
          %s200 = smul.addr %s199, 8
          %s201 = scalar_lea.vmem %s1, %s200
          %s202 = smul.u32 16, %s20
        $region28: #{tpu_custom_call.1} parent=23 // pred_fallthru
          _
        // Predicated region
        $region29: #{tpu_custom_call.1} parent=23 // pred_check
          %p203 = pneg %p125
        $region30: #{tpu_custom_call.1} parent=23 // pred_check_branch
          %205 = sbr.rel (%p203) target = $region32
        $region31: #{tpu_custom_call.1} parent=23 // pred_region
          %s206 = smul.u32 4, %s20
          %s207 = smul.u32 2, %s21
          %p208 = scmp.lt.s32.totalorder %s206, 7
          %s209 = scalar_select %p208, %s206, 7
          %p210 = scmp.lt.s32.totalorder %s207, 1
          %s211 = scalar_select %p210, %s207, 1
          %s212 = smul.addr %s209, 2
          %s213 = sadd.s32 %s211, %s212
          %s214 = smul.addr %s213, 8
          %s215 = scalar_lea.vmem %s3, %s214
          %s216 = smul.u32 4, %s20
          %s217 = smul.u32 2, %s21
        $region32: #{tpu_custom_call.1} parent=23 // pred_fallthru
          _
      $region24: #{tpu_custom_call.1} parent=5 // pred_fallthru
        _
      %p218 = scmp.le.s32.totalorder 1, %s13
      %p219 = scmp.lt.s32.totalorder %s13, 3
      %p220 = pnand %p218, %p219
      %p221 = pneg %p220
      // Predicated region
      $region33: #{tpu_custom_call.1} parent=5 // pred_check
        _
      $region34: #{tpu_custom_call.1} parent=5 // pred_check_branch
        %223 = sbr.rel (%p220) target = $region36
      $region35: #{tpu_custom_call.1} parent=5 // pred_region
        %s224 = ssub.s32 %s13, 1
        %s225 = smul.u32 2, %s23
        %p226 = scmp.lt.s32.totalorder %s225, 1
        %s227 = scalar_select %p226, %s225, 1
        %s228 = smul.addr %s227, 4
        %s229 = scalar_lea.vmem %s0, %s228
        %p230 = pneg %p51
        %p231 = pneg %p48
        %s232 = smul.u32 16, %s22
        %p233 = scmp.lt.s32.totalorder %s232, 31
        %s234 = scalar_select %p233, %s232, 31
        %s235 = smul.addr %s234, 8
        %s236 = scalar_lea.vmem %s1, %s235
        %p237 = pneg %p77
        %p238 = pneg %p74
        %s239 = smul.u32 32, %s23
        %p240 = scmp.lt.s32.totalorder %s239, 31
        %s241 = scalar_select %p240, %s239, 31
        %s242 = smul.addr %s241, 4
        %s243 = scalar_lea.vmem %s2, %s242
        %p244 = pneg %p103
        %p245 = pneg %p100
        %s246 = smul.u32 4, %s22
        %s247 = smul.u32 2, %s23
        %p248 = scmp.lt.s32.totalorder %s246, 7
        %s249 = scalar_select %p248, %s246, 7
        %p250 = scmp.lt.s32.totalorder %s247, 1
        %s251 = scalar_select %p250, %s247, 1
        %s252 = smul.addr %s249, 2
        %s253 = sadd.s32 %s251, %s252
        %s254 = smul.addr %s253, 8
        %s255 = scalar_lea.vmem %s3, %s254
        %p256 = pneg %p131
        %p257 = pneg %p128
        %p258 = pneg %p157
        %p259 = pneg %p154
        %s260 = sand.u32 %s144, 1
        %s261 = scalar_lea.sflag [#allocation6], %s260
        %s262 = sand.u32 %s144, 1
        %s263 = smul.addr %s262, 128
        %s264 = scalar_lea.vmem [#allocation5], %s263
        %s265 = smul.u32 2, %s23
        %p266 = scmp.lt.s32.totalorder %s265, 1
        %s267 = scalar_select %p266, %s265, 1
        %s268 = smul.addr %s267, 4
        %s269 = scalar_lea.vmem %s0, %s268
        %s270 = smul.u32 2, %s23
        %s271 = smul.u32 16, %s22
        %p272 = scmp.lt.s32.totalorder %s271, 31
        %s273 = scalar_select %p272, %s271, 31
        %s274 = smul.addr %s273, 8
        %s275 = scalar_lea.vmem %s1, %s274
        %s276 = smul.u32 16, %s22
        %s277 = smul.u32 32, %s23
        %p278 = scmp.lt.s32.totalorder %s277, 31
        %s279 = scalar_select %p278, %s277, 31
        %s280 = smul.addr %s279, 4
        %s281 = scalar_lea.vmem %s2, %s280
        %s282 = smul.u32 32, %s23
        %s283 = smul.u32 4, %s22
        %s284 = smul.u32 2, %s23
        %p285 = scmp.lt.s32.totalorder %s283, 7
        %s286 = scalar_select %p285, %s283, 7
        %p287 = scmp.lt.s32.totalorder %s284, 1
        %s288 = scalar_select %p287, %s284, 1
        %s289 = smul.addr %s286, 2
        %s290 = sadd.s32 %s288, %s289
        %s291 = smul.addr %s290, 8
        %s292 = scalar_lea.vmem %s3, %s291
        %s293 = smul.u32 4, %s22
        %s294 = smul.u32 2, %s23
        %s295 = smul.u32 16, %s22
        %p296 = scmp.eq.s32.totalorder %s23, 0
        // Predicated region
        $region37: #{tpu_custom_call.1} parent=35 // pred_check
          %p297 = pneg %p296
        $region38: #{tpu_custom_call.1} parent=35 // pred_check_branch
          %299 = sbr.rel (%p297) target = $region40
        $region39: #{tpu_custom_call.1} parent=35 // pred_region
          %vm300 = vcmask 7168
          %301 = vst.msk [vmem:[#allocation2] sm:$0xff] %vm300, -1e+20
          %302 = vst.msk [vmem:[#allocation2 + $0x8] sm:$0xff] %vm300, -1e+20
          %303 = vst.msk [vmem:[#allocation2 + $0x10] sm:$0xff] %vm300, -1e+20
          %304 = vst.msk [vmem:[#allocation2 + $0x18] sm:$0xff] %vm300, -1e+20
          %305 = vst.msk [vmem:[#allocation2 + $0x20] sm:$0xff] %vm300, -1e+20
          %306 = vst.msk [vmem:[#allocation2 + $0x28] sm:$0xff] %vm300, -1e+20
          %307 = vst.msk [vmem:[#allocation2 + $0x30] sm:$0xff] %vm300, -1e+20
          %308 = vst.msk [vmem:[#allocation2 + $0x38] sm:$0xff] %vm300, -1e+20
          %309 = vst.msk [vmem:[#allocation2 + $0x40] sm:$0xff] %vm300, -1e+20
          %310 = vst.msk [vmem:[#allocation2 + $0x48] sm:$0xff] %vm300, -1e+20
          %311 = vst.msk [vmem:[#allocation2 + $0x50] sm:$0xff] %vm300, -1e+20
          %312 = vst.msk [vmem:[#allocation2 + $0x58] sm:$0xff] %vm300, -1e+20
          %313 = vst.msk [vmem:[#allocation2 + $0x60] sm:$0xff] %vm300, -1e+20
          %314 = vst.msk [vmem:[#allocation2 + $0x68] sm:$0xff] %vm300, -1e+20
          %315 = vst.msk [vmem:[#allocation2 + $0x70] sm:$0xff] %vm300, -1e+20
          %316 = vst.msk [vmem:[#allocation2 + $0x78] sm:$0xff] %vm300, -1e+20
          %317 = vst.msk [vmem:[#allocation2 + $0x80] sm:$0xff] %vm300, -1e+20
          %318 = vst.msk [vmem:[#allocation2 + $0x88] sm:$0xff] %vm300, -1e+20
          %319 = vst.msk [vmem:[#allocation2 + $0x90] sm:$0xff] %vm300, -1e+20
          %320 = vst.msk [vmem:[#allocation2 + $0x98] sm:$0xff] %vm300, -1e+20
          %321 = vst.msk [vmem:[#allocation2 + $0xa0] sm:$0xff] %vm300, -1e+20
          %322 = vst.msk [vmem:[#allocation2 + $0xa8] sm:$0xff] %vm300, -1e+20
          %323 = vst.msk [vmem:[#allocation2 + $0xb0] sm:$0xff] %vm300, -1e+20
          %324 = vst.msk [vmem:[#allocation2 + $0xb8] sm:$0xff] %vm300, -1e+20
          %325 = vst.msk [vmem:[#allocation2 + $0xc0] sm:$0xff] %vm300, -1e+20
          %326 = vst.msk [vmem:[#allocation2 + $0xc8] sm:$0xff] %vm300, -1e+20
          %327 = vst.msk [vmem:[#allocation2 + $0xd0] sm:$0xff] %vm300, -1e+20
          %328 = vst.msk [vmem:[#allocation2 + $0xd8] sm:$0xff] %vm300, -1e+20
          %329 = vst.msk [vmem:[#allocation2 + $0xe0] sm:$0xff] %vm300, -1e+20
          %330 = vst.msk [vmem:[#allocation2 + $0xe8] sm:$0xff] %vm300, -1e+20
          %331 = vst.msk [vmem:[#allocation2 + $0xf0] sm:$0xff] %vm300, -1e+20
          %332 = vst.msk [vmem:[#allocation2 + $0xf8] sm:$0xff] %vm300, -1e+20
          %333 = vst.msk [vmem:[#allocation2 + $0x100] sm:$0xff] %vm300, -1e+20
          %334 = vst.msk [vmem:[#allocation2 + $0x108] sm:$0xff] %vm300, -1e+20
          %335 = vst.msk [vmem:[#allocation2 + $0x110] sm:$0xff] %vm300, -1e+20
          %336 = vst.msk [vmem:[#allocation2 + $0x118] sm:$0xff] %vm300, -1e+20
          %337 = vst.msk [vmem:[#allocation2 + $0x120] sm:$0xff] %vm300, -1e+20
          %338 = vst.msk [vmem:[#allocation2 + $0x128] sm:$0xff] %vm300, -1e+20
          %339 = vst.msk [vmem:[#allocation2 + $0x130] sm:$0xff] %vm300, -1e+20
          %340 = vst.msk [vmem:[#allocation2 + $0x138] sm:$0xff] %vm300, -1e+20
          %341 = vst.msk [vmem:[#allocation2 + $0x140] sm:$0xff] %vm300, -1e+20
          %342 = vst.msk [vmem:[#allocation2 + $0x148] sm:$0xff] %vm300, -1e+20
          %343 = vst.msk [vmem:[#allocation2 + $0x150] sm:$0xff] %vm300, -1e+20
          %344 = vst.msk [vmem:[#allocation2 + $0x158] sm:$0xff] %vm300, -1e+20
          %345 = vst.msk [vmem:[#allocation2 + $0x160] sm:$0xff] %vm300, -1e+20
          %346 = vst.msk [vmem:[#allocation2 + $0x168] sm:$0xff] %vm300, -1e+20
          %347 = vst.msk [vmem:[#allocation2 + $0x170] sm:$0xff] %vm300, -1e+20
          %348 = vst.msk [vmem:[#allocation2 + $0x178] sm:$0xff] %vm300, -1e+20
          %349 = vst.msk [vmem:[#allocation2 + $0x180] sm:$0xff] %vm300, -1e+20
          %350 = vst.msk [vmem:[#allocation2 + $0x188] sm:$0xff] %vm300, -1e+20
          %351 = vst.msk [vmem:[#allocation2 + $0x190] sm:$0xff] %vm300, -1e+20
          %352 = vst.msk [vmem:[#allocation2 + $0x198] sm:$0xff] %vm300, -1e+20
          %353 = vst.msk [vmem:[#allocation2 + $0x1a0] sm:$0xff] %vm300, -1e+20
          %354 = vst.msk [vmem:[#allocation2 + $0x1a8] sm:$0xff] %vm300, -1e+20
          %355 = vst.msk [vmem:[#allocation2 + $0x1b0] sm:$0xff] %vm300, -1e+20
          %356 = vst.msk [vmem:[#allocation2 + $0x1b8] sm:$0xff] %vm300, -1e+20
          %357 = vst.msk [vmem:[#allocation2 + $0x1c0] sm:$0xff] %vm300, -1e+20
          %358 = vst.msk [vmem:[#allocation2 + $0x1c8] sm:$0xff] %vm300, -1e+20
          %359 = vst.msk [vmem:[#allocation2 + $0x1d0] sm:$0xff] %vm300, -1e+20
          %360 = vst.msk [vmem:[#allocation2 + $0x1d8] sm:$0xff] %vm300, -1e+20
          %361 = vst.msk [vmem:[#allocation2 + $0x1e0] sm:$0xff] %vm300, -1e+20
          %362 = vst.msk [vmem:[#allocation2 + $0x1e8] sm:$0xff] %vm300, -1e+20
          %363 = vst.msk [vmem:[#allocation2 + $0x1f0] sm:$0xff] %vm300, -1e+20
          %364 = vst.msk [vmem:[#allocation2 + $0x1f8] sm:$0xff] %vm300, -1e+20
          %365 = vst.msk [vmem:[#allocation3] sm:$0xff] %vm300, 0.0
          %366 = vst.msk [vmem:[#allocation3 + $0x8] sm:$0xff] %vm300, 0.0
          %367 = vst.msk [vmem:[#allocation3 + $0x10] sm:$0xff] %vm300, 0.0
          %368 = vst.msk [vmem:[#allocation3 + $0x18] sm:$0xff] %vm300, 0.0
          %369 = vst.msk [vmem:[#allocation3 + $0x20] sm:$0xff] %vm300, 0.0
          %370 = vst.msk [vmem:[#allocation3 + $0x28] sm:$0xff] %vm300, 0.0
          %371 = vst.msk [vmem:[#allocation3 + $0x30] sm:$0xff] %vm300, 0.0
          %372 = vst.msk [vmem:[#allocation3 + $0x38] sm:$0xff] %vm300, 0.0
          %373 = vst.msk [vmem:[#allocation3 + $0x40] sm:$0xff] %vm300, 0.0
          %374 = vst.msk [vmem:[#allocation3 + $0x48] sm:$0xff] %vm300, 0.0
          %375 = vst.msk [vmem:[#allocation3 + $0x50] sm:$0xff] %vm300, 0.0
          %376 = vst.msk [vmem:[#allocation3 + $0x58] sm:$0xff] %vm300, 0.0
          %377 = vst.msk [vmem:[#allocation3 + $0x60] sm:$0xff] %vm300, 0.0
          %378 = vst.msk [vmem:[#allocation3 + $0x68] sm:$0xff] %vm300, 0.0
          %379 = vst.msk [vmem:[#allocation3 + $0x70] sm:$0xff] %vm300, 0.0
          %380 = vst.msk [vmem:[#allocation3 + $0x78] sm:$0xff] %vm300, 0.0
          %381 = vst.msk [vmem:[#allocation3 + $0x80] sm:$0xff] %vm300, 0.0
          %382 = vst.msk [vmem:[#allocation3 + $0x88] sm:$0xff] %vm300, 0.0
          %383 = vst.msk [vmem:[#allocation3 + $0x90] sm:$0xff] %vm300, 0.0
          %384 = vst.msk [vmem:[#allocation3 + $0x98] sm:$0xff] %vm300, 0.0
          %385 = vst.msk [vmem:[#allocation3 + $0xa0] sm:$0xff] %vm300, 0.0
          %386 = vst.msk [vmem:[#allocation3 + $0xa8] sm:$0xff] %vm300, 0.0
          %387 = vst.msk [vmem:[#allocation3 + $0xb0] sm:$0xff] %vm300, 0.0
          %388 = vst.msk [vmem:[#allocation3 + $0xb8] sm:$0xff] %vm300, 0.0
          %389 = vst.msk [vmem:[#allocation3 + $0xc0] sm:$0xff] %vm300, 0.0
          %390 = vst.msk [vmem:[#allocation3 + $0xc8] sm:$0xff] %vm300, 0.0
          %391 = vst.msk [vmem:[#allocation3 + $0xd0] sm:$0xff] %vm300, 0.0
          %392 = vst.msk [vmem:[#allocation3 + $0xd8] sm:$0xff] %vm300, 0.0
          %393 = vst.msk [vmem:[#allocation3 + $0xe0] sm:$0xff] %vm300, 0.0
          %394 = vst.msk [vmem:[#allocation3 + $0xe8] sm:$0xff] %vm300, 0.0
          %395 = vst.msk [vmem:[#allocation3 + $0xf0] sm:$0xff] %vm300, 0.0
          %396 = vst.msk [vmem:[#allocation3 + $0xf8] sm:$0xff] %vm300, 0.0
          %397 = vst.msk [vmem:[#allocation3 + $0x100] sm:$0xff] %vm300, 0.0
          %398 = vst.msk [vmem:[#allocation3 + $0x108] sm:$0xff] %vm300, 0.0
          %399 = vst.msk [vmem:[#allocation3 + $0x110] sm:$0xff] %vm300, 0.0
          %400 = vst.msk [vmem:[#allocation3 + $0x118] sm:$0xff] %vm300, 0.0
          %401 = vst.msk [vmem:[#allocation3 + $0x120] sm:$0xff] %vm300, 0.0
          %402 = vst.msk [vmem:[#allocation3 + $0x128] sm:$0xff] %vm300, 0.0
          %403 = vst.msk [vmem:[#allocation3 + $0x130] sm:$0xff] %vm300, 0.0
          %404 = vst.msk [vmem:[#allocation3 + $0x138] sm:$0xff] %vm300, 0.0
          %405 = vst.msk [vmem:[#allocation3 + $0x140] sm:$0xff] %vm300, 0.0
          %406 = vst.msk [vmem:[#allocation3 + $0x148] sm:$0xff] %vm300, 0.0
          %407 = vst.msk [vmem:[#allocation3 + $0x150] sm:$0xff] %vm300, 0.0
          %408 = vst.msk [vmem:[#allocation3 + $0x158] sm:$0xff] %vm300, 0.0
          %409 = vst.msk [vmem:[#allocation3 + $0x160] sm:$0xff] %vm300, 0.0
          %410 = vst.msk [vmem:[#allocation3 + $0x168] sm:$0xff] %vm300, 0.0
          %411 = vst.msk [vmem:[#allocation3 + $0x170] sm:$0xff] %vm300, 0.0
          %412 = vst.msk [vmem:[#allocation3 + $0x178] sm:$0xff] %vm300, 0.0
          %413 = vst.msk [vmem:[#allocation3 + $0x180] sm:$0xff] %vm300, 0.0
          %414 = vst.msk [vmem:[#allocation3 + $0x188] sm:$0xff] %vm300, 0.0
          %415 = vst.msk [vmem:[#allocation3 + $0x190] sm:$0xff] %vm300, 0.0
          %416 = vst.msk [vmem:[#allocation3 + $0x198] sm:$0xff] %vm300, 0.0
          %417 = vst.msk [vmem:[#allocation3 + $0x1a0] sm:$0xff] %vm300, 0.0
          %418 = vst.msk [vmem:[#allocation3 + $0x1a8] sm:$0xff] %vm300, 0.0
          %419 = vst.msk [vmem:[#allocation3 + $0x1b0] sm:$0xff] %vm300, 0.0
          %420 = vst.msk [vmem:[#allocation3 + $0x1b8] sm:$0xff] %vm300, 0.0
          %421 = vst.msk [vmem:[#allocation3 + $0x1c0] sm:$0xff] %vm300, 0.0
          %422 = vst.msk [vmem:[#allocation3 + $0x1c8] sm:$0xff] %vm300, 0.0
          %423 = vst.msk [vmem:[#allocation3 + $0x1d0] sm:$0xff] %vm300, 0.0
          %424 = vst.msk [vmem:[#allocation3 + $0x1d8] sm:$0xff] %vm300, 0.0
          %425 = vst.msk [vmem:[#allocation3 + $0x1e0] sm:$0xff] %vm300, 0.0
          %426 = vst.msk [vmem:[#allocation3 + $0x1e8] sm:$0xff] %vm300, 0.0
          %427 = vst.msk [vmem:[#allocation3 + $0x1f0] sm:$0xff] %vm300, 0.0
          %428 = vst.msk [vmem:[#allocation3 + $0x1f8] sm:$0xff] %vm300, 0.0
          %vm429 = vcmask 261120
          %430 = vst.msk [vmem:[#allocation4] sm:$0xff] %vm429, 0.0
          %431 = vst.msk [vmem:[#allocation4 + $0x8] sm:$0xff] %vm429, 0.0
          %432 = vst.msk [vmem:[#allocation4 + $0x10] sm:$0xff] %vm429, 0.0
          %433 = vst.msk [vmem:[#allocation4 + $0x18] sm:$0xff] %vm429, 0.0
          %434 = vst.msk [vmem:[#allocation4 + $0x20] sm:$0xff] %vm429, 0.0
          %435 = vst.msk [vmem:[#allocation4 + $0x28] sm:$0xff] %vm429, 0.0
          %436 = vst.msk [vmem:[#allocation4 + $0x30] sm:$0xff] %vm429, 0.0
          %437 = vst.msk [vmem:[#allocation4 + $0x38] sm:$0xff] %vm429, 0.0
          %438 = vst.msk [vmem:[#allocation4 + $0x40] sm:$0xff] %vm429, 0.0
          %439 = vst.msk [vmem:[#allocation4 + $0x48] sm:$0xff] %vm429, 0.0
          %440 = vst.msk [vmem:[#allocation4 + $0x50] sm:$0xff] %vm429, 0.0
          %441 = vst.msk [vmem:[#allocation4 + $0x58] sm:$0xff] %vm429, 0.0
          %442 = vst.msk [vmem:[#allocation4 + $0x60] sm:$0xff] %vm429, 0.0
          %443 = vst.msk [vmem:[#allocation4 + $0x68] sm:$0xff] %vm429, 0.0
          %444 = vst.msk [vmem:[#allocation4 + $0x70] sm:$0xff] %vm429, 0.0
          %445 = vst.msk [vmem:[#allocation4 + $0x78] sm:$0xff] %vm429, 0.0
          %446 = vst.msk [vmem:[#allocation4 + $0x80] sm:$0xff] %vm429, 0.0
          %447 = vst.msk [vmem:[#allocation4 + $0x88] sm:$0xff] %vm429, 0.0
          %448 = vst.msk [vmem:[#allocation4 + $0x90] sm:$0xff] %vm429, 0.0
          %449 = vst.msk [vmem:[#allocation4 + $0x98] sm:$0xff] %vm429, 0.0
          %450 = vst.msk [vmem:[#allocation4 + $0xa0] sm:$0xff] %vm429, 0.0
          %451 = vst.msk [vmem:[#allocation4 + $0xa8] sm:$0xff] %vm429, 0.0
          %452 = vst.msk [vmem:[#allocation4 + $0xb0] sm:$0xff] %vm429, 0.0
          %453 = vst.msk [vmem:[#allocation4 + $0xb8] sm:$0xff] %vm429, 0.0
          %454 = vst.msk [vmem:[#allocation4 + $0xc0] sm:$0xff] %vm429, 0.0
          %455 = vst.msk [vmem:[#allocation4 + $0xc8] sm:$0xff] %vm429, 0.0
          %456 = vst.msk [vmem:[#allocation4 + $0xd0] sm:$0xff] %vm429, 0.0
          %457 = vst.msk [vmem:[#allocation4 + $0xd8] sm:$0xff] %vm429, 0.0
          %458 = vst.msk [vmem:[#allocation4 + $0xe0] sm:$0xff] %vm429, 0.0
          %459 = vst.msk [vmem:[#allocation4 + $0xe8] sm:$0xff] %vm429, 0.0
          %460 = vst.msk [vmem:[#allocation4 + $0xf0] sm:$0xff] %vm429, 0.0
          %461 = vst.msk [vmem:[#allocation4 + $0xf8] sm:$0xff] %vm429, 0.0
          %462 = vst.msk [vmem:[#allocation4 + $0x100] sm:$0xff] %vm429, 0.0
          %463 = vst.msk [vmem:[#allocation4 + $0x108] sm:$0xff] %vm429, 0.0
          %464 = vst.msk [vmem:[#allocation4 + $0x110] sm:$0xff] %vm429, 0.0
          %465 = vst.msk [vmem:[#allocation4 + $0x118] sm:$0xff] %vm429, 0.0
          %466 = vst.msk [vmem:[#allocation4 + $0x120] sm:$0xff] %vm429, 0.0
          %467 = vst.msk [vmem:[#allocation4 + $0x128] sm:$0xff] %vm429, 0.0
          %468 = vst.msk [vmem:[#allocation4 + $0x130] sm:$0xff] %vm429, 0.0
          %469 = vst.msk [vmem:[#allocation4 + $0x138] sm:$0xff] %vm429, 0.0
          %470 = vst.msk [vmem:[#allocation4 + $0x140] sm:$0xff] %vm429, 0.0
          %471 = vst.msk [vmem:[#allocation4 + $0x148] sm:$0xff] %vm429, 0.0
          %472 = vst.msk [vmem:[#allocation4 + $0x150] sm:$0xff] %vm429, 0.0
          %473 = vst.msk [vmem:[#allocation4 + $0x158] sm:$0xff] %vm429, 0.0
          %474 = vst.msk [vmem:[#allocation4 + $0x160] sm:$0xff] %vm429, 0.0
          %475 = vst.msk [vmem:[#allocation4 + $0x168] sm:$0xff] %vm429, 0.0
          %476 = vst.msk [vmem:[#allocation4 + $0x170] sm:$0xff] %vm429, 0.0
          %477 = vst.msk [vmem:[#allocation4 + $0x178] sm:$0xff] %vm429, 0.0
          %478 = vst.msk [vmem:[#allocation4 + $0x180] sm:$0xff] %vm429, 0.0
          %479 = vst.msk [vmem:[#allocation4 + $0x188] sm:$0xff] %vm429, 0.0
          %480 = vst.msk [vmem:[#allocation4 + $0x190] sm:$0xff] %vm429, 0.0
          %481 = vst.msk [vmem:[#allocation4 + $0x198] sm:$0xff] %vm429, 0.0
          %482 = vst.msk [vmem:[#allocation4 + $0x1a0] sm:$0xff] %vm429, 0.0
          %483 = vst.msk [vmem:[#allocation4 + $0x1a8] sm:$0xff] %vm429, 0.0
          %484 = vst.msk [vmem:[#allocation4 + $0x1b0] sm:$0xff] %vm429, 0.0
          %485 = vst.msk [vmem:[#allocation4 + $0x1b8] sm:$0xff] %vm429, 0.0
          %486 = vst.msk [vmem:[#allocation4 + $0x1c0] sm:$0xff] %vm429, 0.0
          %487 = vst.msk [vmem:[#allocation4 + $0x1c8] sm:$0xff] %vm429, 0.0
          %488 = vst.msk [vmem:[#allocation4 + $0x1d0] sm:$0xff] %vm429, 0.0
          %489 = vst.msk [vmem:[#allocation4 + $0x1d8] sm:$0xff] %vm429, 0.0
          %490 = vst.msk [vmem:[#allocation4 + $0x1e0] sm:$0xff] %vm429, 0.0
          %491 = vst.msk [vmem:[#allocation4 + $0x1e8] sm:$0xff] %vm429, 0.0
          %492 = vst.msk [vmem:[#allocation4 + $0x1f0] sm:$0xff] %vm429, 0.0
          %493 = vst.msk [vmem:[#allocation4 + $0x1f8] sm:$0xff] %vm429, 0.0
        $region40: #{tpu_custom_call.1} parent=35 // pred_fallthru
          _
        %v494 = vld [vmem:[%s292] sm:$0xff]
        %v495 = vld [vmem:[%s292 + $0x8] sm:$0xff]
        %v496 = vld [vmem:[%s292 + $0x10] sm:$0xff]
        %v497 = vld [vmem:[%s292 + $0x18] sm:$0xff]
        %v498 = vld [vmem:[%s292 + $0x20] sm:$0xff]
        %v499 = vld [vmem:[%s292 + $0x28] sm:$0xff]
        %v500 = vld [vmem:[%s292 + $0x30] sm:$0xff]
        %v501 = vld [vmem:[%s292 + $0x38] sm:$0xff]
        %v502 = vunpack.c.0.s8 %v494
        %v503 = vunpack.c.0.s8 %v495
        %v504 = vunpack.c.1.s8 %v494
        %v505 = vunpack.c.1.s8 %v495
        %v506 = vunpack.c.2.s8 %v494
        %v507 = vunpack.c.2.s8 %v495
        %v508 = vunpack.c.3.s8 %v494
        %v509 = vunpack.c.3.s8 %v495
        %v510 = vunpack.c.0.s8 %v496
        %v511 = vunpack.c.0.s8 %v497
        %v512 = vunpack.c.1.s8 %v496
        %v513 = vunpack.c.1.s8 %v497
        %v514 = vunpack.c.2.s8 %v496
        %v515 = vunpack.c.2.s8 %v497
        %v516 = vunpack.c.3.s8 %v496
        %v517 = vunpack.c.3.s8 %v497
        %v518 = vunpack.c.0.s8 %v498
        %v519 = vunpack.c.0.s8 %v499
        %v520 = vunpack.c.1.s8 %v498
        %v521 = vunpack.c.1.s8 %v499
        %v522 = vunpack.c.2.s8 %v498
        %v523 = vunpack.c.2.s8 %v499
        %v524 = vunpack.c.3.s8 %v498
        %v525 = vunpack.c.3.s8 %v499
        %v526 = vunpack.c.0.s8 %v500
        %v527 = vunpack.c.0.s8 %v501
        %v528 = vunpack.c.1.s8 %v500
        %v529 = vunpack.c.1.s8 %v501
        %v530 = vunpack.c.2.s8 %v500
        %v531 = vunpack.c.2.s8 %v501
        %v532 = vunpack.c.3.s8 %v500
        %v533 = vunpack.c.3.s8 %v501
        %v534 = vcvt.s32.f32 %v502
        %v535 = vcvt.s32.f32 %v503
        %v536 = vcvt.s32.f32 %v504
        %v537 = vcvt.s32.f32 %v505
        %v538 = vcvt.s32.f32 %v506
        %v539 = vcvt.s32.f32 %v507
        %v540 = vcvt.s32.f32 %v508
        %v541 = vcvt.s32.f32 %v509
        %v542 = vcvt.s32.f32 %v510
        %v543 = vcvt.s32.f32 %v511
        %v544 = vcvt.s32.f32 %v512
        %v545 = vcvt.s32.f32 %v513
        %v546 = vcvt.s32.f32 %v514
        %v547 = vcvt.s32.f32 %v515
        %v548 = vcvt.s32.f32 %v516
        %v549 = vcvt.s32.f32 %v517
        %v550 = vcvt.s32.f32 %v518
        %v551 = vcvt.s32.f32 %v519
        %v552 = vcvt.s32.f32 %v520
        %v553 = vcvt.s32.f32 %v521
        %v554 = vcvt.s32.f32 %v522
        %v555 = vcvt.s32.f32 %v523
        %v556 = vcvt.s32.f32 %v524
        %v557 = vcvt.s32.f32 %v525
        %v558 = vcvt.s32.f32 %v526
        %v559 = vcvt.s32.f32 %v527
        %v560 = vcvt.s32.f32 %v528
        %v561 = vcvt.s32.f32 %v529
        %v562 = vcvt.s32.f32 %v530
        %v563 = vcvt.s32.f32 %v531
        %v564 = vcvt.s32.f32 %v532
        %v565 = vcvt.s32.f32 %v533
        %v566 = vsub.f32 %v534, 1.0
        %v567 = vsub.f32 %v535, 1.0
        %v568 = vsub.f32 %v536, 1.0
        %v569 = vsub.f32 %v537, 1.0
        %v570 = vsub.f32 %v538, 1.0
        %v571 = vsub.f32 %v539, 1.0
        %v572 = vsub.f32 %v540, 1.0
        %v573 = vsub.f32 %v541, 1.0
        %v574 = vsub.f32 %v542, 1.0
        %v575 = vsub.f32 %v543, 1.0
        %v576 = vsub.f32 %v544, 1.0
        %v577 = vsub.f32 %v545, 1.0
        %v578 = vsub.f32 %v546, 1.0
        %v579 = vsub.f32 %v547, 1.0
        %v580 = vsub.f32 %v548, 1.0
        %v581 = vsub.f32 %v549, 1.0
        %v582 = vsub.f32 %v550, 1.0
        %v583 = vsub.f32 %v551, 1.0
        %v584 = vsub.f32 %v552, 1.0
        %v585 = vsub.f32 %v553, 1.0
        %v586 = vsub.f32 %v554, 1.0
        %v587 = vsub.f32 %v555, 1.0
        %v588 = vsub.f32 %v556, 1.0
        %v589 = vsub.f32 %v557, 1.0
        %v590 = vsub.f32 %v558, 1.0
        %v591 = vsub.f32 %v559, 1.0
        %v592 = vsub.f32 %v560, 1.0
        %v593 = vsub.f32 %v561, 1.0
        %v594 = vsub.f32 %v562, 1.0
        %v595 = vsub.f32 %v563, 1.0
        %v596 = vsub.f32 %v564, 1.0
        %v597 = vsub.f32 %v565, 1.0
        %v598 = vmul.f32 %v566, 1e+30
        %v599 = vmul.f32 %v567, 1e+30
        %v600 = vmul.f32 %v568, 1e+30
        %v601 = vmul.f32 %v569, 1e+30
        %v602 = vmul.f32 %v570, 1e+30
        %v603 = vmul.f32 %v571, 1e+30
        %v604 = vmul.f32 %v572, 1e+30
        %v605 = vmul.f32 %v573, 1e+30
        %v606 = vmul.f32 %v574, 1e+30
        %v607 = vmul.f32 %v575, 1e+30
        %v608 = vmul.f32 %v576, 1e+30
        %v609 = vmul.f32 %v577, 1e+30
        %v610 = vmul.f32 %v578, 1e+30
        %v611 = vmul.f32 %v579, 1e+30
        %v612 = vmul.f32 %v580, 1e+30
        %v613 = vmul.f32 %v581, 1e+30
        %v614 = vmul.f32 %v582, 1e+30
        %v615 = vmul.f32 %v583, 1e+30
        %v616 = vmul.f32 %v584, 1e+30
        %v617 = vmul.f32 %v585, 1e+30
        %v618 = vmul.f32 %v586, 1e+30
        %v619 = vmul.f32 %v587, 1e+30
        %v620 = vmul.f32 %v588, 1e+30
        %v621 = vmul.f32 %v589, 1e+30
        %v622 = vmul.f32 %v590, 1e+30
        %v623 = vmul.f32 %v591, 1e+30
        %v624 = vmul.f32 %v592, 1e+30
        %v625 = vmul.f32 %v593, 1e+30
        %v626 = vmul.f32 %v594, 1e+30
        %v627 = vmul.f32 %v595, 1e+30
        %v628 = vmul.f32 %v596, 1e+30
        %v629 = vmul.f32 %v597, 1e+30
        %v630 = vld [vmem:[%s275] sm:$0xff]
        %v631 = vld [vmem:[%s275 + $0x8] sm:$0xff]
        %v632 = vld [vmem:[%s275 + $0x10] sm:$0xff]
        %v633 = vld [vmem:[%s275 + $0x18] sm:$0xff]
        %v634 = vld [vmem:[%s275 + $0x20] sm:$0xff]
        %v635 = vld [vmem:[%s275 + $0x28] sm:$0xff]
        %v636 = vld [vmem:[%s275 + $0x30] sm:$0xff]
        %v637 = vld [vmem:[%s275 + $0x38] sm:$0xff]
        %v638 = vld [vmem:[%s275 + $0x40] sm:$0xff]
        %v639 = vld [vmem:[%s275 + $0x48] sm:$0xff]
        %v640 = vld [vmem:[%s275 + $0x50] sm:$0xff]
        %v641 = vld [vmem:[%s275 + $0x58] sm:$0xff]
        %v642 = vld [vmem:[%s275 + $0x60] sm:$0xff]
        %v643 = vld [vmem:[%s275 + $0x68] sm:$0xff]
        %v644 = vld [vmem:[%s275 + $0x70] sm:$0xff]
        %v645 = vld [vmem:[%s275 + $0x78] sm:$0xff]
        %v646 = vld [vmem:[%s269] sm:$0xff]
        %648 = vset.pattern.permute.xlu0 0
        %649 = vperm.xlu0 %648, %v630
        %v650 = vpop.permute.xlu0 %649
        %653 = vset.pattern.permute.xlu0 0
        %654 = vperm.xlu0 %653, %v631
        %v655 = vpop.permute.xlu0 %654
        %658 = vset.pattern.permute.xlu0 0
        %659 = vperm.xlu0 %658, %v632
        %v660 = vpop.permute.xlu0 %659
        %663 = vset.pattern.permute.xlu0 0
        %664 = vperm.xlu0 %663, %v633
        %v665 = vpop.permute.xlu0 %664
        %668 = vset.pattern.permute.xlu0 0
        %669 = vperm.xlu0 %668, %v634
        %v670 = vpop.permute.xlu0 %669
        %673 = vset.pattern.permute.xlu0 0
        %674 = vperm.xlu0 %673, %v635
        %v675 = vpop.permute.xlu0 %674
        %678 = vset.pattern.permute.xlu0 0
        %679 = vperm.xlu0 %678, %v636
        %v680 = vpop.permute.xlu0 %679
        %683 = vset.pattern.permute.xlu0 0
        %684 = vperm.xlu0 %683, %v637
        %v685 = vpop.permute.xlu0 %684
        %688 = vset.pattern.permute.xlu0 0
        %689 = vperm.xlu0 %688, %v638
        %v690 = vpop.permute.xlu0 %689
        %693 = vset.pattern.permute.xlu0 0
        %694 = vperm.xlu0 %693, %v639
        %v695 = vpop.permute.xlu0 %694
        %698 = vset.pattern.permute.xlu0 0
        %699 = vperm.xlu0 %698, %v640
        %v700 = vpop.permute.xlu0 %699
        %703 = vset.pattern.permute.xlu0 0
        %704 = vperm.xlu0 %703, %v641
        %v705 = vpop.permute.xlu0 %704
        %708 = vset.pattern.permute.xlu0 0
        %709 = vperm.xlu0 %708, %v642
        %v710 = vpop.permute.xlu0 %709
        %713 = vset.pattern.permute.xlu0 0
        %714 = vperm.xlu0 %713, %v643
        %v715 = vpop.permute.xlu0 %714
        %718 = vset.pattern.permute.xlu0 0
        %719 = vperm.xlu0 %718, %v644
        %v720 = vpop.permute.xlu0 %719
        %723 = vset.pattern.permute.xlu0 0
        %724 = vperm.xlu0 %723, %v645
        %v725 = vpop.permute.xlu0 %724
        %v728 = vperm.slane %v646, 0
        %v729 = vperm.slane %v646, 4
        %v732 = vperm.slane %v728, 0
        %v733 = vperm.slane %v729, 0
        %v734 = vadd.f32 %v650, %v732
        %v735 = vadd.f32 %v650, %v733
        %v736 = vadd.f32 %v655, %v732
        %v737 = vadd.f32 %v655, %v733
        %v738 = vadd.f32 %v660, %v732
        %v739 = vadd.f32 %v660, %v733
        %v740 = vadd.f32 %v665, %v732
        %v741 = vadd.f32 %v665, %v733
        %v742 = vadd.f32 %v670, %v732
        %v743 = vadd.f32 %v670, %v733
        %v744 = vadd.f32 %v675, %v732
        %v745 = vadd.f32 %v675, %v733
        %v746 = vadd.f32 %v680, %v732
        %v747 = vadd.f32 %v680, %v733
        %v748 = vadd.f32 %v685, %v732
        %v749 = vadd.f32 %v685, %v733
        %v750 = vadd.f32 %v690, %v732
        %v751 = vadd.f32 %v690, %v733
        %v752 = vadd.f32 %v695, %v732
        %v753 = vadd.f32 %v695, %v733
        %v754 = vadd.f32 %v700, %v732
        %v755 = vadd.f32 %v700, %v733
        %v756 = vadd.f32 %v705, %v732
        %v757 = vadd.f32 %v705, %v733
        %v758 = vadd.f32 %v710, %v732
        %v759 = vadd.f32 %v710, %v733
        %v760 = vadd.f32 %v715, %v732
        %v761 = vadd.f32 %v715, %v733
        %v762 = vadd.f32 %v720, %v732
        %v763 = vadd.f32 %v720, %v733
        %v764 = vadd.f32 %v725, %v732
        %v765 = vadd.f32 %v725, %v733
        %vm766 = vcmp.gt.f32.partialorder %v734, 0.0
        %vm767 = vcmp.gt.f32.partialorder %v735, 0.0
        %vm768 = vcmp.gt.f32.partialorder %v736, 0.0
        %vm769 = vcmp.gt.f32.partialorder %v737, 0.0
        %vm770 = vcmp.gt.f32.partialorder %v738, 0.0
        %vm771 = vcmp.gt.f32.partialorder %v739, 0.0
        %vm772 = vcmp.gt.f32.partialorder %v740, 0.0
        %vm773 = vcmp.gt.f32.partialorder %v741, 0.0
        %vm774 = vcmp.gt.f32.partialorder %v742, 0.0
        %vm775 = vcmp.gt.f32.partialorder %v743, 0.0
        %vm776 = vcmp.gt.f32.partialorder %v744, 0.0
        %vm777 = vcmp.gt.f32.partialorder %v745, 0.0
        %vm778 = vcmp.gt.f32.partialorder %v746, 0.0
        %vm779 = vcmp.gt.f32.partialorder %v747, 0.0
        %vm780 = vcmp.gt.f32.partialorder %v748, 0.0
        %vm781 = vcmp.gt.f32.partialorder %v749, 0.0
        %vm782 = vcmp.gt.f32.partialorder %v750, 0.0
        %vm783 = vcmp.gt.f32.partialorder %v751, 0.0
        %vm784 = vcmp.gt.f32.partialorder %v752, 0.0
        %vm785 = vcmp.gt.f32.partialorder %v753, 0.0
        %vm786 = vcmp.gt.f32.partialorder %v754, 0.0
        %vm787 = vcmp.gt.f32.partialorder %v755, 0.0
        %vm788 = vcmp.gt.f32.partialorder %v756, 0.0
        %vm789 = vcmp.gt.f32.partialorder %v757, 0.0
        %vm790 = vcmp.gt.f32.partialorder %v758, 0.0
        %vm791 = vcmp.gt.f32.partialorder %v759, 0.0
        %vm792 = vcmp.gt.f32.partialorder %v760, 0.0
        %vm793 = vcmp.gt.f32.partialorder %v761, 0.0
        %vm794 = vcmp.gt.f32.partialorder %v762, 0.0
        %vm795 = vcmp.gt.f32.partialorder %v763, 0.0
        %vm796 = vcmp.gt.f32.partialorder %v764, 0.0
        %vm797 = vcmp.gt.f32.partialorder %v765, 0.0
        %v798 = vmul.f32 %v734, 0.01
        %v799 = vmul.f32 %v735, 0.01
        %v800 = vmul.f32 %v736, 0.01
        %v801 = vmul.f32 %v737, 0.01
        %v802 = vmul.f32 %v738, 0.01
        %v803 = vmul.f32 %v739, 0.01
        %v804 = vmul.f32 %v740, 0.01
        %v805 = vmul.f32 %v741, 0.01
        %v806 = vmul.f32 %v742, 0.01
        %v807 = vmul.f32 %v743, 0.01
        %v808 = vmul.f32 %v744, 0.01
        %v809 = vmul.f32 %v745, 0.01
        %v810 = vmul.f32 %v746, 0.01
        %v811 = vmul.f32 %v747, 0.01
        %v812 = vmul.f32 %v748, 0.01
        %v813 = vmul.f32 %v749, 0.01
        %v814 = vmul.f32 %v750, 0.01
        %v815 = vmul.f32 %v751, 0.01
        %v816 = vmul.f32 %v752, 0.01
        %v817 = vmul.f32 %v753, 0.01
        %v818 = vmul.f32 %v754, 0.01
        %v819 = vmul.f32 %v755, 0.01
        %v820 = vmul.f32 %v756, 0.01
        %v821 = vmul.f32 %v757, 0.01
        %v822 = vmul.f32 %v758, 0.01
        %v823 = vmul.f32 %v759, 0.01
        %v824 = vmul.f32 %v760, 0.01
        %v825 = vmul.f32 %v761, 0.01
        %v826 = vmul.f32 %v762, 0.01
        %v827 = vmul.f32 %v763, 0.01
        %v828 = vmul.f32 %v764, 0.01
        %v829 = vmul.f32 %v765, 0.01
        %v830 = vsel %vm766, %v734, %v798
        %v831 = vsel %vm767, %v735, %v799
        %v832 = vsel %vm768, %v736, %v800
        %v833 = vsel %vm769, %v737, %v801
        %v834 = vsel %vm770, %v738, %v802
        %v835 = vsel %vm771, %v739, %v803
        %v836 = vsel %vm772, %v740, %v804
        %v837 = vsel %vm773, %v741, %v805
        %v838 = vsel %vm774, %v742, %v806
        %v839 = vsel %vm775, %v743, %v807
        %v840 = vsel %vm776, %v744, %v808
        %v841 = vsel %vm777, %v745, %v809
        %v842 = vsel %vm778, %v746, %v810
        %v843 = vsel %vm779, %v747, %v811
        %v844 = vsel %vm780, %v748, %v812
        %v845 = vsel %vm781, %v749, %v813
        %v846 = vsel %vm782, %v750, %v814
        %v847 = vsel %vm783, %v751, %v815
        %v848 = vsel %vm784, %v752, %v816
        %v849 = vsel %vm785, %v753, %v817
        %v850 = vsel %vm786, %v754, %v818
        %v851 = vsel %vm787, %v755, %v819
        %v852 = vsel %vm788, %v756, %v820
        %v853 = vsel %vm789, %v757, %v821
        %v854 = vsel %vm790, %v758, %v822
        %v855 = vsel %vm791, %v759, %v823
        %v856 = vsel %vm792, %v760, %v824
        %v857 = vsel %vm793, %v761, %v825
        %v858 = vsel %vm794, %v762, %v826
        %v859 = vsel %vm795, %v763, %v827
        %v860 = vsel %vm796, %v764, %v828
        %v861 = vsel %vm797, %v765, %v829
        %v862 = vadd.f32 %v830, %v598
        %v863 = vadd.f32 %v831, %v599
        %v864 = vadd.f32 %v832, %v600
        %v865 = vadd.f32 %v833, %v601
        %v866 = vadd.f32 %v834, %v602
        %v867 = vadd.f32 %v835, %v603
        %v868 = vadd.f32 %v836, %v604
        %v869 = vadd.f32 %v837, %v605
        %v870 = vadd.f32 %v838, %v606
        %v871 = vadd.f32 %v839, %v607
        %v872 = vadd.f32 %v840, %v608
        %v873 = vadd.f32 %v841, %v609
        %v874 = vadd.f32 %v842, %v610
        %v875 = vadd.f32 %v843, %v611
        %v876 = vadd.f32 %v844, %v612
        %v877 = vadd.f32 %v845, %v613
        %v878 = vadd.f32 %v846, %v614
        %v879 = vadd.f32 %v847, %v615
        %v880 = vadd.f32 %v848, %v616
        %v881 = vadd.f32 %v849, %v617
        %v882 = vadd.f32 %v850, %v618
        %v883 = vadd.f32 %v851, %v619
        %v884 = vadd.f32 %v852, %v620
        %v885 = vadd.f32 %v853, %v621
        %v886 = vadd.f32 %v854, %v622
        %v887 = vadd.f32 %v855, %v623
        %v888 = vadd.f32 %v856, %v624
        %v889 = vadd.f32 %v857, %v625
        %v890 = vadd.f32 %v858, %v626
        %v891 = vadd.f32 %v859, %v627
        %v892 = vadd.f32 %v860, %v628
        %v893 = vadd.f32 %v861, %v629
        %v894 = vld [vmem:[#allocation2] sm:$0xff]
        %v895 = vld [vmem:[#allocation2 + $0x8] sm:$0xff]
        %v896 = vld [vmem:[#allocation2 + $0x10] sm:$0xff]
        %v897 = vld [vmem:[#allocation2 + $0x18] sm:$0xff]
        %v898 = vld [vmem:[#allocation2 + $0x20] sm:$0xff]
        %v899 = vld [vmem:[#allocation2 + $0x28] sm:$0xff]
        %v900 = vld [vmem:[#allocation2 + $0x30] sm:$0xff]
        %v901 = vld [vmem:[#allocation2 + $0x38] sm:$0xff]
        %v902 = vld [vmem:[#allocation2 + $0x40] sm:$0xff]
        %v903 = vld [vmem:[#allocation2 + $0x48] sm:$0xff]
        %v904 = vld [vmem:[#allocation2 + $0x50] sm:$0xff]
        %v905 = vld [vmem:[#allocation2 + $0x58] sm:$0xff]
        %v906 = vld [vmem:[#allocation2 + $0x60] sm:$0xff]
        %v907 = vld [vmem:[#allocation2 + $0x68] sm:$0xff]
        %v908 = vld [vmem:[#allocation2 + $0x70] sm:$0xff]
        %v909 = vld [vmem:[#allocation2 + $0x78] sm:$0xff]
        %v910 = vmax.f32 %v862, %v863
        %911 = vmax.xlane.f32.xlu0 %v910
        %v912 = vpop.xlane.xlu0 %911
        %v913 = vmax.f32 %v864, %v865
        %914 = vmax.xlane.f32.xlu0 %v913
        %v915 = vpop.xlane.xlu0 %914
        %v916 = vmax.f32 %v866, %v867
        %917 = vmax.xlane.f32.xlu0 %v916
        %v918 = vpop.xlane.xlu0 %917
        %v919 = vmax.f32 %v868, %v869
        %920 = vmax.xlane.f32.xlu0 %v919
        %v921 = vpop.xlane.xlu0 %920
        %v922 = vmax.f32 %v870, %v871
        %923 = vmax.xlane.f32.xlu0 %v922
        %v924 = vpop.xlane.xlu0 %923
        %v925 = vmax.f32 %v872, %v873
        %926 = vmax.xlane.f32.xlu0 %v925
        %v927 = vpop.xlane.xlu0 %926
        %v928 = vmax.f32 %v874, %v875
        %929 = vmax.xlane.f32.xlu0 %v928
        %v930 = vpop.xlane.xlu0 %929
        %v931 = vmax.f32 %v876, %v877
        %932 = vmax.xlane.f32.xlu0 %v931
        %v933 = vpop.xlane.xlu0 %932
        %v934 = vmax.f32 %v878, %v879
        %935 = vmax.xlane.f32.xlu0 %v934
        %v936 = vpop.xlane.xlu0 %935
        %v937 = vmax.f32 %v880, %v881
        %938 = vmax.xlane.f32.xlu0 %v937
        %v939 = vpop.xlane.xlu0 %938
        %v940 = vmax.f32 %v882, %v883
        %941 = vmax.xlane.f32.xlu0 %v940
        %v942 = vpop.xlane.xlu0 %941
        %v943 = vmax.f32 %v884, %v885
        %944 = vmax.xlane.f32.xlu0 %v943
        %v945 = vpop.xlane.xlu0 %944
        %v946 = vmax.f32 %v886, %v887
        %947 = vmax.xlane.f32.xlu0 %v946
        %v948 = vpop.xlane.xlu0 %947
        %v949 = vmax.f32 %v888, %v889
        %950 = vmax.xlane.f32.xlu0 %v949
        %v951 = vpop.xlane.xlu0 %950
        %v952 = vmax.f32 %v890, %v891
        %953 = vmax.xlane.f32.xlu0 %v952
        %v954 = vpop.xlane.xlu0 %953
        %v955 = vmax.f32 %v892, %v893
        %956 = vmax.xlane.f32.xlu0 %v955
        %v957 = vpop.xlane.xlu0 %956
        %v958 = vmax.f32 %v894, %v912
        %v959 = vmax.f32 %v895, %v915
        %v960 = vmax.f32 %v896, %v918
        %v961 = vmax.f32 %v897, %v921
        %v962 = vmax.f32 %v898, %v924
        %v963 = vmax.f32 %v899, %v927
        %v964 = vmax.f32 %v900, %v930
        %v965 = vmax.f32 %v901, %v933
        %v966 = vmax.f32 %v902, %v936
        %v967 = vmax.f32 %v903, %v939
        %v968 = vmax.f32 %v904, %v942
        %v969 = vmax.f32 %v905, %v945
        %v970 = vmax.f32 %v906, %v948
        %v971 = vmax.f32 %v907, %v951
        %v972 = vmax.f32 %v908, %v954
        %v973 = vmax.f32 %v909, %v957
        %v974 = vsub.f32 %v894, %v958
        %v975 = vsub.f32 %v895, %v959
        %v976 = vsub.f32 %v896, %v960
        %v977 = vsub.f32 %v897, %v961
        %v978 = vsub.f32 %v898, %v962
        %v979 = vsub.f32 %v899, %v963
        %v980 = vsub.f32 %v900, %v964
        %v981 = vsub.f32 %v901, %v965
        %v982 = vsub.f32 %v902, %v966
        %v983 = vsub.f32 %v903, %v967
        %v984 = vsub.f32 %v904, %v968
        %v985 = vsub.f32 %v905, %v969
        %v986 = vsub.f32 %v906, %v970
        %v987 = vsub.f32 %v907, %v971
        %v988 = vsub.f32 %v908, %v972
        %v989 = vsub.f32 %v909, %v973
        %v990 = vmul.f32 %v974, 1.442695
        %v991 = vpow.pop %v990
        %v992 = vmul.f32 %v975, 1.442695
        %v993 = vpow.pop %v992
        %v994 = vmul.f32 %v976, 1.442695
        %v995 = vpow.pop %v994
        %v996 = vmul.f32 %v977, 1.442695
        %v997 = vpow.pop %v996
        %v998 = vmul.f32 %v978, 1.442695
        %v999 = vpow.pop %v998
        %v1000 = vmul.f32 %v979, 1.442695
        %v1001 = vpow.pop %v1000
        %v1002 = vmul.f32 %v980, 1.442695
        %v1003 = vpow.pop %v1002
        %v1004 = vmul.f32 %v981, 1.442695
        %v1005 = vpow.pop %v1004
        %v1006 = vmul.f32 %v982, 1.442695
        %v1007 = vpow.pop %v1006
        %v1008 = vmul.f32 %v983, 1.442695
        %v1009 = vpow.pop %v1008
        %v1010 = vmul.f32 %v984, 1.442695
        %v1011 = vpow.pop %v1010
        %v1012 = vmul.f32 %v985, 1.442695
        %v1013 = vpow.pop %v1012
        %v1014 = vmul.f32 %v986, 1.442695
        %v1015 = vpow.pop %v1014
        %v1016 = vmul.f32 %v987, 1.442695
        %v1017 = vpow.pop %v1016
        %v1018 = vmul.f32 %v988, 1.442695
        %v1019 = vpow.pop %v1018
        %v1020 = vmul.f32 %v989, 1.442695
        %v1021 = vpow.pop %v1020
        %1023 = vset.pattern.permute.xlu0 0
        %1024 = vperm.xlu0 %1023, %v958
        %v1025 = vpop.permute.xlu0 %1024
        %1028 = vset.pattern.permute.xlu0 0
        %1029 = vperm.xlu0 %1028, %v959
        %v1030 = vpop.permute.xlu0 %1029
        %1033 = vset.pattern.permute.xlu0 0
        %1034 = vperm.xlu0 %1033, %v960
        %v1035 = vpop.permute.xlu0 %1034
        %1038 = vset.pattern.permute.xlu0 0
        %1039 = vperm.xlu0 %1038, %v961
        %v1040 = vpop.permute.xlu0 %1039
        %1043 = vset.pattern.permute.xlu0 0
        %1044 = vperm.xlu0 %1043, %v962
        %v1045 = vpop.permute.xlu0 %1044
        %1048 = vset.pattern.permute.xlu0 0
        %1049 = vperm.xlu0 %1048, %v963
        %v1050 = vpop.permute.xlu0 %1049
        %1053 = vset.pattern.permute.xlu0 0
        %1054 = vperm.xlu0 %1053, %v964
        %v1055 = vpop.permute.xlu0 %1054
        %1058 = vset.pattern.permute.xlu0 0
        %1059 = vperm.xlu0 %1058, %v965
        %v1060 = vpop.permute.xlu0 %1059
        %1063 = vset.pattern.permute.xlu0 0
        %1064 = vperm.xlu0 %1063, %v966
        %v1065 = vpop.permute.xlu0 %1064
        %1068 = vset.pattern.permute.xlu0 0
        %1069 = vperm.xlu0 %1068, %v967
        %v1070 = vpop.permute.xlu0 %1069
        %1073 = vset.pattern.permute.xlu0 0
        %1074 = vperm.xlu0 %1073, %v968
        %v1075 = vpop.permute.xlu0 %1074
        %1078 = vset.pattern.permute.xlu0 0
        %1079 = vperm.xlu0 %1078, %v969
        %v1080 = vpop.permute.xlu0 %1079
        %1083 = vset.pattern.permute.xlu0 0
        %1084 = vperm.xlu0 %1083, %v970
        %v1085 = vpop.permute.xlu0 %1084
        %1088 = vset.pattern.permute.xlu0 0
        %1089 = vperm.xlu0 %1088, %v971
        %v1090 = vpop.permute.xlu0 %1089
        %1093 = vset.pattern.permute.xlu0 0
        %1094 = vperm.xlu0 %1093, %v972
        %v1095 = vpop.permute.xlu0 %1094
        %1098 = vset.pattern.permute.xlu0 0
        %1099 = vperm.xlu0 %1098, %v973
        %v1100 = vpop.permute.xlu0 %1099
        %v1102 = vsub.f32 %v862, %v1025
        %v1103 = vsub.f32 %v863, %v1025
        %v1104 = vsub.f32 %v864, %v1030
        %v1105 = vsub.f32 %v865, %v1030
        %v1106 = vsub.f32 %v866, %v1035
        %v1107 = vsub.f32 %v867, %v1035
        %v1108 = vsub.f32 %v868, %v1040
        %v1109 = vsub.f32 %v869, %v1040
        %v1110 = vsub.f32 %v870, %v1045
        %v1111 = vsub.f32 %v871, %v1045
        %v1112 = vsub.f32 %v872, %v1050
        %v1113 = vsub.f32 %v873, %v1050
        %v1114 = vsub.f32 %v874, %v1055
        %v1115 = vsub.f32 %v875, %v1055
        %v1116 = vsub.f32 %v876, %v1060
        %v1117 = vsub.f32 %v877, %v1060
        %v1118 = vsub.f32 %v878, %v1065
        %v1119 = vsub.f32 %v879, %v1065
        %v1120 = vsub.f32 %v880, %v1070
        %v1121 = vsub.f32 %v881, %v1070
        %v1122 = vsub.f32 %v882, %v1075
        %v1123 = vsub.f32 %v883, %v1075
        %v1124 = vsub.f32 %v884, %v1080
        %v1125 = vsub.f32 %v885, %v1080
        %v1126 = vsub.f32 %v886, %v1085
        %v1127 = vsub.f32 %v887, %v1085
        %v1128 = vsub.f32 %v888, %v1090
        %v1129 = vsub.f32 %v889, %v1090
        %v1130 = vsub.f32 %v890, %v1095
        %v1131 = vsub.f32 %v891, %v1095
        %v1132 = vsub.f32 %v892, %v1100
        %v1133 = vsub.f32 %v893, %v1100
        %v1134 = vmul.f32 %v1102, 1.442695
        %v1135 = vpow.pop %v1134
        %v1136 = vmul.f32 %v1103, 1.442695
        %v1137 = vpow.pop %v1136
        %v1138 = vmul.f32 %v1104, 1.442695
        %v1139 = vpow.pop %v1138
        %v1140 = vmul.f32 %v1105, 1.442695
        %v1141 = vpow.pop %v1140
        %v1142 = vmul.f32 %v1106, 1.442695
        %v1143 = vpow.pop %v1142
        %v1144 = vmul.f32 %v1107, 1.442695
        %v1145 = vpow.pop %v1144
        %v1146 = vmul.f32 %v1108, 1.442695
        %v1147 = vpow.pop %v1146
        %v1148 = vmul.f32 %v1109, 1.442695
        %v1149 = vpow.pop %v1148
        %v1150 = vmul.f32 %v1110, 1.442695
        %v1151 = vpow.pop %v1150
        %v1152 = vmul.f32 %v1111, 1.442695
        %v1153 = vpow.pop %v1152
        %v1154 = vmul.f32 %v1112, 1.442695
        %v1155 = vpow.pop %v1154
        %v1156 = vmul.f32 %v1113, 1.442695
        %v1157 = vpow.pop %v1156
        %v1158 = vmul.f32 %v1114, 1.442695
        %v1159 = vpow.pop %v1158
        %v1160 = vmul.f32 %v1115, 1.442695
        %v1161 = vpow.pop %v1160
        %v1162 = vmul.f32 %v1116, 1.442695
        %v1163 = vpow.pop %v1162
        %v1164 = vmul.f32 %v1117, 1.442695
        %v1165 = vpow.pop %v1164
        %v1166 = vmul.f32 %v1118, 1.442695
        %v1167 = vpow.pop %v1166
        %v1168 = vmul.f32 %v1119, 1.442695
        %v1169 = vpow.pop %v1168
        %v1170 = vmul.f32 %v1120, 1.442695
        %v1171 = vpow.pop %v1170
        %v1172 = vmul.f32 %v1121, 1.442695
        %v1173 = vpow.pop %v1172
        %v1174 = vmul.f32 %v1122, 1.442695
        %v1175 = vpow.pop %v1174
        %v1176 = vmul.f32 %v1123, 1.442695
        %v1177 = vpow.pop %v1176
        %v1178 = vmul.f32 %v1124, 1.442695
        %v1179 = vpow.pop %v1178
        %v1180 = vmul.f32 %v1125, 1.442695
        %v1181 = vpow.pop %v1180
        %v1182 = vmul.f32 %v1126, 1.442695
        %v1183 = vpow.pop %v1182
        %v1184 = vmul.f32 %v1127, 1.442695
        %v1185 = vpow.pop %v1184
        %v1186 = vmul.f32 %v1128, 1.442695
        %v1187 = vpow.pop %v1186
        %v1188 = vmul.f32 %v1129, 1.442695
        %v1189 = vpow.pop %v1188
        %v1190 = vmul.f32 %v1130, 1.442695
        %v1191 = vpow.pop %v1190
        %v1192 = vmul.f32 %v1131, 1.442695
        %v1193 = vpow.pop %v1192
        %v1194 = vmul.f32 %v1132, 1.442695
        %v1195 = vpow.pop %v1194
        %v1196 = vmul.f32 %v1133, 1.442695
        %v1197 = vpow.pop %v1196
        %v1198 = vld [vmem:[#allocation3] sm:$0xff]
        %v1199 = vld [vmem:[#allocation3 + $0x8] sm:$0xff]
        %v1200 = vld [vmem:[#allocation3 + $0x10] sm:$0xff]
        %v1201 = vld [vmem:[#allocation3 + $0x18] sm:$0xff]
        %v1202 = vld [vmem:[#allocation3 + $0x20] sm:$0xff]
        %v1203 = vld [vmem:[#allocation3 + $0x28] sm:$0xff]
        %v1204 = vld [vmem:[#allocation3 + $0x30] sm:$0xff]
        %v1205 = vld [vmem:[#allocation3 + $0x38] sm:$0xff]
        %v1206 = vld [vmem:[#allocation3 + $0x40] sm:$0xff]
        %v1207 = vld [vmem:[#allocation3 + $0x48] sm:$0xff]
        %v1208 = vld [vmem:[#allocation3 + $0x50] sm:$0xff]
        %v1209 = vld [vmem:[#allocation3 + $0x58] sm:$0xff]
        %v1210 = vld [vmem:[#allocation3 + $0x60] sm:$0xff]
        %v1211 = vld [vmem:[#allocation3 + $0x68] sm:$0xff]
        %v1212 = vld [vmem:[#allocation3 + $0x70] sm:$0xff]
        %v1213 = vld [vmem:[#allocation3 + $0x78] sm:$0xff]
        %v1214 = vmul.f32 %v991, %v1198
        %v1215 = vmul.f32 %v993, %v1199
        %v1216 = vmul.f32 %v995, %v1200
        %v1217 = vmul.f32 %v997, %v1201
        %v1218 = vmul.f32 %v999, %v1202
        %v1219 = vmul.f32 %v1001, %v1203
        %v1220 = vmul.f32 %v1003, %v1204
        %v1221 = vmul.f32 %v1005, %v1205
        %v1222 = vmul.f32 %v1007, %v1206
        %v1223 = vmul.f32 %v1009, %v1207
        %v1224 = vmul.f32 %v1011, %v1208
        %v1225 = vmul.f32 %v1013, %v1209
        %v1226 = vmul.f32 %v1015, %v1210
        %v1227 = vmul.f32 %v1017, %v1211
        %v1228 = vmul.f32 %v1019, %v1212
        %v1229 = vmul.f32 %v1021, %v1213
        %v1230 = vadd.f32 %v1135, %v1137
        %1231 = vadd.xlane.f32.xlu0 %v1230
        %v1232 = vpop.xlane.xlu0 %1231
        %v1233 = vadd.f32 %v1139, %v1141
        %1234 = vadd.xlane.f32.xlu0 %v1233
        %v1235 = vpop.xlane.xlu0 %1234
        %v1236 = vadd.f32 %v1143, %v1145
        %1237 = vadd.xlane.f32.xlu0 %v1236
        %v1238 = vpop.xlane.xlu0 %1237
        %v1239 = vadd.f32 %v1147, %v1149
        %1240 = vadd.xlane.f32.xlu0 %v1239
        %v1241 = vpop.xlane.xlu0 %1240
        %v1242 = vadd.f32 %v1151, %v1153
        %1243 = vadd.xlane.f32.xlu0 %v1242
        %v1244 = vpop.xlane.xlu0 %1243
        %v1245 = vadd.f32 %v1155, %v1157
        %1246 = vadd.xlane.f32.xlu0 %v1245
        %v1247 = vpop.xlane.xlu0 %1246
        %v1248 = vadd.f32 %v1159, %v1161
        %1249 = vadd.xlane.f32.xlu0 %v1248
        %v1250 = vpop.xlane.xlu0 %1249
        %v1251 = vadd.f32 %v1163, %v1165
        %1252 = vadd.xlane.f32.xlu0 %v1251
        %v1253 = vpop.xlane.xlu0 %1252
        %v1254 = vadd.f32 %v1167, %v1169
        %1255 = vadd.xlane.f32.xlu0 %v1254
        %v1256 = vpop.xlane.xlu0 %1255
        %v1257 = vadd.f32 %v1171, %v1173
        %1258 = vadd.xlane.f32.xlu0 %v1257
        %v1259 = vpop.xlane.xlu0 %1258
        %v1260 = vadd.f32 %v1175, %v1177
        %1261 = vadd.xlane.f32.xlu0 %v1260
        %v1262 = vpop.xlane.xlu0 %1261
        %v1263 = vadd.f32 %v1179, %v1181
        %1264 = vadd.xlane.f32.xlu0 %v1263
        %v1265 = vpop.xlane.xlu0 %1264
        %v1266 = vadd.f32 %v1183, %v1185
        %1267 = vadd.xlane.f32.xlu0 %v1266
        %v1268 = vpop.xlane.xlu0 %1267
        %v1269 = vadd.f32 %v1187, %v1189
        %1270 = vadd.xlane.f32.xlu0 %v1269
        %v1271 = vpop.xlane.xlu0 %1270
        %v1272 = vadd.f32 %v1191, %v1193
        %1273 = vadd.xlane.f32.xlu0 %v1272
        %v1274 = vpop.xlane.xlu0 %1273
        %v1275 = vadd.f32 %v1195, %v1197
        %1276 = vadd.xlane.f32.xlu0 %v1275
        %v1277 = vpop.xlane.xlu0 %1276
        %v1278 = vadd.f32 %v1214, %v1232
        %v1279 = vadd.f32 %v1215, %v1235
        %v1280 = vadd.f32 %v1216, %v1238
        %v1281 = vadd.f32 %v1217, %v1241
        %v1282 = vadd.f32 %v1218, %v1244
        %v1283 = vadd.f32 %v1219, %v1247
        %v1284 = vadd.f32 %v1220, %v1250
        %v1285 = vadd.f32 %v1221, %v1253
        %v1286 = vadd.f32 %v1222, %v1256
        %v1287 = vadd.f32 %v1223, %v1259
        %v1288 = vadd.f32 %v1224, %v1262
        %v1289 = vadd.f32 %v1225, %v1265
        %v1290 = vadd.f32 %v1226, %v1268
        %v1291 = vadd.f32 %v1227, %v1271
        %v1292 = vadd.f32 %v1228, %v1274
        %v1293 = vadd.f32 %v1229, %v1277
        %vm1294 = vcmask 7168
        %1295 = vst.msk [vmem:[#allocation3] sm:$0xff] %vm1294, %v1278
        %1296 = vst.msk [vmem:[#allocation3 + $0x8] sm:$0xff] %vm1294, %v1279
        %1297 = vst.msk [vmem:[#allocation3 + $0x10] sm:$0xff] %vm1294, %v1280
        %1298 = vst.msk [vmem:[#allocation3 + $0x18] sm:$0xff] %vm1294, %v1281
        %1299 = vst.msk [vmem:[#allocation3 + $0x20] sm:$0xff] %vm1294, %v1282
        %1300 = vst.msk [vmem:[#allocation3 + $0x28] sm:$0xff] %vm1294, %v1283
        %1301 = vst.msk [vmem:[#allocation3 + $0x30] sm:$0xff] %vm1294, %v1284
        %1302 = vst.msk [vmem:[#allocation3 + $0x38] sm:$0xff] %vm1294, %v1285
        %1303 = vst.msk [vmem:[#allocation3 + $0x40] sm:$0xff] %vm1294, %v1286
        %1304 = vst.msk [vmem:[#allocation3 + $0x48] sm:$0xff] %vm1294, %v1287
        %1305 = vst.msk [vmem:[#allocation3 + $0x50] sm:$0xff] %vm1294, %v1288
        %1306 = vst.msk [vmem:[#allocation3 + $0x58] sm:$0xff] %vm1294, %v1289
        %1307 = vst.msk [vmem:[#allocation3 + $0x60] sm:$0xff] %vm1294, %v1290
        %1308 = vst.msk [vmem:[#allocation3 + $0x68] sm:$0xff] %vm1294, %v1291
        %1309 = vst.msk [vmem:[#allocation3 + $0x70] sm:$0xff] %vm1294, %v1292
        %1310 = vst.msk [vmem:[#allocation3 + $0x78] sm:$0xff] %vm1294, %v1293
        %v1311 = vld [vmem:[#allocation4] sm:$0xff]
        %v1312 = vld [vmem:[#allocation4 + $0x8] sm:$0xff]
        %v1313 = vld [vmem:[#allocation4 + $0x10] sm:$0xff]
        %v1314 = vld [vmem:[#allocation4 + $0x18] sm:$0xff]
        %v1315 = vld [vmem:[#allocation4 + $0x20] sm:$0xff]
        %v1316 = vld [vmem:[#allocation4 + $0x28] sm:$0xff]
        %v1317 = vld [vmem:[#allocation4 + $0x30] sm:$0xff]
        %v1318 = vld [vmem:[#allocation4 + $0x38] sm:$0xff]
        %v1319 = vld [vmem:[#allocation4 + $0x40] sm:$0xff]
        %v1320 = vld [vmem:[#allocation4 + $0x48] sm:$0xff]
        %v1321 = vld [vmem:[#allocation4 + $0x50] sm:$0xff]
        %v1322 = vld [vmem:[#allocation4 + $0x58] sm:$0xff]
        %v1323 = vld [vmem:[#allocation4 + $0x60] sm:$0xff]
        %v1324 = vld [vmem:[#allocation4 + $0x68] sm:$0xff]
        %v1325 = vld [vmem:[#allocation4 + $0x70] sm:$0xff]
        %v1326 = vld [vmem:[#allocation4 + $0x78] sm:$0xff]
        %1328 = vset.pattern.permute.xlu0 0
        %1329 = vperm.xlu0 %1328, %v991
        %v1330 = vpop.permute.xlu0 %1329
        %1333 = vset.pattern.permute.xlu0 0
        %1334 = vperm.xlu0 %1333, %v993
        %v1335 = vpop.permute.xlu0 %1334
        %1338 = vset.pattern.permute.xlu0 0
        %1339 = vperm.xlu0 %1338, %v995
        %v1340 = vpop.permute.xlu0 %1339
        %1343 = vset.pattern.permute.xlu0 0
        %1344 = vperm.xlu0 %1343, %v997
        %v1345 = vpop.permute.xlu0 %1344
        %1348 = vset.pattern.permute.xlu0 0
        %1349 = vperm.xlu0 %1348, %v999
        %v1350 = vpop.permute.xlu0 %1349
        %1353 = vset.pattern.permute.xlu0 0
        %1354 = vperm.xlu0 %1353, %v1001
        %v1355 = vpop.permute.xlu0 %1354
        %1358 = vset.pattern.permute.xlu0 0
        %1359 = vperm.xlu0 %1358, %v1003
        %v1360 = vpop.permute.xlu0 %1359
        %1363 = vset.pattern.permute.xlu0 0
        %1364 = vperm.xlu0 %1363, %v1005
        %v1365 = vpop.permute.xlu0 %1364
        %1368 = vset.pattern.permute.xlu0 0
        %1369 = vperm.xlu0 %1368, %v1007
        %v1370 = vpop.permute.xlu0 %1369
        %1373 = vset.pattern.permute.xlu0 0
        %1374 = vperm.xlu0 %1373, %v1009
        %v1375 = vpop.permute.xlu0 %1374
        %1378 = vset.pattern.permute.xlu0 0
        %1379 = vperm.xlu0 %1378, %v1011
        %v1380 = vpop.permute.xlu0 %1379
        %1383 = vset.pattern.permute.xlu0 0
        %1384 = vperm.xlu0 %1383, %v1013
        %v1385 = vpop.permute.xlu0 %1384
        %1388 = vset.pattern.permute.xlu0 0
        %1389 = vperm.xlu0 %1388, %v1015
        %v1390 = vpop.permute.xlu0 %1389
        %1393 = vset.pattern.permute.xlu0 0
        %1394 = vperm.xlu0 %1393, %v1017
        %v1395 = vpop.permute.xlu0 %1394
        %1398 = vset.pattern.permute.xlu0 0
        %1399 = vperm.xlu0 %1398, %v1019
        %v1400 = vpop.permute.xlu0 %1399
        %1403 = vset.pattern.permute.xlu0 0
        %1404 = vperm.xlu0 %1403, %v1021
        %v1405 = vpop.permute.xlu0 %1404
        %v1407 = vmul.f32 %v1330, %v1311
        %v1408 = vmul.f32 %v1335, %v1312
        %v1409 = vmul.f32 %v1340, %v1313
        %v1410 = vmul.f32 %v1345, %v1314
        %v1411 = vmul.f32 %v1350, %v1315
        %v1412 = vmul.f32 %v1355, %v1316
        %v1413 = vmul.f32 %v1360, %v1317
        %v1414 = vmul.f32 %v1365, %v1318
        %v1415 = vmul.f32 %v1370, %v1319
        %v1416 = vmul.f32 %v1375, %v1320
        %v1417 = vmul.f32 %v1380, %v1321
        %v1418 = vmul.f32 %v1385, %v1322
        %v1419 = vmul.f32 %v1390, %v1323
        %v1420 = vmul.f32 %v1395, %v1324
        %v1421 = vmul.f32 %v1400, %v1325
        %v1422 = vmul.f32 %v1405, %v1326
        %v1423 = vpack.c.bf16 %v1139, %v1135
        %v1424 = vpack.c.bf16 %v1141, %v1137
        %v1425 = vpack.c.bf16 %v1147, %v1143
        %v1426 = vpack.c.bf16 %v1149, %v1145
        %v1427 = vpack.c.bf16 %v1155, %v1151
        %v1428 = vpack.c.bf16 %v1157, %v1153
        %v1429 = vpack.c.bf16 %v1163, %v1159
        %v1430 = vpack.c.bf16 %v1165, %v1161
        %v1431 = vpack.c.bf16 %v1171, %v1167
        %v1432 = vpack.c.bf16 %v1173, %v1169
        %v1433 = vpack.c.bf16 %v1179, %v1175
        %v1434 = vpack.c.bf16 %v1181, %v1177
        %v1435 = vpack.c.bf16 %v1187, %v1183
        %v1436 = vpack.c.bf16 %v1189, %v1185
        %v1437 = vpack.c.bf16 %v1195, %v1191
        %v1438 = vpack.c.bf16 %v1197, %v1193
        %v1439 = vld [vmem:[%s281] sm:$0xf]
        %v1440 = vld [vmem:[%s281 + $0x4] sm:$0xf]
        %v1441 = vld [vmem:[%s281 + $0x8] sm:$0xf]
        %v1442 = vld [vmem:[%s281 + $0xc] sm:$0xf]
        %v1443 = vld [vmem:[%s281 + $0x10] sm:$0xf]
        %v1444 = vld [vmem:[%s281 + $0x14] sm:$0xf]
        %v1445 = vld [vmem:[%s281 + $0x18] sm:$0xf]
        %v1446 = vld [vmem:[%s281 + $0x1c] sm:$0xf]
        %v1447 = vld [vmem:[%s281 + $0x20] sm:$0xf]
        %v1448 = vld [vmem:[%s281 + $0x24] sm:$0xf]
        %v1449 = vld [vmem:[%s281 + $0x28] sm:$0xf]
        %v1450 = vld [vmem:[%s281 + $0x2c] sm:$0xf]
        %v1451 = vld [vmem:[%s281 + $0x30] sm:$0xf]
        %v1452 = vld [vmem:[%s281 + $0x34] sm:$0xf]
        %v1453 = vld [vmem:[%s281 + $0x38] sm:$0xf]
        %v1454 = vld [vmem:[%s281 + $0x3c] sm:$0xf]
        %v1455 = vld [vmem:[%s281 + $0x40] sm:$0xf]
        %v1456 = vld [vmem:[%s281 + $0x44] sm:$0xf]
        %v1457 = vld [vmem:[%s281 + $0x48] sm:$0xf]
        %v1458 = vld [vmem:[%s281 + $0x4c] sm:$0xf]
        %v1459 = vld [vmem:[%s281 + $0x50] sm:$0xf]
        %v1460 = vld [vmem:[%s281 + $0x54] sm:$0xf]
        %v1461 = vld [vmem:[%s281 + $0x58] sm:$0xf]
        %v1462 = vld [vmem:[%s281 + $0x5c] sm:$0xf]
        %v1463 = vld [vmem:[%s281 + $0x60] sm:$0xf]
        %v1464 = vld [vmem:[%s281 + $0x64] sm:$0xf]
        %v1465 = vld [vmem:[%s281 + $0x68] sm:$0xf]
        %v1466 = vld [vmem:[%s281 + $0x6c] sm:$0xf]
        %v1467 = vld [vmem:[%s281 + $0x70] sm:$0xf]
        %v1468 = vld [vmem:[%s281 + $0x74] sm:$0xf]
        %v1469 = vld [vmem:[%s281 + $0x78] sm:$0xf]
        %v1470 = vld [vmem:[%s281 + $0x7c] sm:$0xf]
        %v1503 = vunpack.c.l.b16 %v1439
        %v1504 = vunpack.c.l.b16 %v1440
        %v1505 = vunpack.c.l.b16 %v1441
        %v1506 = vunpack.c.l.b16 %v1442
        %v1507 = vunpack.c.l.b16 %v1443
        %v1508 = vunpack.c.l.b16 %v1444
        %v1509 = vunpack.c.l.b16 %v1445
        %v1510 = vunpack.c.l.b16 %v1446
        %v1511 = vunpack.c.l.b16 %v1447
        %v1512 = vunpack.c.l.b16 %v1448
        %v1513 = vunpack.c.l.b16 %v1449
        %v1514 = vunpack.c.l.b16 %v1450
        %v1515 = vunpack.c.l.b16 %v1451
        %v1516 = vunpack.c.l.b16 %v1452
        %v1517 = vunpack.c.l.b16 %v1453
        %v1518 = vunpack.c.l.b16 %v1454
        %v1519 = vunpack.c.l.b16 %v1455
        %v1520 = vunpack.c.l.b16 %v1456
        %v1521 = vunpack.c.l.b16 %v1457
        %v1522 = vunpack.c.l.b16 %v1458
        %v1523 = vunpack.c.l.b16 %v1459
        %v1524 = vunpack.c.l.b16 %v1460
        %v1525 = vunpack.c.l.b16 %v1461
        %v1526 = vunpack.c.l.b16 %v1462
        %v1527 = vunpack.c.l.b16 %v1463
        %v1528 = vunpack.c.l.b16 %v1464
        %v1529 = vunpack.c.l.b16 %v1465
        %v1530 = vunpack.c.l.b16 %v1466
        %v1531 = vunpack.c.l.b16 %v1467
        %v1532 = vunpack.c.l.b16 %v1468
        %v1533 = vunpack.c.l.b16 %v1469
        %v1534 = vunpack.c.l.b16 %v1470
        %v1535 = vpack.c.b16 %v1504, %v1503
        %v1536 = vpack.c.b16 %v1506, %v1505
        %v1537 = vpack.c.b16 %v1508, %v1507
        %v1538 = vpack.c.b16 %v1510, %v1509
        %v1539 = vpack.c.b16 %v1512, %v1511
        %v1540 = vpack.c.b16 %v1514, %v1513
        %v1541 = vpack.c.b16 %v1516, %v1515
        %v1542 = vpack.c.b16 %v1518, %v1517
        %v1543 = vpack.c.b16 %v1520, %v1519
        %v1544 = vpack.c.b16 %v1522, %v1521
        %v1545 = vpack.c.b16 %v1524, %v1523
        %v1546 = vpack.c.b16 %v1526, %v1525
        %v1547 = vpack.c.b16 %v1528, %v1527
        %v1548 = vpack.c.b16 %v1530, %v1529
        %v1549 = vpack.c.b16 %v1532, %v1531
        %v1550 = vpack.c.b16 %v1534, %v1533
        %1567 = vmatpush.bf16.msra.mxu0 %v1542
        %1568 = vmatpush.bf16.msra.mxu0 %v1541
        %1569 = vmatpush.bf16.msra.mxu0 %v1540
        %1570 = vmatpush.bf16.msra.mxu0 %v1539
        %1571 = vmatpush.bf16.msra.mxu0 %v1538
        %1572 = vmatpush.bf16.msra.mxu0 %v1537
        %1573 = vmatpush.bf16.msra.mxu0 %v1536
        %1574 = vmatpush.bf16.msra.mxu0 %v1535
        %1575 = vmatmul.bf16.gmra.mxu0 %v1423
        %v1576 = vpop.f32.mrf.mxu0
        %v1577 = vadd.f32 0.0, %v1576
        %v1578 = vpop.f32.mrf.mxu0
        %v1579 = vadd.f32 0.0, %v1578
        %1580 = vmatmul.bf16.gmra.mxu0 %v1425
        %v1581 = vpop.f32.mrf.mxu0
        %v1582 = vadd.f32 0.0, %v1581
        %v1583 = vpop.f32.mrf.mxu0
        %v1584 = vadd.f32 0.0, %v1583
        %1585 = vmatmul.bf16.gmra.mxu0 %v1427
        %v1586 = vpop.f32.mrf.mxu0
        %v1587 = vadd.f32 0.0, %v1586
        %v1588 = vpop.f32.mrf.mxu0
        %v1589 = vadd.f32 0.0, %v1588
        %1590 = vmatmul.bf16.gmra.mxu0 %v1429
        %v1591 = vpop.f32.mrf.mxu0
        %v1592 = vadd.f32 0.0, %v1591
        %v1593 = vpop.f32.mrf.mxu0
        %v1594 = vadd.f32 0.0, %v1593
        %1595 = vmatmul.bf16.gmra.mxu0 %v1431
        %v1596 = vpop.f32.mrf.mxu0
        %v1597 = vadd.f32 0.0, %v1596
        %v1598 = vpop.f32.mrf.mxu0
        %v1599 = vadd.f32 0.0, %v1598
        %1600 = vmatmul.bf16.gmra.mxu0 %v1433
        %v1601 = vpop.f32.mrf.mxu0
        %v1602 = vadd.f32 0.0, %v1601
        %v1603 = vpop.f32.mrf.mxu0
        %v1604 = vadd.f32 0.0, %v1603
        %1605 = vmatmul.bf16.gmra.mxu0 %v1435
        %v1606 = vpop.f32.mrf.mxu0
        %v1607 = vadd.f32 0.0, %v1606
        %v1608 = vpop.f32.mrf.mxu0
        %v1609 = vadd.f32 0.0, %v1608
        %1610 = vmatmul.bf16.gmra.mxu0 %v1437
        %v1611 = vpop.f32.mrf.mxu0
        %v1612 = vadd.f32 0.0, %v1611
        %v1613 = vpop.f32.mrf.mxu0
        %v1614 = vadd.f32 0.0, %v1613
        %1615 = vdwg.mxu0
        %1616 = vmatpush.bf16.msra.mxu0 %v1550
        %1617 = vmatpush.bf16.msra.mxu0 %v1549
        %1618 = vmatpush.bf16.msra.mxu0 %v1548
        %1619 = vmatpush.bf16.msra.mxu0 %v1547
        %1620 = vmatpush.bf16.msra.mxu0 %v1546
        %1621 = vmatpush.bf16.msra.mxu0 %v1545
        %1622 = vmatpush.bf16.msra.mxu0 %v1544
        %1623 = vmatpush.bf16.msra.mxu0 %v1543
        %1624 = vmatmul.bf16.gmra.mxu0 %v1424
        %v1625 = vpop.f32.mrf.mxu0
        %v1626 = vadd.f32 %v1577, %v1625
        %v1627 = vpop.f32.mrf.mxu0
        %v1628 = vadd.f32 %v1579, %v1627
        %1629 = vmatmul.bf16.gmra.mxu0 %v1426
        %v1630 = vpop.f32.mrf.mxu0
        %v1631 = vadd.f32 %v1582, %v1630
        %v1632 = vpop.f32.mrf.mxu0
        %v1633 = vadd.f32 %v1584, %v1632
        %1634 = vmatmul.bf16.gmra.mxu0 %v1428
        %v1635 = vpop.f32.mrf.mxu0
        %v1636 = vadd.f32 %v1587, %v1635
        %v1637 = vpop.f32.mrf.mxu0
        %v1638 = vadd.f32 %v1589, %v1637
        %1639 = vmatmul.bf16.gmra.mxu0 %v1430
        %v1640 = vpop.f32.mrf.mxu0
        %v1641 = vadd.f32 %v1592, %v1640
        %v1642 = vpop.f32.mrf.mxu0
        %v1643 = vadd.f32 %v1594, %v1642
        %1644 = vmatmul.bf16.gmra.mxu0 %v1432
        %v1645 = vpop.f32.mrf.mxu0
        %v1646 = vadd.f32 %v1597, %v1645
        %v1647 = vpop.f32.mrf.mxu0
        %v1648 = vadd.f32 %v1599, %v1647
        %1649 = vmatmul.bf16.gmra.mxu0 %v1434
        %v1650 = vpop.f32.mrf.mxu0
        %v1651 = vadd.f32 %v1602, %v1650
        %v1652 = vpop.f32.mrf.mxu0
        %v1653 = vadd.f32 %v1604, %v1652
        %1654 = vmatmul.bf16.gmra.mxu0 %v1436
        %v1655 = vpop.f32.mrf.mxu0
        %v1656 = vadd.f32 %v1607, %v1655
        %v1657 = vpop.f32.mrf.mxu0
        %v1658 = vadd.f32 %v1609, %v1657
        %1659 = vmatmul.bf16.gmra.mxu0 %v1438
        %v1660 = vpop.f32.mrf.mxu0
        %v1661 = vadd.f32 %v1612, %v1660
        %v1662 = vpop.f32.mrf.mxu0
        %v1663 = vadd.f32 %v1614, %v1662
        %1664 = vdwg.mxu0
        %v1665 = vadd.f32 %v1407, %v1626
        %v1666 = vadd.f32 %v1408, %v1628
        %v1667 = vadd.f32 %v1409, %v1631
        %v1668 = vadd.f32 %v1410, %v1633
        %v1669 = vadd.f32 %v1411, %v1636
        %v1670 = vadd.f32 %v1412, %v1638
        %v1671 = vadd.f32 %v1413, %v1641
        %v1672 = vadd.f32 %v1414, %v1643
        %v1673 = vadd.f32 %v1415, %v1646
        %v1674 = vadd.f32 %v1416, %v1648
        %v1675 = vadd.f32 %v1417, %v1651
        %v1676 = vadd.f32 %v1418, %v1653
        %v1677 = vadd.f32 %v1419, %v1656
        %v1678 = vadd.f32 %v1420, %v1658
        %v1679 = vadd.f32 %v1421, %v1661
        %v1680 = vadd.f32 %v1422, %v1663
        %vm1681 = vcmask 261120
        %1682 = vst.msk [vmem:[#allocation4] sm:$0xff] %vm1681, %v1665
        %1683 = vst.msk [vmem:[#allocation4 + $0x8] sm:$0xff] %vm1681, %v1666
        %1684 = vst.msk [vmem:[#allocation4 + $0x10] sm:$0xff] %vm1681, %v1667
        %1685 = vst.msk [vmem:[#allocation4 + $0x18] sm:$0xff] %vm1681, %v1668
        %1686 = vst.msk [vmem:[#allocation4 + $0x20] sm:$0xff] %vm1681, %v1669
        %1687 = vst.msk [vmem:[#allocation4 + $0x28] sm:$0xff] %vm1681, %v1670
        %1688 = vst.msk [vmem:[#allocation4 + $0x30] sm:$0xff] %vm1681, %v1671
        %1689 = vst.msk [vmem:[#allocation4 + $0x38] sm:$0xff] %vm1681, %v1672
        %1690 = vst.msk [vmem:[#allocation4 + $0x40] sm:$0xff] %vm1681, %v1673
        %1691 = vst.msk [vmem:[#allocation4 + $0x48] sm:$0xff] %vm1681, %v1674
        %1692 = vst.msk [vmem:[#allocation4 + $0x50] sm:$0xff] %vm1681, %v1675
        %1693 = vst.msk [vmem:[#allocation4 + $0x58] sm:$0xff] %vm1681, %v1676
        %1694 = vst.msk [vmem:[#allocation4 + $0x60] sm:$0xff] %vm1681, %v1677
        %1695 = vst.msk [vmem:[#allocation4 + $0x68] sm:$0xff] %vm1681, %v1678
        %1696 = vst.msk [vmem:[#allocation4 + $0x70] sm:$0xff] %vm1681, %v1679
        %1697 = vst.msk [vmem:[#allocation4 + $0x78] sm:$0xff] %vm1681, %v1680
        %1698 = vst.msk [vmem:[#allocation2] sm:$0xff] %vm1294, %v958
        %1699 = vst.msk [vmem:[#allocation2 + $0x8] sm:$0xff] %vm1294, %v959
        %1700 = vst.msk [vmem:[#allocation2 + $0x10] sm:$0xff] %vm1294, %v960
        %1701 = vst.msk [vmem:[#allocation2 + $0x18] sm:$0xff] %vm1294, %v961
        %1702 = vst.msk [vmem:[#allocation2 + $0x20] sm:$0xff] %vm1294, %v962
        %1703 = vst.msk [vmem:[#allocation2 + $0x28] sm:$0xff] %vm1294, %v963
        %1704 = vst.msk [vmem:[#allocation2 + $0x30] sm:$0xff] %vm1294, %v964
        %1705 = vst.msk [vmem:[#allocation2 + $0x38] sm:$0xff] %vm1294, %v965
        %1706 = vst.msk [vmem:[#allocation2 + $0x40] sm:$0xff] %vm1294, %v966
        %1707 = vst.msk [vmem:[#allocation2 + $0x48] sm:$0xff] %vm1294, %v967
        %1708 = vst.msk [vmem:[#allocation2 + $0x50] sm:$0xff] %vm1294, %v968
        %1709 = vst.msk [vmem:[#allocation2 + $0x58] sm:$0xff] %vm1294, %v969
        %1710 = vst.msk [vmem:[#allocation2 + $0x60] sm:$0xff] %vm1294, %v970
        %1711 = vst.msk [vmem:[#allocation2 + $0x68] sm:$0xff] %vm1294, %v971
        %1712 = vst.msk [vmem:[#allocation2 + $0x70] sm:$0xff] %vm1294, %v972
        %1713 = vst.msk [vmem:[#allocation2 + $0x78] sm:$0xff] %vm1294, %v973
        %1714 = vset.pattern.permute.xlu0 1
        %1715 = vperm.xlu0 %1714, %v630
        %v1716 = vpop.permute.xlu0 %1715
        %1718 = vset.pattern.permute.xlu0 1
        %1719 = vperm.xlu0 %1718, %v631
        %v1720 = vpop.permute.xlu0 %1719
        %1722 = vset.pattern.permute.xlu0 1
        %1723 = vperm.xlu0 %1722, %v632
        %v1724 = vpop.permute.xlu0 %1723
        %1726 = vset.pattern.permute.xlu0 1
        %1727 = vperm.xlu0 %1726, %v633
        %v1728 = vpop.permute.xlu0 %1727
        %1730 = vset.pattern.permute.xlu0 1
        %1731 = vperm.xlu0 %1730, %v634
        %v1732 = vpop.permute.xlu0 %1731
        %1734 = vset.pattern.permute.xlu0 1
        %1735 = vperm.xlu0 %1734, %v635
        %v1736 = vpop.permute.xlu0 %1735
        %1738 = vset.pattern.permute.xlu0 1
        %1739 = vperm.xlu0 %1738, %v636
        %v1740 = vpop.permute.xlu0 %1739
        %1742 = vset.pattern.permute.xlu0 1
        %1743 = vperm.xlu0 %1742, %v637
        %v1744 = vpop.permute.xlu0 %1743
        %1746 = vset.pattern.permute.xlu0 1
        %1747 = vperm.xlu0 %1746, %v638
        %v1748 = vpop.permute.xlu0 %1747
        %1750 = vset.pattern.permute.xlu0 1
        %1751 = vperm.xlu0 %1750, %v639
        %v1752 = vpop.permute.xlu0 %1751
        %1754 = vset.pattern.permute.xlu0 1
        %1755 = vperm.xlu0 %1754, %v640
        %v1756 = vpop.permute.xlu0 %1755
        %1758 = vset.pattern.permute.xlu0 1
        %1759 = vperm.xlu0 %1758, %v641
        %v1760 = vpop.permute.xlu0 %1759
        %1762 = vset.pattern.permute.xlu0 1
        %1763 = vperm.xlu0 %1762, %v642
        %v1764 = vpop.permute.xlu0 %1763
        %1766 = vset.pattern.permute.xlu0 1
        %1767 = vperm.xlu0 %1766, %v643
        %v1768 = vpop.permute.xlu0 %1767
        %1770 = vset.pattern.permute.xlu0 1
        %1771 = vperm.xlu0 %1770, %v644
        %v1772 = vpop.permute.xlu0 %1771
        %1774 = vset.pattern.permute.xlu0 1
        %1775 = vperm.xlu0 %1774, %v645
        %v1776 = vpop.permute.xlu0 %1775
        %v1778 = vperm.slane %v646, 1
        %v1779 = vperm.slane %v646, 5
        %v1782 = vperm.slane %v1778, 1
        %v1783 = vperm.slane %v1779, 1
        %v1784 = vadd.f32 %v1716, %v1782
        %v1785 = vadd.f32 %v1716, %v1783
        %v1786 = vadd.f32 %v1720, %v1782
        %v1787 = vadd.f32 %v1720, %v1783
        %v1788 = vadd.f32 %v1724, %v1782
        %v1789 = vadd.f32 %v1724, %v1783
        %v1790 = vadd.f32 %v1728, %v1782
        %v1791 = vadd.f32 %v1728, %v1783
        %v1792 = vadd.f32 %v1732, %v1782
        %v1793 = vadd.f32 %v1732, %v1783
        %v1794 = vadd.f32 %v1736, %v1782
        %v1795 = vadd.f32 %v1736, %v1783
        %v1796 = vadd.f32 %v1740, %v1782
        %v1797 = vadd.f32 %v1740, %v1783
        %v1798 = vadd.f32 %v1744, %v1782
        %v1799 = vadd.f32 %v1744, %v1783
        %v1800 = vadd.f32 %v1748, %v1782
        %v1801 = vadd.f32 %v1748, %v1783
        %v1802 = vadd.f32 %v1752, %v1782
        %v1803 = vadd.f32 %v1752, %v1783
        %v1804 = vadd.f32 %v1756, %v1782
        %v1805 = vadd.f32 %v1756, %v1783
        %v1806 = vadd.f32 %v1760, %v1782
        %v1807 = vadd.f32 %v1760, %v1783
        %v1808 = vadd.f32 %v1764, %v1782
        %v1809 = vadd.f32 %v1764, %v1783
        %v1810 = vadd.f32 %v1768, %v1782
        %v1811 = vadd.f32 %v1768, %v1783
        %v1812 = vadd.f32 %v1772, %v1782
        %v1813 = vadd.f32 %v1772, %v1783
        %v1814 = vadd.f32 %v1776, %v1782
        %v1815 = vadd.f32 %v1776, %v1783
        %vm1816 = vcmp.gt.f32.partialorder %v1784, 0.0
        %vm1817 = vcmp.gt.f32.partialorder %v1785, 0.0
        %vm1818 = vcmp.gt.f32.partialorder %v1786, 0.0
        %vm1819 = vcmp.gt.f32.partialorder %v1787, 0.0
        %vm1820 = vcmp.gt.f32.partialorder %v1788, 0.0
        %vm1821 = vcmp.gt.f32.partialorder %v1789, 0.0
        %vm1822 = vcmp.gt.f32.partialorder %v1790, 0.0
        %vm1823 = vcmp.gt.f32.partialorder %v1791, 0.0
        %vm1824 = vcmp.gt.f32.partialorder %v1792, 0.0
        %vm1825 = vcmp.gt.f32.partialorder %v1793, 0.0
        %vm1826 = vcmp.gt.f32.partialorder %v1794, 0.0
        %vm1827 = vcmp.gt.f32.partialorder %v1795, 0.0
        %vm1828 = vcmp.gt.f32.partialorder %v1796, 0.0
        %vm1829 = vcmp.gt.f32.partialorder %v1797, 0.0
        %vm1830 = vcmp.gt.f32.partialorder %v1798, 0.0
        %vm1831 = vcmp.gt.f32.partialorder %v1799, 0.0
        %vm1832 = vcmp.gt.f32.partialorder %v1800, 0.0
        %vm1833 = vcmp.gt.f32.partialorder %v1801, 0.0
        %vm1834 = vcmp.gt.f32.partialorder %v1802, 0.0
        %vm1835 = vcmp.gt.f32.partialorder %v1803, 0.0
        %vm1836 = vcmp.gt.f32.partialorder %v1804, 0.0
        %vm1837 = vcmp.gt.f32.partialorder %v1805, 0.0
        %vm1838 = vcmp.gt.f32.partialorder %v1806, 0.0
        %vm1839 = vcmp.gt.f32.partialorder %v1807, 0.0
        %vm1840 = vcmp.gt.f32.partialorder %v1808, 0.0
        %vm1841 = vcmp.gt.f32.partialorder %v1809, 0.0
        %vm1842 = vcmp.gt.f32.partialorder %v1810, 0.0
        %vm1843 = vcmp.gt.f32.partialorder %v1811, 0.0
        %vm1844 = vcmp.gt.f32.partialorder %v1812, 0.0
        %vm1845 = vcmp.gt.f32.partialorder %v1813, 0.0
        %vm1846 = vcmp.gt.f32.partialorder %v1814, 0.0
        %vm1847 = vcmp.gt.f32.partialorder %v1815, 0.0
        %v1848 = vmul.f32 %v1784, 0.01
        %v1849 = vmul.f32 %v1785, 0.01
        %v1850 = vmul.f32 %v1786, 0.01
        %v1851 = vmul.f32 %v1787, 0.01
        %v1852 = vmul.f32 %v1788, 0.01
        %v1853 = vmul.f32 %v1789, 0.01
        %v1854 = vmul.f32 %v1790, 0.01
        %v1855 = vmul.f32 %v1791, 0.01
        %v1856 = vmul.f32 %v1792, 0.01
        %v1857 = vmul.f32 %v1793, 0.01
        %v1858 = vmul.f32 %v1794, 0.01
        %v1859 = vmul.f32 %v1795, 0.01
        %v1860 = vmul.f32 %v1796, 0.01
        %v1861 = vmul.f32 %v1797, 0.01
        %v1862 = vmul.f32 %v1798, 0.01
        %v1863 = vmul.f32 %v1799, 0.01
        %v1864 = vmul.f32 %v1800, 0.01
        %v1865 = vmul.f32 %v1801, 0.01
        %v1866 = vmul.f32 %v1802, 0.01
        %v1867 = vmul.f32 %v1803, 0.01
        %v1868 = vmul.f32 %v1804, 0.01
        %v1869 = vmul.f32 %v1805, 0.01
        %v1870 = vmul.f32 %v1806, 0.01
        %v1871 = vmul.f32 %v1807, 0.01
        %v1872 = vmul.f32 %v1808, 0.01
        %v1873 = vmul.f32 %v1809, 0.01
        %v1874 = vmul.f32 %v1810, 0.01
        %v1875 = vmul.f32 %v1811, 0.01
        %v1876 = vmul.f32 %v1812, 0.01
        %v1877 = vmul.f32 %v1813, 0.01
        %v1878 = vmul.f32 %v1814, 0.01
        %v1879 = vmul.f32 %v1815, 0.01
        %v1880 = vsel %vm1816, %v1784, %v1848
        %v1881 = vsel %vm1817, %v1785, %v1849
        %v1882 = vsel %vm1818, %v1786, %v1850
        %v1883 = vsel %vm1819, %v1787, %v1851
        %v1884 = vsel %vm1820, %v1788, %v1852
        %v1885 = vsel %vm1821, %v1789, %v1853
        %v1886 = vsel %vm1822, %v1790, %v1854
        %v1887 = vsel %vm1823, %v1791, %v1855
        %v1888 = vsel %vm1824, %v1792, %v1856
        %v1889 = vsel %vm1825, %v1793, %v1857
        %v1890 = vsel %vm1826, %v1794, %v1858
        %v1891 = vsel %vm1827, %v1795, %v1859
        %v1892 = vsel %vm1828, %v1796, %v1860
        %v1893 = vsel %vm1829, %v1797, %v1861
        %v1894 = vsel %vm1830, %v1798, %v1862
        %v1895 = vsel %vm1831, %v1799, %v1863
        %v1896 = vsel %vm1832, %v1800, %v1864
        %v1897 = vsel %vm1833, %v1801, %v1865
        %v1898 = vsel %vm1834, %v1802, %v1866
        %v1899 = vsel %vm1835, %v1803, %v1867
        %v1900 = vsel %vm1836, %v1804, %v1868
        %v1901 = vsel %vm1837, %v1805, %v1869
        %v1902 = vsel %vm1838, %v1806, %v1870
        %v1903 = vsel %vm1839, %v1807, %v1871
        %v1904 = vsel %vm1840, %v1808, %v1872
        %v1905 = vsel %vm1841, %v1809, %v1873
        %v1906 = vsel %vm1842, %v1810, %v1874
        %v1907 = vsel %vm1843, %v1811, %v1875
        %v1908 = vsel %vm1844, %v1812, %v1876
        %v1909 = vsel %vm1845, %v1813, %v1877
        %v1910 = vsel %vm1846, %v1814, %v1878
        %v1911 = vsel %vm1847, %v1815, %v1879
        %v1912 = vadd.f32 %v1880, %v598
        %v1913 = vadd.f32 %v1881, %v599
        %v1914 = vadd.f32 %v1882, %v600
        %v1915 = vadd.f32 %v1883, %v601
        %v1916 = vadd.f32 %v1884, %v602
        %v1917 = vadd.f32 %v1885, %v603
        %v1918 = vadd.f32 %v1886, %v604
        %v1919 = vadd.f32 %v1887, %v605
        %v1920 = vadd.f32 %v1888, %v606
        %v1921 = vadd.f32 %v1889, %v607
        %v1922 = vadd.f32 %v1890, %v608
        %v1923 = vadd.f32 %v1891, %v609
        %v1924 = vadd.f32 %v1892, %v610
        %v1925 = vadd.f32 %v1893, %v611
        %v1926 = vadd.f32 %v1894, %v612
        %v1927 = vadd.f32 %v1895, %v613
        %v1928 = vadd.f32 %v1896, %v614
        %v1929 = vadd.f32 %v1897, %v615
        %v1930 = vadd.f32 %v1898, %v616
        %v1931 = vadd.f32 %v1899, %v617
        %v1932 = vadd.f32 %v1900, %v618
        %v1933 = vadd.f32 %v1901, %v619
        %v1934 = vadd.f32 %v1902, %v620
        %v1935 = vadd.f32 %v1903, %v621
        %v1936 = vadd.f32 %v1904, %v622
        %v1937 = vadd.f32 %v1905, %v623
        %v1938 = vadd.f32 %v1906, %v624
        %v1939 = vadd.f32 %v1907, %v625
        %v1940 = vadd.f32 %v1908, %v626
        %v1941 = vadd.f32 %v1909, %v627
        %v1942 = vadd.f32 %v1910, %v628
        %v1943 = vadd.f32 %v1911, %v629
        %s1944 = scalar_lea.vmem [#allocation2], 128
        %v1945 = vld [vmem:[%s1944] sm:$0xff]
        %v1946 = vld [vmem:[%s1944 + $0x8] sm:$0xff]
        %v1947 = vld [vmem:[%s1944 + $0x10] sm:$0xff]
        %v1948 = vld [vmem:[%s1944 + $0x18] sm:$0xff]
        %v1949 = vld [vmem:[%s1944 + $0x20] sm:$0xff]
        %v1950 = vld [vmem:[%s1944 + $0x28] sm:$0xff]
        %v1951 = vld [vmem:[%s1944 + $0x30] sm:$0xff]
        %v1952 = vld [vmem:[%s1944 + $0x38] sm:$0xff]
        %v1953 = vld [vmem:[%s1944 + $0x40] sm:$0xff]
        %v1954 = vld [vmem:[%s1944 + $0x48] sm:$0xff]
        %v1955 = vld [vmem:[%s1944 + $0x50] sm:$0xff]
        %v1956 = vld [vmem:[%s1944 + $0x58] sm:$0xff]
        %v1957 = vld [vmem:[%s1944 + $0x60] sm:$0xff]
        %v1958 = vld [vmem:[%s1944 + $0x68] sm:$0xff]
        %v1959 = vld [vmem:[%s1944 + $0x70] sm:$0xff]
        %v1960 = vld [vmem:[%s1944 + $0x78] sm:$0xff]
        %v1961 = vmax.f32 %v1912, %v1913
        %1962 = vmax.xlane.f32.xlu0 %v1961
        %v1963 = vpop.xlane.xlu0 %1962
        %v1964 = vmax.f32 %v1914, %v1915
        %1965 = vmax.xlane.f32.xlu0 %v1964
        %v1966 = vpop.xlane.xlu0 %1965
        %v1967 = vmax.f32 %v1916, %v1917
        %1968 = vmax.xlane.f32.xlu0 %v1967
        %v1969 = vpop.xlane.xlu0 %1968
        %v1970 = vmax.f32 %v1918, %v1919
        %1971 = vmax.xlane.f32.xlu0 %v1970
        %v1972 = vpop.xlane.xlu0 %1971
        %v1973 = vmax.f32 %v1920, %v1921
        %1974 = vmax.xlane.f32.xlu0 %v1973
        %v1975 = vpop.xlane.xlu0 %1974
        %v1976 = vmax.f32 %v1922, %v1923
        %1977 = vmax.xlane.f32.xlu0 %v1976
        %v1978 = vpop.xlane.xlu0 %1977
        %v1979 = vmax.f32 %v1924, %v1925
        %1980 = vmax.xlane.f32.xlu0 %v1979
        %v1981 = vpop.xlane.xlu0 %1980
        %v1982 = vmax.f32 %v1926, %v1927
        %1983 = vmax.xlane.f32.xlu0 %v1982
        %v1984 = vpop.xlane.xlu0 %1983
        %v1985 = vmax.f32 %v1928, %v1929
        %1986 = vmax.xlane.f32.xlu0 %v1985
        %v1987 = vpop.xlane.xlu0 %1986
        %v1988 = vmax.f32 %v1930, %v1931
        %1989 = vmax.xlane.f32.xlu0 %v1988
        %v1990 = vpop.xlane.xlu0 %1989
        %v1991 = vmax.f32 %v1932, %v1933
        %1992 = vmax.xlane.f32.xlu0 %v1991
        %v1993 = vpop.xlane.xlu0 %1992
        %v1994 = vmax.f32 %v1934, %v1935
        %1995 = vmax.xlane.f32.xlu0 %v1994
        %v1996 = vpop.xlane.xlu0 %1995
        %v1997 = vmax.f32 %v1936, %v1937
        %1998 = vmax.xlane.f32.xlu0 %v1997
        %v1999 = vpop.xlane.xlu0 %1998
        %v2000 = vmax.f32 %v1938, %v1939
        %2001 = vmax.xlane.f32.xlu0 %v2000
        %v2002 = vpop.xlane.xlu0 %2001
        %v2003 = vmax.f32 %v1940, %v1941
        %2004 = vmax.xlane.f32.xlu0 %v2003
        %v2005 = vpop.xlane.xlu0 %2004
        %v2006 = vmax.f32 %v1942, %v1943
        %2007 = vmax.xlane.f32.xlu0 %v2006
        %v2008 = vpop.xlane.xlu0 %2007
        %v2009 = vmax.f32 %v1945, %v1963
        %v2010 = vmax.f32 %v1946, %v1966
        %v2011 = vmax.f32 %v1947, %v1969
        %v2012 = vmax.f32 %v1948, %v1972
        %v2013 = vmax.f32 %v1949, %v1975
        %v2014 = vmax.f32 %v1950, %v1978
        %v2015 = vmax.f32 %v1951, %v1981
        %v2016 = vmax.f32 %v1952, %v1984
        %v2017 = vmax.f32 %v1953, %v1987
        %v2018 = vmax.f32 %v1954, %v1990
        %v2019 = vmax.f32 %v1955, %v1993
        %v2020 = vmax.f32 %v1956, %v1996
        %v2021 = vmax.f32 %v1957, %v1999
        %v2022 = vmax.f32 %v1958, %v2002
        %v2023 = vmax.f32 %v1959, %v2005
        %v2024 = vmax.f32 %v1960, %v2008
        %v2025 = vsub.f32 %v1945, %v2009
        %v2026 = vsub.f32 %v1946, %v2010
        %v2027 = vsub.f32 %v1947, %v2011
        %v2028 = vsub.f32 %v1948, %v2012
        %v2029 = vsub.f32 %v1949, %v2013
        %v2030 = vsub.f32 %v1950, %v2014
        %v2031 = vsub.f32 %v1951, %v2015
        %v2032 = vsub.f32 %v1952, %v2016
        %v2033 = vsub.f32 %v1953, %v2017
        %v2034 = vsub.f32 %v1954, %v2018
        %v2035 = vsub.f32 %v1955, %v2019
        %v2036 = vsub.f32 %v1956, %v2020
        %v2037 = vsub.f32 %v1957, %v2021
        %v2038 = vsub.f32 %v1958, %v2022
        %v2039 = vsub.f32 %v1959, %v2023
        %v2040 = vsub.f32 %v1960, %v2024
        %v2041 = vmul.f32 %v2025, 1.442695
        %v2042 = vpow.pop %v2041
        %v2043 = vmul.f32 %v2026, 1.442695
        %v2044 = vpow.pop %v2043
        %v2045 = vmul.f32 %v2027, 1.442695
        %v2046 = vpow.pop %v2045
        %v2047 = vmul.f32 %v2028, 1.442695
        %v2048 = vpow.pop %v2047
        %v2049 = vmul.f32 %v2029, 1.442695
        %v2050 = vpow.pop %v2049
        %v2051 = vmul.f32 %v2030, 1.442695
        %v2052 = vpow.pop %v2051
        %v2053 = vmul.f32 %v2031, 1.442695
        %v2054 = vpow.pop %v2053
        %v2055 = vmul.f32 %v2032, 1.442695
        %v2056 = vpow.pop %v2055
        %v2057 = vmul.f32 %v2033, 1.442695
        %v2058 = vpow.pop %v2057
        %v2059 = vmul.f32 %v2034, 1.442695
        %v2060 = vpow.pop %v2059
        %v2061 = vmul.f32 %v2035, 1.442695
        %v2062 = vpow.pop %v2061
        %v2063 = vmul.f32 %v2036, 1.442695
        %v2064 = vpow.pop %v2063
        %v2065 = vmul.f32 %v2037, 1.442695
        %v2066 = vpow.pop %v2065
        %v2067 = vmul.f32 %v2038, 1.442695
        %v2068 = vpow.pop %v2067
        %v2069 = vmul.f32 %v2039, 1.442695
        %v2070 = vpow.pop %v2069
        %v2071 = vmul.f32 %v2040, 1.442695
        %v2072 = vpow.pop %v2071
        %2074 = vset.pattern.permute.xlu0 0
        %2075 = vperm.xlu0 %2074, %v2009
        %v2076 = vpop.permute.xlu0 %2075
        %2079 = vset.pattern.permute.xlu0 0
        %2080 = vperm.xlu0 %2079, %v2010
        %v2081 = vpop.permute.xlu0 %2080
        %2084 = vset.pattern.permute.xlu0 0
        %2085 = vperm.xlu0 %2084, %v2011
        %v2086 = vpop.permute.xlu0 %2085
        %2089 = vset.pattern.permute.xlu0 0
        %2090 = vperm.xlu0 %2089, %v2012
        %v2091 = vpop.permute.xlu0 %2090
        %2094 = vset.pattern.permute.xlu0 0
        %2095 = vperm.xlu0 %2094, %v2013
        %v2096 = vpop.permute.xlu0 %2095
        %2099 = vset.pattern.permute.xlu0 0
        %2100 = vperm.xlu0 %2099, %v2014
        %v2101 = vpop.permute.xlu0 %2100
        %2104 = vset.pattern.permute.xlu0 0
        %2105 = vperm.xlu0 %2104, %v2015
        %v2106 = vpop.permute.xlu0 %2105
        %2109 = vset.pattern.permute.xlu0 0
        %2110 = vperm.xlu0 %2109, %v2016
        %v2111 = vpop.permute.xlu0 %2110
        %2114 = vset.pattern.permute.xlu0 0
        %2115 = vperm.xlu0 %2114, %v2017
        %v2116 = vpop.permute.xlu0 %2115
        %2119 = vset.pattern.permute.xlu0 0
        %2120 = vperm.xlu0 %2119, %v2018
        %v2121 = vpop.permute.xlu0 %2120
        %2124 = vset.pattern.permute.xlu0 0
        %2125 = vperm.xlu0 %2124, %v2019
        %v2126 = vpop.permute.xlu0 %2125
        %2129 = vset.pattern.permute.xlu0 0
        %2130 = vperm.xlu0 %2129, %v2020
        %v2131 = vpop.permute.xlu0 %2130
        %2134 = vset.pattern.permute.xlu0 0
        %2135 = vperm.xlu0 %2134, %v2021
        %v2136 = vpop.permute.xlu0 %2135
        %2139 = vset.pattern.permute.xlu0 0
        %2140 = vperm.xlu0 %2139, %v2022
        %v2141 = vpop.permute.xlu0 %2140
        %2144 = vset.pattern.permute.xlu0 0
        %2145 = vperm.xlu0 %2144, %v2023
        %v2146 = vpop.permute.xlu0 %2145
        %2149 = vset.pattern.permute.xlu0 0
        %2150 = vperm.xlu0 %2149, %v2024
        %v2151 = vpop.permute.xlu0 %2150
        %v2153 = vsub.f32 %v1912, %v2076
        %v2154 = vsub.f32 %v1913, %v2076
        %v2155 = vsub.f32 %v1914, %v2081
        %v2156 = vsub.f32 %v1915, %v2081
        %v2157 = vsub.f32 %v1916, %v2086
        %v2158 = vsub.f32 %v1917, %v2086
        %v2159 = vsub.f32 %v1918, %v2091
        %v2160 = vsub.f32 %v1919, %v2091
        %v2161 = vsub.f32 %v1920, %v2096
        %v2162 = vsub.f32 %v1921, %v2096
        %v2163 = vsub.f32 %v1922, %v2101
        %v2164 = vsub.f32 %v1923, %v2101
        %v2165 = vsub.f32 %v1924, %v2106
        %v2166 = vsub.f32 %v1925, %v2106
        %v2167 = vsub.f32 %v1926, %v2111
        %v2168 = vsub.f32 %v1927, %v2111
        %v2169 = vsub.f32 %v1928, %v2116
        %v2170 = vsub.f32 %v1929, %v2116
        %v2171 = vsub.f32 %v1930, %v2121
        %v2172 = vsub.f32 %v1931, %v2121
        %v2173 = vsub.f32 %v1932, %v2126
        %v2174 = vsub.f32 %v1933, %v2126
        %v2175 = vsub.f32 %v1934, %v2131
        %v2176 = vsub.f32 %v1935, %v2131
        %v2177 = vsub.f32 %v1936, %v2136
        %v2178 = vsub.f32 %v1937, %v2136
        %v2179 = vsub.f32 %v1938, %v2141
        %v2180 = vsub.f32 %v1939, %v2141
        %v2181 = vsub.f32 %v1940, %v2146
        %v2182 = vsub.f32 %v1941, %v2146
        %v2183 = vsub.f32 %v1942, %v2151
        %v2184 = vsub.f32 %v1943, %v2151
        %v2185 = vmul.f32 %v2153, 1.442695
        %v2186 = vpow.pop %v2185
        %v2187 = vmul.f32 %v2154, 1.442695
        %v2188 = vpow.pop %v2187
        %v2189 = vmul.f32 %v2155, 1.442695
        %v2190 = vpow.pop %v2189
        %v2191 = vmul.f32 %v2156, 1.442695
        %v2192 = vpow.pop %v2191
        %v2193 = vmul.f32 %v2157, 1.442695
        %v2194 = vpow.pop %v2193
        %v2195 = vmul.f32 %v2158, 1.442695
        %v2196 = vpow.pop %v2195
        %v2197 = vmul.f32 %v2159, 1.442695
        %v2198 = vpow.pop %v2197
        %v2199 = vmul.f32 %v2160, 1.442695
        %v2200 = vpow.pop %v2199
        %v2201 = vmul.f32 %v2161, 1.442695
        %v2202 = vpow.pop %v2201
        %v2203 = vmul.f32 %v2162, 1.442695
        %v2204 = vpow.pop %v2203
        %v2205 = vmul.f32 %v2163, 1.442695
        %v2206 = vpow.pop %v2205
        %v2207 = vmul.f32 %v2164, 1.442695
        %v2208 = vpow.pop %v2207
        %v2209 = vmul.f32 %v2165, 1.442695
        %v2210 = vpow.pop %v2209
        %v2211 = vmul.f32 %v2166, 1.442695
        %v2212 = vpow.pop %v2211
        %v2213 = vmul.f32 %v2167, 1.442695
        %v2214 = vpow.pop %v2213
        %v2215 = vmul.f32 %v2168, 1.442695
        %v2216 = vpow.pop %v2215
        %v2217 = vmul.f32 %v2169, 1.442695
        %v2218 = vpow.pop %v2217
        %v2219 = vmul.f32 %v2170, 1.442695
        %v2220 = vpow.pop %v2219
        %v2221 = vmul.f32 %v2171, 1.442695
        %v2222 = vpow.pop %v2221
        %v2223 = vmul.f32 %v2172, 1.442695
        %v2224 = vpow.pop %v2223
        %v2225 = vmul.f32 %v2173, 1.442695
        %v2226 = vpow.pop %v2225
        %v2227 = vmul.f32 %v2174, 1.442695
        %v2228 = vpow.pop %v2227
        %v2229 = vmul.f32 %v2175, 1.442695
        %v2230 = vpow.pop %v2229
        %v2231 = vmul.f32 %v2176, 1.442695
        %v2232 = vpow.pop %v2231
        %v2233 = vmul.f32 %v2177, 1.442695
        %v2234 = vpow.pop %v2233
        %v2235 = vmul.f32 %v2178, 1.442695
        %v2236 = vpow.pop %v2235
        %v2237 = vmul.f32 %v2179, 1.442695
        %v2238 = vpow.pop %v2237
        %v2239 = vmul.f32 %v2180, 1.442695
        %v2240 = vpow.pop %v2239
        %v2241 = vmul.f32 %v2181, 1.442695
        %v2242 = vpow.pop %v2241
        %v2243 = vmul.f32 %v2182, 1.442695
        %v2244 = vpow.pop %v2243
        %v2245 = vmul.f32 %v2183, 1.442695
        %v2246 = vpow.pop %v2245
        %v2247 = vmul.f32 %v2184, 1.442695
        %v2248 = vpow.pop %v2247
        %s2249 = scalar_lea.vmem [#allocation3], 128
        %v2250 = vld [vmem:[%s2249] sm:$0xff]
        %v2251 = vld [vmem:[%s2249 + $0x8] sm:$0xff]
        %v2252 = vld [vmem:[%s2249 + $0x10] sm:$0xff]
        %v2253 = vld [vmem:[%s2249 + $0x18] sm:$0xff]
        %v2254 = vld [vmem:[%s2249 + $0x20] sm:$0xff]
        %v2255 = vld [vmem:[%s2249 + $0x28] sm:$0xff]
        %v2256 = vld [vmem:[%s2249 + $0x30] sm:$0xff]
        %v2257 = vld [vmem:[%s2249 + $0x38] sm:$0xff]
        %v2258 = vld [vmem:[%s2249 + $0x40] sm:$0xff]
        %v2259 = vld [vmem:[%s2249 + $0x48] sm:$0xff]
        %v2260 = vld [vmem:[%s2249 + $0x50] sm:$0xff]
        %v2261 = vld [vmem:[%s2249 + $0x58] sm:$0xff]
        %v2262 = vld [vmem:[%s2249 + $0x60] sm:$0xff]
        %v2263 = vld [vmem:[%s2249 + $0x68] sm:$0xff]
        %v2264 = vld [vmem:[%s2249 + $0x70] sm:$0xff]
        %v2265 = vld [vmem:[%s2249 + $0x78] sm:$0xff]
        %v2266 = vmul.f32 %v2042, %v2250
        %v2267 = vmul.f32 %v2044, %v2251
        %v2268 = vmul.f32 %v2046, %v2252
        %v2269 = vmul.f32 %v2048, %v2253
        %v2270 = vmul.f32 %v2050, %v2254
        %v2271 = vmul.f32 %v2052, %v2255
        %v2272 = vmul.f32 %v2054, %v2256
        %v2273 = vmul.f32 %v2056, %v2257
        %v2274 = vmul.f32 %v2058, %v2258
        %v2275 = vmul.f32 %v2060, %v2259
        %v2276 = vmul.f32 %v2062, %v2260
        %v2277 = vmul.f32 %v2064, %v2261
        %v2278 = vmul.f32 %v2066, %v2262
        %v2279 = vmul.f32 %v2068, %v2263
        %v2280 = vmul.f32 %v2070, %v2264
        %v2281 = vmul.f32 %v2072, %v2265
        %v2282 = vadd.f32 %v2186, %v2188
        %2283 = vadd.xlane.f32.xlu0 %v2282
        %v2284 = vpop.xlane.xlu0 %2283
        %v2285 = vadd.f32 %v2190, %v2192
        %2286 = vadd.xlane.f32.xlu0 %v2285
        %v2287 = vpop.xlane.xlu0 %2286
        %v2288 = vadd.f32 %v2194, %v2196
        %2289 = vadd.xlane.f32.xlu0 %v2288
        %v2290 = vpop.xlane.xlu0 %2289
        %v2291 = vadd.f32 %v2198, %v2200
        %2292 = vadd.xlane.f32.xlu0 %v2291
        %v2293 = vpop.xlane.xlu0 %2292
        %v2294 = vadd.f32 %v2202, %v2204
        %2295 = vadd.xlane.f32.xlu0 %v2294
        %v2296 = vpop.xlane.xlu0 %2295
        %v2297 = vadd.f32 %v2206, %v2208
        %2298 = vadd.xlane.f32.xlu0 %v2297
        %v2299 = vpop.xlane.xlu0 %2298
        %v2300 = vadd.f32 %v2210, %v2212
        %2301 = vadd.xlane.f32.xlu0 %v2300
        %v2302 = vpop.xlane.xlu0 %2301
        %v2303 = vadd.f32 %v2214, %v2216
        %2304 = vadd.xlane.f32.xlu0 %v2303
        %v2305 = vpop.xlane.xlu0 %2304
        %v2306 = vadd.f32 %v2218, %v2220
        %2307 = vadd.xlane.f32.xlu0 %v2306
        %v2308 = vpop.xlane.xlu0 %2307
        %v2309 = vadd.f32 %v2222, %v2224
        %2310 = vadd.xlane.f32.xlu0 %v2309
        %v2311 = vpop.xlane.xlu0 %2310
        %v2312 = vadd.f32 %v2226, %v2228
        %2313 = vadd.xlane.f32.xlu0 %v2312
        %v2314 = vpop.xlane.xlu0 %2313
        %v2315 = vadd.f32 %v2230, %v2232
        %2316 = vadd.xlane.f32.xlu0 %v2315
        %v2317 = vpop.xlane.xlu0 %2316
        %v2318 = vadd.f32 %v2234, %v2236
        %2319 = vadd.xlane.f32.xlu0 %v2318
        %v2320 = vpop.xlane.xlu0 %2319
        %v2321 = vadd.f32 %v2238, %v2240
        %2322 = vadd.xlane.f32.xlu0 %v2321
        %v2323 = vpop.xlane.xlu0 %2322
        %v2324 = vadd.f32 %v2242, %v2244
        %2325 = vadd.xlane.f32.xlu0 %v2324
        %v2326 = vpop.xlane.xlu0 %2325
        %v2327 = vadd.f32 %v2246, %v2248
        %2328 = vadd.xlane.f32.xlu0 %v2327
        %v2329 = vpop.xlane.xlu0 %2328
        %v2330 = vadd.f32 %v2266, %v2284
        %v2331 = vadd.f32 %v2267, %v2287
        %v2332 = vadd.f32 %v2268, %v2290
        %v2333 = vadd.f32 %v2269, %v2293
        %v2334 = vadd.f32 %v2270, %v2296
        %v2335 = vadd.f32 %v2271, %v2299
        %v2336 = vadd.f32 %v2272, %v2302
        %v2337 = vadd.f32 %v2273, %v2305
        %v2338 = vadd.f32 %v2274, %v2308
        %v2339 = vadd.f32 %v2275, %v2311
        %v2340 = vadd.f32 %v2276, %v2314
        %v2341 = vadd.f32 %v2277, %v2317
        %v2342 = vadd.f32 %v2278, %v2320
        %v2343 = vadd.f32 %v2279, %v2323
        %v2344 = vadd.f32 %v2280, %v2326
        %v2345 = vadd.f32 %v2281, %v2329
        %2346 = vst.msk [vmem:[%s2249] sm:$0xff] %vm1294, %v2330
        %2347 = vst.msk [vmem:[%s2249 + $0x8] sm:$0xff] %vm1294, %v2331
        %2348 = vst.msk [vmem:[%s2249 + $0x10] sm:$0xff] %vm1294, %v2332
        %2349 = vst.msk [vmem:[%s2249 + $0x18] sm:$0xff] %vm1294, %v2333
        %2350 = vst.msk [vmem:[%s2249 + $0x20] sm:$0xff] %vm1294, %v2334
        %2351 = vst.msk [vmem:[%s2249 + $0x28] sm:$0xff] %vm1294, %v2335
        %2352 = vst.msk [vmem:[%s2249 + $0x30] sm:$0xff] %vm1294, %v2336
        %2353 = vst.msk [vmem:[%s2249 + $0x38] sm:$0xff] %vm1294, %v2337
        %2354 = vst.msk [vmem:[%s2249 + $0x40] sm:$0xff] %vm1294, %v2338
        %2355 = vst.msk [vmem:[%s2249 + $0x48] sm:$0xff] %vm1294, %v2339
        %2356 = vst.msk [vmem:[%s2249 + $0x50] sm:$0xff] %vm1294, %v2340
        %2357 = vst.msk [vmem:[%s2249 + $0x58] sm:$0xff] %vm1294, %v2341
        %2358 = vst.msk [vmem:[%s2249 + $0x60] sm:$0xff] %vm1294, %v2342
        %2359 = vst.msk [vmem:[%s2249 + $0x68] sm:$0xff] %vm1294, %v2343
        %2360 = vst.msk [vmem:[%s2249 + $0x70] sm:$0xff] %vm1294, %v2344
        %2361 = vst.msk [vmem:[%s2249 + $0x78] sm:$0xff] %vm1294, %v2345
        %s2362 = scalar_lea.vmem [#allocation4], 128
        %v2363 = vld [vmem:[%s2362] sm:$0xff]
        %v2364 = vld [vmem:[%s2362 + $0x8] sm:$0xff]
        %v2365 = vld [vmem:[%s2362 + $0x10] sm:$0xff]
        %v2366 = vld [vmem:[%s2362 + $0x18] sm:$0xff]
        %v2367 = vld [vmem:[%s2362 + $0x20] sm:$0xff]
        %v2368 = vld [vmem:[%s2362 + $0x28] sm:$0xff]
        %v2369 = vld [vmem:[%s2362 + $0x30] sm:$0xff]
        %v2370 = vld [vmem:[%s2362 + $0x38] sm:$0xff]
        %v2371 = vld [vmem:[%s2362 + $0x40] sm:$0xff]
        %v2372 = vld [vmem:[%s2362 + $0x48] sm:$0xff]
        %v2373 = vld [vmem:[%s2362 + $0x50] sm:$0xff]
        %v2374 = vld [vmem:[%s2362 + $0x58] sm:$0xff]
        %v2375 = vld [vmem:[%s2362 + $0x60] sm:$0xff]
        %v2376 = vld [vmem:[%s2362 + $0x68] sm:$0xff]
        %v2377 = vld [vmem:[%s2362 + $0x70] sm:$0xff]
        %v2378 = vld [vmem:[%s2362 + $0x78] sm:$0xff]
        %2380 = vset.pattern.permute.xlu0 0
        %2381 = vperm.xlu0 %2380, %v2042
        %v2382 = vpop.permute.xlu0 %2381
        %2385 = vset.pattern.permute.xlu0 0
        %2386 = vperm.xlu0 %2385, %v2044
        %v2387 = vpop.permute.xlu0 %2386
        %2390 = vset.pattern.permute.xlu0 0
        %2391 = vperm.xlu0 %2390, %v2046
        %v2392 = vpop.permute.xlu0 %2391
        %2395 = vset.pattern.permute.xlu0 0
        %2396 = vperm.xlu0 %2395, %v2048
        %v2397 = vpop.permute.xlu0 %2396
        %2400 = vset.pattern.permute.xlu0 0
        %2401 = vperm.xlu0 %2400, %v2050
        %v2402 = vpop.permute.xlu0 %2401
        %2405 = vset.pattern.permute.xlu0 0
        %2406 = vperm.xlu0 %2405, %v2052
        %v2407 = vpop.permute.xlu0 %2406
        %2410 = vset.pattern.permute.xlu0 0
        %2411 = vperm.xlu0 %2410, %v2054
        %v2412 = vpop.permute.xlu0 %2411
        %2415 = vset.pattern.permute.xlu0 0
        %2416 = vperm.xlu0 %2415, %v2056
        %v2417 = vpop.permute.xlu0 %2416
        %2420 = vset.pattern.permute.xlu0 0
        %2421 = vperm.xlu0 %2420, %v2058
        %v2422 = vpop.permute.xlu0 %2421
        %2425 = vset.pattern.permute.xlu0 0
        %2426 = vperm.xlu0 %2425, %v2060
        %v2427 = vpop.permute.xlu0 %2426
        %2430 = vset.pattern.permute.xlu0 0
        %2431 = vperm.xlu0 %2430, %v2062
        %v2432 = vpop.permute.xlu0 %2431
        %2435 = vset.pattern.permute.xlu0 0
        %2436 = vperm.xlu0 %2435, %v2064
        %v2437 = vpop.permute.xlu0 %2436
        %2440 = vset.pattern.permute.xlu0 0
        %2441 = vperm.xlu0 %2440, %v2066
        %v2442 = vpop.permute.xlu0 %2441
        %2445 = vset.pattern.permute.xlu0 0
        %2446 = vperm.xlu0 %2445, %v2068
        %v2447 = vpop.permute.xlu0 %2446
        %2450 = vset.pattern.permute.xlu0 0
        %2451 = vperm.xlu0 %2450, %v2070
        %v2452 = vpop.permute.xlu0 %2451
        %2455 = vset.pattern.permute.xlu0 0
        %2456 = vperm.xlu0 %2455, %v2072
        %v2457 = vpop.permute.xlu0 %2456
        %v2459 = vmul.f32 %v2382, %v2363
        %v2460 = vmul.f32 %v2387, %v2364
        %v2461 = vmul.f32 %v2392, %v2365
        %v2462 = vmul.f32 %v2397, %v2366
        %v2463 = vmul.f32 %v2402, %v2367
        %v2464 = vmul.f32 %v2407, %v2368
        %v2465 = vmul.f32 %v2412, %v2369
        %v2466 = vmul.f32 %v2417, %v2370
        %v2467 = vmul.f32 %v2422, %v2371
        %v2468 = vmul.f32 %v2427, %v2372
        %v2469 = vmul.f32 %v2432, %v2373
        %v2470 = vmul.f32 %v2437, %v2374
        %v2471 = vmul.f32 %v2442, %v2375
        %v2472 = vmul.f32 %v2447, %v2376
        %v2473 = vmul.f32 %v2452, %v2377
        %v2474 = vmul.f32 %v2457, %v2378
        %v2475 = vpack.c.bf16 %v2190, %v2186
        %v2476 = vpack.c.bf16 %v2192, %v2188
        %v2477 = vpack.c.bf16 %v2198, %v2194
        %v2478 = vpack.c.bf16 %v2200, %v2196
        %v2479 = vpack.c.bf16 %v2206, %v2202
        %v2480 = vpack.c.bf16 %v2208, %v2204
        %v2481 = vpack.c.bf16 %v2214, %v2210
        %v2482 = vpack.c.bf16 %v2216, %v2212
        %v2483 = vpack.c.bf16 %v2222, %v2218
        %v2484 = vpack.c.bf16 %v2224, %v2220
        %v2485 = vpack.c.bf16 %v2230, %v2226
        %v2486 = vpack.c.bf16 %v2232, %v2228
        %v2487 = vpack.c.bf16 %v2238, %v2234
        %v2488 = vpack.c.bf16 %v2240, %v2236
        %v2489 = vpack.c.bf16 %v2246, %v2242
        %v2490 = vpack.c.bf16 %v2248, %v2244
        %s2491 = scalar_lea.vmem %s281, 128
        %v2492 = vld [vmem:[%s2491] sm:$0xf]
        %v2493 = vld [vmem:[%s2491 + $0x4] sm:$0xf]
        %v2494 = vld [vmem:[%s2491 + $0x8] sm:$0xf]
        %v2495 = vld [vmem:[%s2491 + $0xc] sm:$0xf]
        %v2496 = vld [vmem:[%s2491 + $0x10] sm:$0xf]
        %v2497 = vld [vmem:[%s2491 + $0x14] sm:$0xf]
        %v2498 = vld [vmem:[%s2491 + $0x18] sm:$0xf]
        %v2499 = vld [vmem:[%s2491 + $0x1c] sm:$0xf]
        %v2500 = vld [vmem:[%s2491 + $0x20] sm:$0xf]
        %v2501 = vld [vmem:[%s2491 + $0x24] sm:$0xf]
        %v2502 = vld [vmem:[%s2491 + $0x28] sm:$0xf]
        %v2503 = vld [vmem:[%s2491 + $0x2c] sm:$0xf]
        %v2504 = vld [vmem:[%s2491 + $0x30] sm:$0xf]
        %v2505 = vld [vmem:[%s2491 + $0x34] sm:$0xf]
        %v2506 = vld [vmem:[%s2491 + $0x38] sm:$0xf]
        %v2507 = vld [vmem:[%s2491 + $0x3c] sm:$0xf]
        %v2508 = vld [vmem:[%s2491 + $0x40] sm:$0xf]
        %v2509 = vld [vmem:[%s2491 + $0x44] sm:$0xf]
        %v2510 = vld [vmem:[%s2491 + $0x48] sm:$0xf]
        %v2511 = vld [vmem:[%s2491 + $0x4c] sm:$0xf]
        %v2512 = vld [vmem:[%s2491 + $0x50] sm:$0xf]
        %v2513 = vld [vmem:[%s2491 + $0x54] sm:$0xf]
        %v2514 = vld [vmem:[%s2491 + $0x58] sm:$0xf]
        %v2515 = vld [vmem:[%s2491 + $0x5c] sm:$0xf]
        %v2516 = vld [vmem:[%s2491 + $0x60] sm:$0xf]
        %v2517 = vld [vmem:[%s2491 + $0x64] sm:$0xf]
        %v2518 = vld [vmem:[%s2491 + $0x68] sm:$0xf]
        %v2519 = vld [vmem:[%s2491 + $0x6c] sm:$0xf]
        %v2520 = vld [vmem:[%s2491 + $0x70] sm:$0xf]
        %v2521 = vld [vmem:[%s2491 + $0x74] sm:$0xf]
        %v2522 = vld [vmem:[%s2491 + $0x78] sm:$0xf]
        %v2523 = vld [vmem:[%s2491 + $0x7c] sm:$0xf]
        %v2556 = vunpack.c.l.b16 %v2492
        %v2557 = vunpack.c.l.b16 %v2493
        %v2558 = vunpack.c.l.b16 %v2494
        %v2559 = vunpack.c.l.b16 %v2495
        %v2560 = vunpack.c.l.b16 %v2496
        %v2561 = vunpack.c.l.b16 %v2497
        %v2562 = vunpack.c.l.b16 %v2498
        %v2563 = vunpack.c.l.b16 %v2499
        %v2564 = vunpack.c.l.b16 %v2500
        %v2565 = vunpack.c.l.b16 %v2501
        %v2566 = vunpack.c.l.b16 %v2502
        %v2567 = vunpack.c.l.b16 %v2503
        %v2568 = vunpack.c.l.b16 %v2504
        %v2569 = vunpack.c.l.b16 %v2505
        %v2570 = vunpack.c.l.b16 %v2506
        %v2571 = vunpack.c.l.b16 %v2507
        %v2572 = vunpack.c.l.b16 %v2508
        %v2573 = vunpack.c.l.b16 %v2509
        %v2574 = vunpack.c.l.b16 %v2510
        %v2575 = vunpack.c.l.b16 %v2511
        %v2576 = vunpack.c.l.b16 %v2512
        %v2577 = vunpack.c.l.b16 %v2513
        %v2578 = vunpack.c.l.b16 %v2514
        %v2579 = vunpack.c.l.b16 %v2515
        %v2580 = vunpack.c.l.b16 %v2516
        %v2581 = vunpack.c.l.b16 %v2517
        %v2582 = vunpack.c.l.b16 %v2518
        %v2583 = vunpack.c.l.b16 %v2519
        %v2584 = vunpack.c.l.b16 %v2520
        %v2585 = vunpack.c.l.b16 %v2521
        %v2586 = vunpack.c.l.b16 %v2522
        %v2587 = vunpack.c.l.b16 %v2523
        %v2588 = vpack.c.b16 %v2557, %v2556
        %v2589 = vpack.c.b16 %v2559, %v2558
        %v2590 = vpack.c.b16 %v2561, %v2560
        %v2591 = vpack.c.b16 %v2563, %v2562
        %v2592 = vpack.c.b16 %v2565, %v2564
        %v2593 = vpack.c.b16 %v2567, %v2566
        %v2594 = vpack.c.b16 %v2569, %v2568
        %v2595 = vpack.c.b16 %v2571, %v2570
        %v2596 = vpack.c.b16 %v2573, %v2572
        %v2597 = vpack.c.b16 %v2575, %v2574
        %v2598 = vpack.c.b16 %v2577, %v2576
        %v2599 = vpack.c.b16 %v2579, %v2578
        %v2600 = vpack.c.b16 %v2581, %v2580
        %v2601 = vpack.c.b16 %v2583, %v2582
        %v2602 = vpack.c.b16 %v2585, %v2584
        %v2603 = vpack.c.b16 %v2587, %v2586
        %2620 = vmatpush.bf16.msra.mxu0 %v2595
        %2621 = vmatpush.bf16.msra.mxu0 %v2594
        %2622 = vmatpush.bf16.msra.mxu0 %v2593
        %2623 = vmatpush.bf16.msra.mxu0 %v2592
        %2624 = vmatpush.bf16.msra.mxu0 %v2591
        %2625 = vmatpush.bf16.msra.mxu0 %v2590
        %2626 = vmatpush.bf16.msra.mxu0 %v2589
        %2627 = vmatpush.bf16.msra.mxu0 %v2588
        %2628 = vmatmul.bf16.gmra.mxu0 %v2475
        %v2629 = vpop.f32.mrf.mxu0
        %v2630 = vadd.f32 0.0, %v2629
        %v2631 = vpop.f32.mrf.mxu0
        %v2632 = vadd.f32 0.0, %v2631
        %2633 = vmatmul.bf16.gmra.mxu0 %v2477
        %v2634 = vpop.f32.mrf.mxu0
        %v2635 = vadd.f32 0.0, %v2634
        %v2636 = vpop.f32.mrf.mxu0
        %v2637 = vadd.f32 0.0, %v2636
        %2638 = vmatmul.bf16.gmra.mxu0 %v2479
        %v2639 = vpop.f32.mrf.mxu0
        %v2640 = vadd.f32 0.0, %v2639
        %v2641 = vpop.f32.mrf.mxu0
        %v2642 = vadd.f32 0.0, %v2641
        %2643 = vmatmul.bf16.gmra.mxu0 %v2481
        %v2644 = vpop.f32.mrf.mxu0
        %v2645 = vadd.f32 0.0, %v2644
        %v2646 = vpop.f32.mrf.mxu0
        %v2647 = vadd.f32 0.0, %v2646
        %2648 = vmatmul.bf16.gmra.mxu0 %v2483
        %v2649 = vpop.f32.mrf.mxu0
        %v2650 = vadd.f32 0.0, %v2649
        %v2651 = vpop.f32.mrf.mxu0
        %v2652 = vadd.f32 0.0, %v2651
        %2653 = vmatmul.bf16.gmra.mxu0 %v2485
        %v2654 = vpop.f32.mrf.mxu0
        %v2655 = vadd.f32 0.0, %v2654
        %v2656 = vpop.f32.mrf.mxu0
        %v2657 = vadd.f32 0.0, %v2656
        %2658 = vmatmul.bf16.gmra.mxu0 %v2487
        %v2659 = vpop.f32.mrf.mxu0
        %v2660 = vadd.f32 0.0, %v2659
        %v2661 = vpop.f32.mrf.mxu0
        %v2662 = vadd.f32 0.0, %v2661
        %2663 = vmatmul.bf16.gmra.mxu0 %v2489
        %v2664 = vpop.f32.mrf.mxu0
        %v2665 = vadd.f32 0.0, %v2664
        %v2666 = vpop.f32.mrf.mxu0
        %v2667 = vadd.f32 0.0, %v2666
        %2668 = vdwg.mxu0
        %2669 = vmatpush.bf16.msra.mxu0 %v2603
        %2670 = vmatpush.bf16.msra.mxu0 %v2602
        %2671 = vmatpush.bf16.msra.mxu0 %v2601
        %2672 = vmatpush.bf16.msra.mxu0 %v2600
        %2673 = vmatpush.bf16.msra.mxu0 %v2599
        %2674 = vmatpush.bf16.msra.mxu0 %v2598
        %2675 = vmatpush.bf16.msra.mxu0 %v2597
        %2676 = vmatpush.bf16.msra.mxu0 %v2596
        %2677 = vmatmul.bf16.gmra.mxu0 %v2476
        %v2678 = vpop.f32.mrf.mxu0
        %v2679 = vadd.f32 %v2630, %v2678
        %v2680 = vpop.f32.mrf.mxu0
        %v2681 = vadd.f32 %v2632, %v2680
        %2682 = vmatmul.bf16.gmra.mxu0 %v2478
        %v2683 = vpop.f32.mrf.mxu0
        %v2684 = vadd.f32 %v2635, %v2683
        %v2685 = vpop.f32.mrf.mxu0
        %v2686 = vadd.f32 %v2637, %v2685
        %2687 = vmatmul.bf16.gmra.mxu0 %v2480
        %v2688 = vpop.f32.mrf.mxu0
        %v2689 = vadd.f32 %v2640, %v2688
        %v2690 = vpop.f32.mrf.mxu0
        %v2691 = vadd.f32 %v2642, %v2690
        %2692 = vmatmul.bf16.gmra.mxu0 %v2482
        %v2693 = vpop.f32.mrf.mxu0
        %v2694 = vadd.f32 %v2645, %v2693
        %v2695 = vpop.f32.mrf.mxu0
        %v2696 = vadd.f32 %v2647, %v2695
        %2697 = vmatmul.bf16.gmra.mxu0 %v2484
        %v2698 = vpop.f32.mrf.mxu0
        %v2699 = vadd.f32 %v2650, %v2698
        %v2700 = vpop.f32.mrf.mxu0
        %v2701 = vadd.f32 %v2652, %v2700
        %2702 = vmatmul.bf16.gmra.mxu0 %v2486
        %v2703 = vpop.f32.mrf.mxu0
        %v2704 = vadd.f32 %v2655, %v2703
        %v2705 = vpop.f32.mrf.mxu0
        %v2706 = vadd.f32 %v2657, %v2705
        %2707 = vmatmul.bf16.gmra.mxu0 %v2488
        %v2708 = vpop.f32.mrf.mxu0
        %v2709 = vadd.f32 %v2660, %v2708
        %v2710 = vpop.f32.mrf.mxu0
        %v2711 = vadd.f32 %v2662, %v2710
        %2712 = vmatmul.bf16.gmra.mxu0 %v2490
        %v2713 = vpop.f32.mrf.mxu0
        %v2714 = vadd.f32 %v2665, %v2713
        %v2715 = vpop.f32.mrf.mxu0
        %v2716 = vadd.f32 %v2667, %v2715
        %2717 = vdwg.mxu0
        %v2718 = vadd.f32 %v2459, %v2679
        %v2719 = vadd.f32 %v2460, %v2681
        %v2720 = vadd.f32 %v2461, %v2684
        %v2721 = vadd.f32 %v2462, %v2686
        %v2722 = vadd.f32 %v2463, %v2689
        %v2723 = vadd.f32 %v2464, %v2691
        %v2724 = vadd.f32 %v2465, %v2694
        %v2725 = vadd.f32 %v2466, %v2696
        %v2726 = vadd.f32 %v2467, %v2699
        %v2727 = vadd.f32 %v2468, %v2701
        %v2728 = vadd.f32 %v2469, %v2704
        %v2729 = vadd.f32 %v2470, %v2706
        %v2730 = vadd.f32 %v2471, %v2709
        %v2731 = vadd.f32 %v2472, %v2711
        %v2732 = vadd.f32 %v2473, %v2714
        %v2733 = vadd.f32 %v2474, %v2716
        %2734 = vst.msk [vmem:[%s2362] sm:$0xff] %vm1681, %v2718
        %2735 = vst.msk [vmem:[%s2362 + $0x8] sm:$0xff] %vm1681, %v2719
        %2736 = vst.msk [vmem:[%s2362 + $0x10] sm:$0xff] %vm1681, %v2720
        %2737 = vst.msk [vmem:[%s2362 + $0x18] sm:$0xff] %vm1681, %v2721
        %2738 = vst.msk [vmem:[%s2362 + $0x20] sm:$0xff] %vm1681, %v2722
        %2739 = vst.msk [vmem:[%s2362 + $0x28] sm:$0xff] %vm1681, %v2723
        %2740 = vst.msk [vmem:[%s2362 + $0x30] sm:$0xff] %vm1681, %v2724
        %2741 = vst.msk [vmem:[%s2362 + $0x38] sm:$0xff] %vm1681, %v2725
        %2742 = vst.msk [vmem:[%s2362 + $0x40] sm:$0xff] %vm1681, %v2726
        %2743 = vst.msk [vmem:[%s2362 + $0x48] sm:$0xff] %vm1681, %v2727
        %2744 = vst.msk [vmem:[%s2362 + $0x50] sm:$0xff] %vm1681, %v2728
        %2745 = vst.msk [vmem:[%s2362 + $0x58] sm:$0xff] %vm1681, %v2729
        %2746 = vst.msk [vmem:[%s2362 + $0x60] sm:$0xff] %vm1681, %v2730
        %2747 = vst.msk [vmem:[%s2362 + $0x68] sm:$0xff] %vm1681, %v2731
        %2748 = vst.msk [vmem:[%s2362 + $0x70] sm:$0xff] %vm1681, %v2732
        %2749 = vst.msk [vmem:[%s2362 + $0x78] sm:$0xff] %vm1681, %v2733
        %2750 = vst.msk [vmem:[%s1944] sm:$0xff] %vm1294, %v2009
        %2751 = vst.msk [vmem:[%s1944 + $0x8] sm:$0xff] %vm1294, %v2010
        %2752 = vst.msk [vmem:[%s1944 + $0x10] sm:$0xff] %vm1294, %v2011
        %2753 = vst.msk [vmem:[%s1944 + $0x18] sm:$0xff] %vm1294, %v2012
        %2754 = vst.msk [vmem:[%s1944 + $0x20] sm:$0xff] %vm1294, %v2013
        %2755 = vst.msk [vmem:[%s1944 + $0x28] sm:$0xff] %vm1294, %v2014
        %2756 = vst.msk [vmem:[%s1944 + $0x30] sm:$0xff] %vm1294, %v2015
        %2757 = vst.msk [vmem:[%s1944 + $0x38] sm:$0xff] %vm1294, %v2016
        %2758 = vst.msk [vmem:[%s1944 + $0x40] sm:$0xff] %vm1294, %v2017
        %2759 = vst.msk [vmem:[%s1944 + $0x48] sm:$0xff] %vm1294, %v2018
        %2760 = vst.msk [vmem:[%s1944 + $0x50] sm:$0xff] %vm1294, %v2019
        %2761 = vst.msk [vmem:[%s1944 + $0x58] sm:$0xff] %vm1294, %v2020
        %2762 = vst.msk [vmem:[%s1944 + $0x60] sm:$0xff] %vm1294, %v2021
        %2763 = vst.msk [vmem:[%s1944 + $0x68] sm:$0xff] %vm1294, %v2022
        %2764 = vst.msk [vmem:[%s1944 + $0x70] sm:$0xff] %vm1294, %v2023
        %2765 = vst.msk [vmem:[%s1944 + $0x78] sm:$0xff] %vm1294, %v2024
        %2766 = vset.pattern.permute.xlu0 2
        %2767 = vperm.xlu0 %2766, %v630
        %v2768 = vpop.permute.xlu0 %2767
        %2770 = vset.pattern.permute.xlu0 2
        %2771 = vperm.xlu0 %2770, %v631
        %v2772 = vpop.permute.xlu0 %2771
        %2774 = vset.pattern.permute.xlu0 2
        %2775 = vperm.xlu0 %2774, %v632
        %v2776 = vpop.permute.xlu0 %2775
        %2778 = vset.pattern.permute.xlu0 2
        %2779 = vperm.xlu0 %2778, %v633
        %v2780 = vpop.permute.xlu0 %2779
        %2782 = vset.pattern.permute.xlu0 2
        %2783 = vperm.xlu0 %2782, %v634
        %v2784 = vpop.permute.xlu0 %2783
        %2786 = vset.pattern.permute.xlu0 2
        %2787 = vperm.xlu0 %2786, %v635
        %v2788 = vpop.permute.xlu0 %2787
        %2790 = vset.pattern.permute.xlu0 2
        %2791 = vperm.xlu0 %2790, %v636
        %v2792 = vpop.permute.xlu0 %2791
        %2794 = vset.pattern.permute.xlu0 2
        %2795 = vperm.xlu0 %2794, %v637
        %v2796 = vpop.permute.xlu0 %2795
        %2798 = vset.pattern.permute.xlu0 2
        %2799 = vperm.xlu0 %2798, %v638
        %v2800 = vpop.permute.xlu0 %2799
        %2802 = vset.pattern.permute.xlu0 2
        %2803 = vperm.xlu0 %2802, %v639
        %v2804 = vpop.permute.xlu0 %2803
        %2806 = vset.pattern.permute.xlu0 2
        %2807 = vperm.xlu0 %2806, %v640
        %v2808 = vpop.permute.xlu0 %2807
        %2810 = vset.pattern.permute.xlu0 2
        %2811 = vperm.xlu0 %2810, %v641
        %v2812 = vpop.permute.xlu0 %2811
        %2814 = vset.pattern.permute.xlu0 2
        %2815 = vperm.xlu0 %2814, %v642
        %v2816 = vpop.permute.xlu0 %2815
        %2818 = vset.pattern.permute.xlu0 2
        %2819 = vperm.xlu0 %2818, %v643
        %v2820 = vpop.permute.xlu0 %2819
        %2822 = vset.pattern.permute.xlu0 2
        %2823 = vperm.xlu0 %2822, %v644
        %v2824 = vpop.permute.xlu0 %2823
        %2826 = vset.pattern.permute.xlu0 2
        %2827 = vperm.xlu0 %2826, %v645
        %v2828 = vpop.permute.xlu0 %2827
        %v2830 = vperm.slane %v646, 2
        %v2831 = vperm.slane %v646, 6
        %v2834 = vperm.slane %v2830, 2
        %v2835 = vperm.slane %v2831, 2
        %v2836 = vadd.f32 %v2768, %v2834
        %v2837 = vadd.f32 %v2768, %v2835
        %v2838 = vadd.f32 %v2772, %v2834
        %v2839 = vadd.f32 %v2772, %v2835
        %v2840 = vadd.f32 %v2776, %v2834
        %v2841 = vadd.f32 %v2776, %v2835
        %v2842 = vadd.f32 %v2780, %v2834
        %v2843 = vadd.f32 %v2780, %v2835
        %v2844 = vadd.f32 %v2784, %v2834
        %v2845 = vadd.f32 %v2784, %v2835
        %v2846 = vadd.f32 %v2788, %v2834
        %v2847 = vadd.f32 %v2788, %v2835
        %v2848 = vadd.f32 %v2792, %v2834
        %v2849 = vadd.f32 %v2792, %v2835
        %v2850 = vadd.f32 %v2796, %v2834
        %v2851 = vadd.f32 %v2796, %v2835
        %v2852 = vadd.f32 %v2800, %v2834
        %v2853 = vadd.f32 %v2800, %v2835
        %v2854 = vadd.f32 %v2804, %v2834
        %v2855 = vadd.f32 %v2804, %v2835
        %v2856 = vadd.f32 %v2808, %v2834
        %v2857 = vadd.f32 %v2808, %v2835
        %v2858 = vadd.f32 %v2812, %v2834
        %v2859 = vadd.f32 %v2812, %v2835
        %v2860 = vadd.f32 %v2816, %v2834
        %v2861 = vadd.f32 %v2816, %v2835
        %v2862 = vadd.f32 %v2820, %v2834
        %v2863 = vadd.f32 %v2820, %v2835
        %v2864 = vadd.f32 %v2824, %v2834
        %v2865 = vadd.f32 %v2824, %v2835
        %v2866 = vadd.f32 %v2828, %v2834
        %v2867 = vadd.f32 %v2828, %v2835
        %vm2868 = vcmp.gt.f32.partialorder %v2836, 0.0
        %vm2869 = vcmp.gt.f32.partialorder %v2837, 0.0
        %vm2870 = vcmp.gt.f32.partialorder %v2838, 0.0
        %vm2871 = vcmp.gt.f32.partialorder %v2839, 0.0
        %vm2872 = vcmp.gt.f32.partialorder %v2840, 0.0
        %vm2873 = vcmp.gt.f32.partialorder %v2841, 0.0
        %vm2874 = vcmp.gt.f32.partialorder %v2842, 0.0
        %vm2875 = vcmp.gt.f32.partialorder %v2843, 0.0
        %vm2876 = vcmp.gt.f32.partialorder %v2844, 0.0
        %vm2877 = vcmp.gt.f32.partialorder %v2845, 0.0
        %vm2878 = vcmp.gt.f32.partialorder %v2846, 0.0
        %vm2879 = vcmp.gt.f32.partialorder %v2847, 0.0
        %vm2880 = vcmp.gt.f32.partialorder %v2848, 0.0
        %vm2881 = vcmp.gt.f32.partialorder %v2849, 0.0
        %vm2882 = vcmp.gt.f32.partialorder %v2850, 0.0
        %vm2883 = vcmp.gt.f32.partialorder %v2851, 0.0
        %vm2884 = vcmp.gt.f32.partialorder %v2852, 0.0
        %vm2885 = vcmp.gt.f32.partialorder %v2853, 0.0
        %vm2886 = vcmp.gt.f32.partialorder %v2854, 0.0
        %vm2887 = vcmp.gt.f32.partialorder %v2855, 0.0
        %vm2888 = vcmp.gt.f32.partialorder %v2856, 0.0
        %vm2889 = vcmp.gt.f32.partialorder %v2857, 0.0
        %vm2890 = vcmp.gt.f32.partialorder %v2858, 0.0
        %vm2891 = vcmp.gt.f32.partialorder %v2859, 0.0
        %vm2892 = vcmp.gt.f32.partialorder %v2860, 0.0
        %vm2893 = vcmp.gt.f32.partialorder %v2861, 0.0
        %vm2894 = vcmp.gt.f32.partialorder %v2862, 0.0
        %vm2895 = vcmp.gt.f32.partialorder %v2863, 0.0
        %vm2896 = vcmp.gt.f32.partialorder %v2864, 0.0
        %vm2897 = vcmp.gt.f32.partialorder %v2865, 0.0
        %vm2898 = vcmp.gt.f32.partialorder %v2866, 0.0
        %vm2899 = vcmp.gt.f32.partialorder %v2867, 0.0
        %v2900 = vmul.f32 %v2836, 0.01
        %v2901 = vmul.f32 %v2837, 0.01
        %v2902 = vmul.f32 %v2838, 0.01
        %v2903 = vmul.f32 %v2839, 0.01
        %v2904 = vmul.f32 %v2840, 0.01
        %v2905 = vmul.f32 %v2841, 0.01
        %v2906 = vmul.f32 %v2842, 0.01
        %v2907 = vmul.f32 %v2843, 0.01
        %v2908 = vmul.f32 %v2844, 0.01
        %v2909 = vmul.f32 %v2845, 0.01
        %v2910 = vmul.f32 %v2846, 0.01
        %v2911 = vmul.f32 %v2847, 0.01
        %v2912 = vmul.f32 %v2848, 0.01
        %v2913 = vmul.f32 %v2849, 0.01
        %v2914 = vmul.f32 %v2850, 0.01
        %v2915 = vmul.f32 %v2851, 0.01
        %v2916 = vmul.f32 %v2852, 0.01
        %v2917 = vmul.f32 %v2853, 0.01
        %v2918 = vmul.f32 %v2854, 0.01
        %v2919 = vmul.f32 %v2855, 0.01
        %v2920 = vmul.f32 %v2856, 0.01
        %v2921 = vmul.f32 %v2857, 0.01
        %v2922 = vmul.f32 %v2858, 0.01
        %v2923 = vmul.f32 %v2859, 0.01
        %v2924 = vmul.f32 %v2860, 0.01
        %v2925 = vmul.f32 %v2861, 0.01
        %v2926 = vmul.f32 %v2862, 0.01
        %v2927 = vmul.f32 %v2863, 0.01
        %v2928 = vmul.f32 %v2864, 0.01
        %v2929 = vmul.f32 %v2865, 0.01
        %v2930 = vmul.f32 %v2866, 0.01
        %v2931 = vmul.f32 %v2867, 0.01
        %v2932 = vsel %vm2868, %v2836, %v2900
        %v2933 = vsel %vm2869, %v2837, %v2901
        %v2934 = vsel %vm2870, %v2838, %v2902
        %v2935 = vsel %vm2871, %v2839, %v2903
        %v2936 = vsel %vm2872, %v2840, %v2904
        %v2937 = vsel %vm2873, %v2841, %v2905
        %v2938 = vsel %vm2874, %v2842, %v2906
        %v2939 = vsel %vm2875, %v2843, %v2907
        %v2940 = vsel %vm2876, %v2844, %v2908
        %v2941 = vsel %vm2877, %v2845, %v2909
        %v2942 = vsel %vm2878, %v2846, %v2910
        %v2943 = vsel %vm2879, %v2847, %v2911
        %v2944 = vsel %vm2880, %v2848, %v2912
        %v2945 = vsel %vm2881, %v2849, %v2913
        %v2946 = vsel %vm2882, %v2850, %v2914
        %v2947 = vsel %vm2883, %v2851, %v2915
        %v2948 = vsel %vm2884, %v2852, %v2916
        %v2949 = vsel %vm2885, %v2853, %v2917
        %v2950 = vsel %vm2886, %v2854, %v2918
        %v2951 = vsel %vm2887, %v2855, %v2919
        %v2952 = vsel %vm2888, %v2856, %v2920
        %v2953 = vsel %vm2889, %v2857, %v2921
        %v2954 = vsel %vm2890, %v2858, %v2922
        %v2955 = vsel %vm2891, %v2859, %v2923
        %v2956 = vsel %vm2892, %v2860, %v2924
        %v2957 = vsel %vm2893, %v2861, %v2925
        %v2958 = vsel %vm2894, %v2862, %v2926
        %v2959 = vsel %vm2895, %v2863, %v2927
        %v2960 = vsel %vm2896, %v2864, %v2928
        %v2961 = vsel %vm2897, %v2865, %v2929
        %v2962 = vsel %vm2898, %v2866, %v2930
        %v2963 = vsel %vm2899, %v2867, %v2931
        %v2964 = vadd.f32 %v2932, %v598
        %v2965 = vadd.f32 %v2933, %v599
        %v2966 = vadd.f32 %v2934, %v600
        %v2967 = vadd.f32 %v2935, %v601
        %v2968 = vadd.f32 %v2936, %v602
        %v2969 = vadd.f32 %v2937, %v603
        %v2970 = vadd.f32 %v2938, %v604
        %v2971 = vadd.f32 %v2939, %v605
        %v2972 = vadd.f32 %v2940, %v606
        %v2973 = vadd.f32 %v2941, %v607
        %v2974 = vadd.f32 %v2942, %v608
        %v2975 = vadd.f32 %v2943, %v609
        %v2976 = vadd.f32 %v2944, %v610
        %v2977 = vadd.f32 %v2945, %v611
        %v2978 = vadd.f32 %v2946, %v612
        %v2979 = vadd.f32 %v2947, %v613
        %v2980 = vadd.f32 %v2948, %v614
        %v2981 = vadd.f32 %v2949, %v615
        %v2982 = vadd.f32 %v2950, %v616
        %v2983 = vadd.f32 %v2951, %v617
        %v2984 = vadd.f32 %v2952, %v618
        %v2985 = vadd.f32 %v2953, %v619
        %v2986 = vadd.f32 %v2954, %v620
        %v2987 = vadd.f32 %v2955, %v621
        %v2988 = vadd.f32 %v2956, %v622
        %v2989 = vadd.f32 %v2957, %v623
        %v2990 = vadd.f32 %v2958, %v624
        %v2991 = vadd.f32 %v2959, %v625
        %v2992 = vadd.f32 %v2960, %v626
        %v2993 = vadd.f32 %v2961, %v627
        %v2994 = vadd.f32 %v2962, %v628
        %v2995 = vadd.f32 %v2963, %v629
        %s2996 = scalar_lea.vmem [#allocation2], 256
        %v2997 = vld [vmem:[%s2996] sm:$0xff]
        %v2998 = vld [vmem:[%s2996 + $0x8] sm:$0xff]
        %v2999 = vld [vmem:[%s2996 + $0x10] sm:$0xff]
        %v3000 = vld [vmem:[%s2996 + $0x18] sm:$0xff]
        %v3001 = vld [vmem:[%s2996 + $0x20] sm:$0xff]
        %v3002 = vld [vmem:[%s2996 + $0x28] sm:$0xff]
        %v3003 = vld [vmem:[%s2996 + $0x30] sm:$0xff]
        %v3004 = vld [vmem:[%s2996 + $0x38] sm:$0xff]
        %v3005 = vld [vmem:[%s2996 + $0x40] sm:$0xff]
        %v3006 = vld [vmem:[%s2996 + $0x48] sm:$0xff]
        %v3007 = vld [vmem:[%s2996 + $0x50] sm:$0xff]
        %v3008 = vld [vmem:[%s2996 + $0x58] sm:$0xff]
        %v3009 = vld [vmem:[%s2996 + $0x60] sm:$0xff]
        %v3010 = vld [vmem:[%s2996 + $0x68] sm:$0xff]
        %v3011 = vld [vmem:[%s2996 + $0x70] sm:$0xff]
        %v3012 = vld [vmem:[%s2996 + $0x78] sm:$0xff]
        %v3013 = vmax.f32 %v2964, %v2965
        %3014 = vmax.xlane.f32.xlu0 %v3013
        %v3015 = vpop.xlane.xlu0 %3014
        %v3016 = vmax.f32 %v2966, %v2967
        %3017 = vmax.xlane.f32.xlu0 %v3016
        %v3018 = vpop.xlane.xlu0 %3017
        %v3019 = vmax.f32 %v2968, %v2969
        %3020 = vmax.xlane.f32.xlu0 %v3019
        %v3021 = vpop.xlane.xlu0 %3020
        %v3022 = vmax.f32 %v2970, %v2971
        %3023 = vmax.xlane.f32.xlu0 %v3022
        %v3024 = vpop.xlane.xlu0 %3023
        %v3025 = vmax.f32 %v2972, %v2973
        %3026 = vmax.xlane.f32.xlu0 %v3025
        %v3027 = vpop.xlane.xlu0 %3026
        %v3028 = vmax.f32 %v2974, %v2975
        %3029 = vmax.xlane.f32.xlu0 %v3028
        %v3030 = vpop.xlane.xlu0 %3029
        %v3031 = vmax.f32 %v2976, %v2977
        %3032 = vmax.xlane.f32.xlu0 %v3031
        %v3033 = vpop.xlane.xlu0 %3032
        %v3034 = vmax.f32 %v2978, %v2979
        %3035 = vmax.xlane.f32.xlu0 %v3034
        %v3036 = vpop.xlane.xlu0 %3035
        %v3037 = vmax.f32 %v2980, %v2981
        %3038 = vmax.xlane.f32.xlu0 %v3037
        %v3039 = vpop.xlane.xlu0 %3038
        %v3040 = vmax.f32 %v2982, %v2983
        %3041 = vmax.xlane.f32.xlu0 %v3040
        %v3042 = vpop.xlane.xlu0 %3041
        %v3043 = vmax.f32 %v2984, %v2985
        %3044 = vmax.xlane.f32.xlu0 %v3043
        %v3045 = vpop.xlane.xlu0 %3044
        %v3046 = vmax.f32 %v2986, %v2987
        %3047 = vmax.xlane.f32.xlu0 %v3046
        %v3048 = vpop.xlane.xlu0 %3047
        %v3049 = vmax.f32 %v2988, %v2989
        %3050 = vmax.xlane.f32.xlu0 %v3049
        %v3051 = vpop.xlane.xlu0 %3050
        %v3052 = vmax.f32 %v2990, %v2991
        %3053 = vmax.xlane.f32.xlu0 %v3052
        %v3054 = vpop.xlane.xlu0 %3053
        %v3055 = vmax.f32 %v2992, %v2993
        %3056 = vmax.xlane.f32.xlu0 %v3055
        %v3057 = vpop.xlane.xlu0 %3056
        %v3058 = vmax.f32 %v2994, %v2995
        %3059 = vmax.xlane.f32.xlu0 %v3058
        %v3060 = vpop.xlane.xlu0 %3059
        %v3061 = vmax.f32 %v2997, %v3015
        %v3062 = vmax.f32 %v2998, %v3018
        %v3063 = vmax.f32 %v2999, %v3021
        %v3064 = vmax.f32 %v3000, %v3024
        %v3065 = vmax.f32 %v3001, %v3027
        %v3066 = vmax.f32 %v3002, %v3030
        %v3067 = vmax.f32 %v3003, %v3033
        %v3068 = vmax.f32 %v3004, %v3036
        %v3069 = vmax.f32 %v3005, %v3039
        %v3070 = vmax.f32 %v3006, %v3042
        %v3071 = vmax.f32 %v3007, %v3045
        %v3072 = vmax.f32 %v3008, %v3048
        %v3073 = vmax.f32 %v3009, %v3051
        %v3074 = vmax.f32 %v3010, %v3054
        %v3075 = vmax.f32 %v3011, %v3057
        %v3076 = vmax.f32 %v3012, %v3060
        %v3077 = vsub.f32 %v2997, %v3061
        %v3078 = vsub.f32 %v2998, %v3062
        %v3079 = vsub.f32 %v2999, %v3063
        %v3080 = vsub.f32 %v3000, %v3064
        %v3081 = vsub.f32 %v3001, %v3065
        %v3082 = vsub.f32 %v3002, %v3066
        %v3083 = vsub.f32 %v3003, %v3067
        %v3084 = vsub.f32 %v3004, %v3068
        %v3085 = vsub.f32 %v3005, %v3069
        %v3086 = vsub.f32 %v3006, %v3070
        %v3087 = vsub.f32 %v3007, %v3071
        %v3088 = vsub.f32 %v3008, %v3072
        %v3089 = vsub.f32 %v3009, %v3073
        %v3090 = vsub.f32 %v3010, %v3074
        %v3091 = vsub.f32 %v3011, %v3075
        %v3092 = vsub.f32 %v3012, %v3076
        %v3093 = vmul.f32 %v3077, 1.442695
        %v3094 = vpow.pop %v3093
        %v3095 = vmul.f32 %v3078, 1.442695
        %v3096 = vpow.pop %v3095
        %v3097 = vmul.f32 %v3079, 1.442695
        %v3098 = vpow.pop %v3097
        %v3099 = vmul.f32 %v3080, 1.442695
        %v3100 = vpow.pop %v3099
        %v3101 = vmul.f32 %v3081, 1.442695
        %v3102 = vpow.pop %v3101
        %v3103 = vmul.f32 %v3082, 1.442695
        %v3104 = vpow.pop %v3103
        %v3105 = vmul.f32 %v3083, 1.442695
        %v3106 = vpow.pop %v3105
        %v3107 = vmul.f32 %v3084, 1.442695
        %v3108 = vpow.pop %v3107
        %v3109 = vmul.f32 %v3085, 1.442695
        %v3110 = vpow.pop %v3109
        %v3111 = vmul.f32 %v3086, 1.442695
        %v3112 = vpow.pop %v3111
        %v3113 = vmul.f32 %v3087, 1.442695
        %v3114 = vpow.pop %v3113
        %v3115 = vmul.f32 %v3088, 1.442695
        %v3116 = vpow.pop %v3115
        %v3117 = vmul.f32 %v3089, 1.442695
        %v3118 = vpow.pop %v3117
        %v3119 = vmul.f32 %v3090, 1.442695
        %v3120 = vpow.pop %v3119
        %v3121 = vmul.f32 %v3091, 1.442695
        %v3122 = vpow.pop %v3121
        %v3123 = vmul.f32 %v3092, 1.442695
        %v3124 = vpow.pop %v3123
        %3126 = vset.pattern.permute.xlu0 0
        %3127 = vperm.xlu0 %3126, %v3061
        %v3128 = vpop.permute.xlu0 %3127
        %3131 = vset.pattern.permute.xlu0 0
        %3132 = vperm.xlu0 %3131, %v3062
        %v3133 = vpop.permute.xlu0 %3132
        %3136 = vset.pattern.permute.xlu0 0
        %3137 = vperm.xlu0 %3136, %v3063
        %v3138 = vpop.permute.xlu0 %3137
        %3141 = vset.pattern.permute.xlu0 0
        %3142 = vperm.xlu0 %3141, %v3064
        %v3143 = vpop.permute.xlu0 %3142
        %3146 = vset.pattern.permute.xlu0 0
        %3147 = vperm.xlu0 %3146, %v3065
        %v3148 = vpop.permute.xlu0 %3147
        %3151 = vset.pattern.permute.xlu0 0
        %3152 = vperm.xlu0 %3151, %v3066
        %v3153 = vpop.permute.xlu0 %3152
        %3156 = vset.pattern.permute.xlu0 0
        %3157 = vperm.xlu0 %3156, %v3067
        %v3158 = vpop.permute.xlu0 %3157
        %3161 = vset.pattern.permute.xlu0 0
        %3162 = vperm.xlu0 %3161, %v3068
        %v3163 = vpop.permute.xlu0 %3162
        %3166 = vset.pattern.permute.xlu0 0
        %3167 = vperm.xlu0 %3166, %v3069
        %v3168 = vpop.permute.xlu0 %3167
        %3171 = vset.pattern.permute.xlu0 0
        %3172 = vperm.xlu0 %3171, %v3070
        %v3173 = vpop.permute.xlu0 %3172
        %3176 = vset.pattern.permute.xlu0 0
        %3177 = vperm.xlu0 %3176, %v3071
        %v3178 = vpop.permute.xlu0 %3177
        %3181 = vset.pattern.permute.xlu0 0
        %3182 = vperm.xlu0 %3181, %v3072
        %v3183 = vpop.permute.xlu0 %3182
        %3186 = vset.pattern.permute.xlu0 0
        %3187 = vperm.xlu0 %3186, %v3073
        %v3188 = vpop.permute.xlu0 %3187
        %3191 = vset.pattern.permute.xlu0 0
        %3192 = vperm.xlu0 %3191, %v3074
        %v3193 = vpop.permute.xlu0 %3192
        %3196 = vset.pattern.permute.xlu0 0
        %3197 = vperm.xlu0 %3196, %v3075
        %v3198 = vpop.permute.xlu0 %3197
        %3201 = vset.pattern.permute.xlu0 0
        %3202 = vperm.xlu0 %3201, %v3076
        %v3203 = vpop.permute.xlu0 %3202
        %v3205 = vsub.f32 %v2964, %v3128
        %v3206 = vsub.f32 %v2965, %v3128
        %v3207 = vsub.f32 %v2966, %v3133
        %v3208 = vsub.f32 %v2967, %v3133
        %v3209 = vsub.f32 %v2968, %v3138
        %v3210 = vsub.f32 %v2969, %v3138
        %v3211 = vsub.f32 %v2970, %v3143
        %v3212 = vsub.f32 %v2971, %v3143
        %v3213 = vsub.f32 %v2972, %v3148
        %v3214 = vsub.f32 %v2973, %v3148
        %v3215 = vsub.f32 %v2974, %v3153
        %v3216 = vsub.f32 %v2975, %v3153
        %v3217 = vsub.f32 %v2976, %v3158
        %v3218 = vsub.f32 %v2977, %v3158
        %v3219 = vsub.f32 %v2978, %v3163
        %v3220 = vsub.f32 %v2979, %v3163
        %v3221 = vsub.f32 %v2980, %v3168
        %v3222 = vsub.f32 %v2981, %v3168
        %v3223 = vsub.f32 %v2982, %v3173
        %v3224 = vsub.f32 %v2983, %v3173
        %v3225 = vsub.f32 %v2984, %v3178
        %v3226 = vsub.f32 %v2985, %v3178
        %v3227 = vsub.f32 %v2986, %v3183
        %v3228 = vsub.f32 %v2987, %v3183
        %v3229 = vsub.f32 %v2988, %v3188
        %v3230 = vsub.f32 %v2989, %v3188
        %v3231 = vsub.f32 %v2990, %v3193
        %v3232 = vsub.f32 %v2991, %v3193
        %v3233 = vsub.f32 %v2992, %v3198
        %v3234 = vsub.f32 %v2993, %v3198
        %v3235 = vsub.f32 %v2994, %v3203
        %v3236 = vsub.f32 %v2995, %v3203
        %v3237 = vmul.f32 %v3205, 1.442695
        %v3238 = vpow.pop %v3237
        %v3239 = vmul.f32 %v3206, 1.442695
        %v3240 = vpow.pop %v3239
        %v3241 = vmul.f32 %v3207, 1.442695
        %v3242 = vpow.pop %v3241
        %v3243 = vmul.f32 %v3208, 1.442695
        %v3244 = vpow.pop %v3243
        %v3245 = vmul.f32 %v3209, 1.442695
        %v3246 = vpow.pop %v3245
        %v3247 = vmul.f32 %v3210, 1.442695
        %v3248 = vpow.pop %v3247
        %v3249 = vmul.f32 %v3211, 1.442695
        %v3250 = vpow.pop %v3249
        %v3251 = vmul.f32 %v3212, 1.442695
        %v3252 = vpow.pop %v3251
        %v3253 = vmul.f32 %v3213, 1.442695
        %v3254 = vpow.pop %v3253
        %v3255 = vmul.f32 %v3214, 1.442695
        %v3256 = vpow.pop %v3255
        %v3257 = vmul.f32 %v3215, 1.442695
        %v3258 = vpow.pop %v3257
        %v3259 = vmul.f32 %v3216, 1.442695
        %v3260 = vpow.pop %v3259
        %v3261 = vmul.f32 %v3217, 1.442695
        %v3262 = vpow.pop %v3261
        %v3263 = vmul.f32 %v3218, 1.442695
        %v3264 = vpow.pop %v3263
        %v3265 = vmul.f32 %v3219, 1.442695
        %v3266 = vpow.pop %v3265
        %v3267 = vmul.f32 %v3220, 1.442695
        %v3268 = vpow.pop %v3267
        %v3269 = vmul.f32 %v3221, 1.442695
        %v3270 = vpow.pop %v3269
        %v3271 = vmul.f32 %v3222, 1.442695
        %v3272 = vpow.pop %v3271
        %v3273 = vmul.f32 %v3223, 1.442695
        %v3274 = vpow.pop %v3273
        %v3275 = vmul.f32 %v3224, 1.442695
        %v3276 = vpow.pop %v3275
        %v3277 = vmul.f32 %v3225, 1.442695
        %v3278 = vpow.pop %v3277
        %v3279 = vmul.f32 %v3226, 1.442695
        %v3280 = vpow.pop %v3279
        %v3281 = vmul.f32 %v3227, 1.442695
        %v3282 = vpow.pop %v3281
        %v3283 = vmul.f32 %v3228, 1.442695
        %v3284 = vpow.pop %v3283
        %v3285 = vmul.f32 %v3229, 1.442695
        %v3286 = vpow.pop %v3285
        %v3287 = vmul.f32 %v3230, 1.442695
        %v3288 = vpow.pop %v3287
        %v3289 = vmul.f32 %v3231, 1.442695
        %v3290 = vpow.pop %v3289
        %v3291 = vmul.f32 %v3232, 1.442695
        %v3292 = vpow.pop %v3291
        %v3293 = vmul.f32 %v3233, 1.442695
        %v3294 = vpow.pop %v3293
        %v3295 = vmul.f32 %v3234, 1.442695
        %v3296 = vpow.pop %v3295
        %v3297 = vmul.f32 %v3235, 1.442695
        %v3298 = vpow.pop %v3297
        %v3299 = vmul.f32 %v3236, 1.442695
        %v3300 = vpow.pop %v3299
        %s3301 = scalar_lea.vmem [#allocation3], 256
        %v3302 = vld [vmem:[%s3301] sm:$0xff]
        %v3303 = vld [vmem:[%s3301 + $0x8] sm:$0xff]
        %v3304 = vld [vmem:[%s3301 + $0x10] sm:$0xff]
        %v3305 = vld [vmem:[%s3301 + $0x18] sm:$0xff]
        %v3306 = vld [vmem:[%s3301 + $0x20] sm:$0xff]
        %v3307 = vld [vmem:[%s3301 + $0x28] sm:$0xff]
        %v3308 = vld [vmem:[%s3301 + $0x30] sm:$0xff]
        %v3309 = vld [vmem:[%s3301 + $0x38] sm:$0xff]
        %v3310 = vld [vmem:[%s3301 + $0x40] sm:$0xff]
        %v3311 = vld [vmem:[%s3301 + $0x48] sm:$0xff]
        %v3312 = vld [vmem:[%s3301 + $0x50] sm:$0xff]
        %v3313 = vld [vmem:[%s3301 + $0x58] sm:$0xff]
        %v3314 = vld [vmem:[%s3301 + $0x60] sm:$0xff]
        %v3315 = vld [vmem:[%s3301 + $0x68] sm:$0xff]
        %v3316 = vld [vmem:[%s3301 + $0x70] sm:$0xff]
        %v3317 = vld [vmem:[%s3301 + $0x78] sm:$0xff]
        %v3318 = vmul.f32 %v3094, %v3302
        %v3319 = vmul.f32 %v3096, %v3303
        %v3320 = vmul.f32 %v3098, %v3304
        %v3321 = vmul.f32 %v3100, %v3305
        %v3322 = vmul.f32 %v3102, %v3306
        %v3323 = vmul.f32 %v3104, %v3307
        %v3324 = vmul.f32 %v3106, %v3308
        %v3325 = vmul.f32 %v3108, %v3309
        %v3326 = vmul.f32 %v3110, %v3310
        %v3327 = vmul.f32 %v3112, %v3311
        %v3328 = vmul.f32 %v3114, %v3312
        %v3329 = vmul.f32 %v3116, %v3313
        %v3330 = vmul.f32 %v3118, %v3314
        %v3331 = vmul.f32 %v3120, %v3315
        %v3332 = vmul.f32 %v3122, %v3316
        %v3333 = vmul.f32 %v3124, %v3317
        %v3334 = vadd.f32 %v3238, %v3240
        %3335 = vadd.xlane.f32.xlu0 %v3334
        %v3336 = vpop.xlane.xlu0 %3335
        %v3337 = vadd.f32 %v3242, %v3244
        %3338 = vadd.xlane.f32.xlu0 %v3337
        %v3339 = vpop.xlane.xlu0 %3338
        %v3340 = vadd.f32 %v3246, %v3248
        %3341 = vadd.xlane.f32.xlu0 %v3340
        %v3342 = vpop.xlane.xlu0 %3341
        %v3343 = vadd.f32 %v3250, %v3252
        %3344 = vadd.xlane.f32.xlu0 %v3343
        %v3345 = vpop.xlane.xlu0 %3344
        %v3346 = vadd.f32 %v3254, %v3256
        %3347 = vadd.xlane.f32.xlu0 %v3346
        %v3348 = vpop.xlane.xlu0 %3347
        %v3349 = vadd.f32 %v3258, %v3260
        %3350 = vadd.xlane.f32.xlu0 %v3349
        %v3351 = vpop.xlane.xlu0 %3350
        %v3352 = vadd.f32 %v3262, %v3264
        %3353 = vadd.xlane.f32.xlu0 %v3352
        %v3354 = vpop.xlane.xlu0 %3353
        %v3355 = vadd.f32 %v3266, %v3268
        %3356 = vadd.xlane.f32.xlu0 %v3355
        %v3357 = vpop.xlane.xlu0 %3356
        %v3358 = vadd.f32 %v3270, %v3272
        %3359 = vadd.xlane.f32.xlu0 %v3358
        %v3360 = vpop.xlane.xlu0 %3359
        %v3361 = vadd.f32 %v3274, %v3276
        %3362 = vadd.xlane.f32.xlu0 %v3361
        %v3363 = vpop.xlane.xlu0 %3362
        %v3364 = vadd.f32 %v3278, %v3280
        %3365 = vadd.xlane.f32.xlu0 %v3364
        %v3366 = vpop.xlane.xlu0 %3365
        %v3367 = vadd.f32 %v3282, %v3284
        %3368 = vadd.xlane.f32.xlu0 %v3367
        %v3369 = vpop.xlane.xlu0 %3368
        %v3370 = vadd.f32 %v3286, %v3288
        %3371 = vadd.xlane.f32.xlu0 %v3370
        %v3372 = vpop.xlane.xlu0 %3371
        %v3373 = vadd.f32 %v3290, %v3292
        %3374 = vadd.xlane.f32.xlu0 %v3373
        %v3375 = vpop.xlane.xlu0 %3374
        %v3376 = vadd.f32 %v3294, %v3296
        %3377 = vadd.xlane.f32.xlu0 %v3376
        %v3378 = vpop.xlane.xlu0 %3377
        %v3379 = vadd.f32 %v3298, %v3300
        %3380 = vadd.xlane.f32.xlu0 %v3379
        %v3381 = vpop.xlane.xlu0 %3380
        %v3382 = vadd.f32 %v3318, %v3336
        %v3383 = vadd.f32 %v3319, %v3339
        %v3384 = vadd.f32 %v3320, %v3342
        %v3385 = vadd.f32 %v3321, %v3345
        %v3386 = vadd.f32 %v3322, %v3348
        %v3387 = vadd.f32 %v3323, %v3351
        %v3388 = vadd.f32 %v3324, %v3354
        %v3389 = vadd.f32 %v3325, %v3357
        %v3390 = vadd.f32 %v3326, %v3360
        %v3391 = vadd.f32 %v3327, %v3363
        %v3392 = vadd.f32 %v3328, %v3366
        %v3393 = vadd.f32 %v3329, %v3369
        %v3394 = vadd.f32 %v3330, %v3372
        %v3395 = vadd.f32 %v3331, %v3375
        %v3396 = vadd.f32 %v3332, %v3378
        %v3397 = vadd.f32 %v3333, %v3381
        %3398 = vst.msk [vmem:[%s3301] sm:$0xff] %vm1294, %v3382
        %3399 = vst.msk [vmem:[%s3301 + $0x8] sm:$0xff] %vm1294, %v3383
        %3400 = vst.msk [vmem:[%s3301 + $0x10] sm:$0xff] %vm1294, %v3384
        %3401 = vst.msk [vmem:[%s3301 + $0x18] sm:$0xff] %vm1294, %v3385
        %3402 = vst.msk [vmem:[%s3301 + $0x20] sm:$0xff] %vm1294, %v3386
        %3403 = vst.msk [vmem:[%s3301 + $0x28] sm:$0xff] %vm1294, %v3387
        %3404 = vst.msk [vmem:[%s3301 + $0x30] sm:$0xff] %vm1294, %v3388
        %3405 = vst.msk [vmem:[%s3301 + $0x38] sm:$0xff] %vm1294, %v3389
        %3406 = vst.msk [vmem:[%s3301 + $0x40] sm:$0xff] %vm1294, %v3390
        %3407 = vst.msk [vmem:[%s3301 + $0x48] sm:$0xff] %vm1294, %v3391
        %3408 = vst.msk [vmem:[%s3301 + $0x50] sm:$0xff] %vm1294, %v3392
        %3409 = vst.msk [vmem:[%s3301 + $0x58] sm:$0xff] %vm1294, %v3393
        %3410 = vst.msk [vmem:[%s3301 + $0x60] sm:$0xff] %vm1294, %v3394
        %3411 = vst.msk [vmem:[%s3301 + $0x68] sm:$0xff] %vm1294, %v3395
        %3412 = vst.msk [vmem:[%s3301 + $0x70] sm:$0xff] %vm1294, %v3396
        %3413 = vst.msk [vmem:[%s3301 + $0x78] sm:$0xff] %vm1294, %v3397
        %s3414 = scalar_lea.vmem [#allocation4], 256
        %v3415 = vld [vmem:[%s3414] sm:$0xff]
        %v3416 = vld [vmem:[%s3414 + $0x8] sm:$0xff]
        %v3417 = vld [vmem:[%s3414 + $0x10] sm:$0xff]
        %v3418 = vld [vmem:[%s3414 + $0x18] sm:$0xff]
        %v3419 = vld [vmem:[%s3414 + $0x20] sm:$0xff]
        %v3420 = vld [vmem:[%s3414 + $0x28] sm:$0xff]
        %v3421 = vld [vmem:[%s3414 + $0x30] sm:$0xff]
        %v3422 = vld [vmem:[%s3414 + $0x38] sm:$0xff]
        %v3423 = vld [vmem:[%s3414 + $0x40] sm:$0xff]
        %v3424 = vld [vmem:[%s3414 + $0x48] sm:$0xff]
        %v3425 = vld [vmem:[%s3414 + $0x50] sm:$0xff]
        %v3426 = vld [vmem:[%s3414 + $0x58] sm:$0xff]
        %v3427 = vld [vmem:[%s3414 + $0x60] sm:$0xff]
        %v3428 = vld [vmem:[%s3414 + $0x68] sm:$0xff]
        %v3429 = vld [vmem:[%s3414 + $0x70] sm:$0xff]
        %v3430 = vld [vmem:[%s3414 + $0x78] sm:$0xff]
        %3432 = vset.pattern.permute.xlu0 0
        %3433 = vperm.xlu0 %3432, %v3094
        %v3434 = vpop.permute.xlu0 %3433
        %3437 = vset.pattern.permute.xlu0 0
        %3438 = vperm.xlu0 %3437, %v3096
        %v3439 = vpop.permute.xlu0 %3438
        %3442 = vset.pattern.permute.xlu0 0
        %3443 = vperm.xlu0 %3442, %v3098
        %v3444 = vpop.permute.xlu0 %3443
        %3447 = vset.pattern.permute.xlu0 0
        %3448 = vperm.xlu0 %3447, %v3100
        %v3449 = vpop.permute.xlu0 %3448
        %3452 = vset.pattern.permute.xlu0 0
        %3453 = vperm.xlu0 %3452, %v3102
        %v3454 = vpop.permute.xlu0 %3453
        %3457 = vset.pattern.permute.xlu0 0
        %3458 = vperm.xlu0 %3457, %v3104
        %v3459 = vpop.permute.xlu0 %3458
        %3462 = vset.pattern.permute.xlu0 0
        %3463 = vperm.xlu0 %3462, %v3106
        %v3464 = vpop.permute.xlu0 %3463
        %3467 = vset.pattern.permute.xlu0 0
        %3468 = vperm.xlu0 %3467, %v3108
        %v3469 = vpop.permute.xlu0 %3468
        %3472 = vset.pattern.permute.xlu0 0
        %3473 = vperm.xlu0 %3472, %v3110
        %v3474 = vpop.permute.xlu0 %3473
        %3477 = vset.pattern.permute.xlu0 0
        %3478 = vperm.xlu0 %3477, %v3112
        %v3479 = vpop.permute.xlu0 %3478
        %3482 = vset.pattern.permute.xlu0 0
        %3483 = vperm.xlu0 %3482, %v3114
        %v3484 = vpop.permute.xlu0 %3483
        %3487 = vset.pattern.permute.xlu0 0
        %3488 = vperm.xlu0 %3487, %v3116
        %v3489 = vpop.permute.xlu0 %3488
        %3492 = vset.pattern.permute.xlu0 0
        %3493 = vperm.xlu0 %3492, %v3118
        %v3494 = vpop.permute.xlu0 %3493
        %3497 = vset.pattern.permute.xlu0 0
        %3498 = vperm.xlu0 %3497, %v3120
        %v3499 = vpop.permute.xlu0 %3498
        %3502 = vset.pattern.permute.xlu0 0
        %3503 = vperm.xlu0 %3502, %v3122
        %v3504 = vpop.permute.xlu0 %3503
        %3507 = vset.pattern.permute.xlu0 0
        %3508 = vperm.xlu0 %3507, %v3124
        %v3509 = vpop.permute.xlu0 %3508
        %v3511 = vmul.f32 %v3434, %v3415
        %v3512 = vmul.f32 %v3439, %v3416
        %v3513 = vmul.f32 %v3444, %v3417
        %v3514 = vmul.f32 %v3449, %v3418
        %v3515 = vmul.f32 %v3454, %v3419
        %v3516 = vmul.f32 %v3459, %v3420
        %v3517 = vmul.f32 %v3464, %v3421
        %v3518 = vmul.f32 %v3469, %v3422
        %v3519 = vmul.f32 %v3474, %v3423
        %v3520 = vmul.f32 %v3479, %v3424
        %v3521 = vmul.f32 %v3484, %v3425
        %v3522 = vmul.f32 %v3489, %v3426
        %v3523 = vmul.f32 %v3494, %v3427
        %v3524 = vmul.f32 %v3499, %v3428
        %v3525 = vmul.f32 %v3504, %v3429
        %v3526 = vmul.f32 %v3509, %v3430
        %v3527 = vpack.c.bf16 %v3242, %v3238
        %v3528 = vpack.c.bf16 %v3244, %v3240
        %v3529 = vpack.c.bf16 %v3250, %v3246
        %v3530 = vpack.c.bf16 %v3252, %v3248
        %v3531 = vpack.c.bf16 %v3258, %v3254
        %v3532 = vpack.c.bf16 %v3260, %v3256
        %v3533 = vpack.c.bf16 %v3266, %v3262
        %v3534 = vpack.c.bf16 %v3268, %v3264
        %v3535 = vpack.c.bf16 %v3274, %v3270
        %v3536 = vpack.c.bf16 %v3276, %v3272
        %v3537 = vpack.c.bf16 %v3282, %v3278
        %v3538 = vpack.c.bf16 %v3284, %v3280
        %v3539 = vpack.c.bf16 %v3290, %v3286
        %v3540 = vpack.c.bf16 %v3292, %v3288
        %v3541 = vpack.c.bf16 %v3298, %v3294
        %v3542 = vpack.c.bf16 %v3300, %v3296
        %s3543 = scalar_lea.vmem %s281, 256
        %v3544 = vld [vmem:[%s3543] sm:$0xf]
        %v3545 = vld [vmem:[%s3543 + $0x4] sm:$0xf]
        %v3546 = vld [vmem:[%s3543 + $0x8] sm:$0xf]
        %v3547 = vld [vmem:[%s3543 + $0xc] sm:$0xf]
        %v3548 = vld [vmem:[%s3543 + $0x10] sm:$0xf]
        %v3549 = vld [vmem:[%s3543 + $0x14] sm:$0xf]
        %v3550 = vld [vmem:[%s3543 + $0x18] sm:$0xf]
        %v3551 = vld [vmem:[%s3543 + $0x1c] sm:$0xf]
        %v3552 = vld [vmem:[%s3543 + $0x20] sm:$0xf]
        %v3553 = vld [vmem:[%s3543 + $0x24] sm:$0xf]
        %v3554 = vld [vmem:[%s3543 + $0x28] sm:$0xf]
        %v3555 = vld [vmem:[%s3543 + $0x2c] sm:$0xf]
        %v3556 = vld [vmem:[%s3543 + $0x30] sm:$0xf]
        %v3557 = vld [vmem:[%s3543 + $0x34] sm:$0xf]
        %v3558 = vld [vmem:[%s3543 + $0x38] sm:$0xf]
        %v3559 = vld [vmem:[%s3543 + $0x3c] sm:$0xf]
        %v3560 = vld [vmem:[%s3543 + $0x40] sm:$0xf]
        %v3561 = vld [vmem:[%s3543 + $0x44] sm:$0xf]
        %v3562 = vld [vmem:[%s3543 + $0x48] sm:$0xf]
        %v3563 = vld [vmem:[%s3543 + $0x4c] sm:$0xf]
        %v3564 = vld [vmem:[%s3543 + $0x50] sm:$0xf]
        %v3565 = vld [vmem:[%s3543 + $0x54] sm:$0xf]
        %v3566 = vld [vmem:[%s3543 + $0x58] sm:$0xf]
        %v3567 = vld [vmem:[%s3543 + $0x5c] sm:$0xf]
        %v3568 = vld [vmem:[%s3543 + $0x60] sm:$0xf]
        %v3569 = vld [vmem:[%s3543 + $0x64] sm:$0xf]
        %v3570 = vld [vmem:[%s3543 + $0x68] sm:$0xf]
        %v3571 = vld [vmem:[%s3543 + $0x6c] sm:$0xf]
        %v3572 = vld [vmem:[%s3543 + $0x70] sm:$0xf]
        %v3573 = vld [vmem:[%s3543 + $0x74] sm:$0xf]
        %v3574 = vld [vmem:[%s3543 + $0x78] sm:$0xf]
        %v3575 = vld [vmem:[%s3543 + $0x7c] sm:$0xf]
        %v3608 = vunpack.c.l.b16 %v3544
        %v3609 = vunpack.c.l.b16 %v3545
        %v3610 = vunpack.c.l.b16 %v3546
        %v3611 = vunpack.c.l.b16 %v3547
        %v3612 = vunpack.c.l.b16 %v3548
        %v3613 = vunpack.c.l.b16 %v3549
        %v3614 = vunpack.c.l.b16 %v3550
        %v3615 = vunpack.c.l.b16 %v3551
        %v3616 = vunpack.c.l.b16 %v3552
        %v3617 = vunpack.c.l.b16 %v3553
        %v3618 = vunpack.c.l.b16 %v3554
        %v3619 = vunpack.c.l.b16 %v3555
        %v3620 = vunpack.c.l.b16 %v3556
        %v3621 = vunpack.c.l.b16 %v3557
        %v3622 = vunpack.c.l.b16 %v3558
        %v3623 = vunpack.c.l.b16 %v3559
        %v3624 = vunpack.c.l.b16 %v3560
        %v3625 = vunpack.c.l.b16 %v3561
        %v3626 = vunpack.c.l.b16 %v3562
        %v3627 = vunpack.c.l.b16 %v3563
        %v3628 = vunpack.c.l.b16 %v3564
        %v3629 = vunpack.c.l.b16 %v3565
        %v3630 = vunpack.c.l.b16 %v3566
        %v3631 = vunpack.c.l.b16 %v3567
        %v3632 = vunpack.c.l.b16 %v3568
        %v3633 = vunpack.c.l.b16 %v3569
        %v3634 = vunpack.c.l.b16 %v3570
        %v3635 = vunpack.c.l.b16 %v3571
        %v3636 = vunpack.c.l.b16 %v3572
        %v3637 = vunpack.c.l.b16 %v3573
        %v3638 = vunpack.c.l.b16 %v3574
        %v3639 = vunpack.c.l.b16 %v3575
        %v3640 = vpack.c.b16 %v3609, %v3608
        %v3641 = vpack.c.b16 %v3611, %v3610
        %v3642 = vpack.c.b16 %v3613, %v3612
        %v3643 = vpack.c.b16 %v3615, %v3614
        %v3644 = vpack.c.b16 %v3617, %v3616
        %v3645 = vpack.c.b16 %v3619, %v3618
        %v3646 = vpack.c.b16 %v3621, %v3620
        %v3647 = vpack.c.b16 %v3623, %v3622
        %v3648 = vpack.c.b16 %v3625, %v3624
        %v3649 = vpack.c.b16 %v3627, %v3626
        %v3650 = vpack.c.b16 %v3629, %v3628
        %v3651 = vpack.c.b16 %v3631, %v3630
        %v3652 = vpack.c.b16 %v3633, %v3632
        %v3653 = vpack.c.b16 %v3635, %v3634
        %v3654 = vpack.c.b16 %v3637, %v3636
        %v3655 = vpack.c.b16 %v3639, %v3638
        %3672 = vmatpush.bf16.msra.mxu0 %v3647
        %3673 = vmatpush.bf16.msra.mxu0 %v3646
        %3674 = vmatpush.bf16.msra.mxu0 %v3645
        %3675 = vmatpush.bf16.msra.mxu0 %v3644
        %3676 = vmatpush.bf16.msra.mxu0 %v3643
        %3677 = vmatpush.bf16.msra.mxu0 %v3642
        %3678 = vmatpush.bf16.msra.mxu0 %v3641
        %3679 = vmatpush.bf16.msra.mxu0 %v3640
        %3680 = vmatmul.bf16.gmra.mxu0 %v3527
        %v3681 = vpop.f32.mrf.mxu0
        %v3682 = vadd.f32 0.0, %v3681
        %v3683 = vpop.f32.mrf.mxu0
        %v3684 = vadd.f32 0.0, %v3683
        %3685 = vmatmul.bf16.gmra.mxu0 %v3529
        %v3686 = vpop.f32.mrf.mxu0
        %v3687 = vadd.f32 0.0, %v3686
        %v3688 = vpop.f32.mrf.mxu0
        %v3689 = vadd.f32 0.0, %v3688
        %3690 = vmatmul.bf16.gmra.mxu0 %v3531
        %v3691 = vpop.f32.mrf.mxu0
        %v3692 = vadd.f32 0.0, %v3691
        %v3693 = vpop.f32.mrf.mxu0
        %v3694 = vadd.f32 0.0, %v3693
        %3695 = vmatmul.bf16.gmra.mxu0 %v3533
        %v3696 = vpop.f32.mrf.mxu0
        %v3697 = vadd.f32 0.0, %v3696
        %v3698 = vpop.f32.mrf.mxu0
        %v3699 = vadd.f32 0.0, %v3698
        %3700 = vmatmul.bf16.gmra.mxu0 %v3535
        %v3701 = vpop.f32.mrf.mxu0
        %v3702 = vadd.f32 0.0, %v3701
        %v3703 = vpop.f32.mrf.mxu0
        %v3704 = vadd.f32 0.0, %v3703
        %3705 = vmatmul.bf16.gmra.mxu0 %v3537
        %v3706 = vpop.f32.mrf.mxu0
        %v3707 = vadd.f32 0.0, %v3706
        %v3708 = vpop.f32.mrf.mxu0
        %v3709 = vadd.f32 0.0, %v3708
        %3710 = vmatmul.bf16.gmra.mxu0 %v3539
        %v3711 = vpop.f32.mrf.mxu0
        %v3712 = vadd.f32 0.0, %v3711
        %v3713 = vpop.f32.mrf.mxu0
        %v3714 = vadd.f32 0.0, %v3713
        %3715 = vmatmul.bf16.gmra.mxu0 %v3541
        %v3716 = vpop.f32.mrf.mxu0
        %v3717 = vadd.f32 0.0, %v3716
        %v3718 = vpop.f32.mrf.mxu0
        %v3719 = vadd.f32 0.0, %v3718
        %3720 = vdwg.mxu0
        %3721 = vmatpush.bf16.msra.mxu0 %v3655
        %3722 = vmatpush.bf16.msra.mxu0 %v3654
        %3723 = vmatpush.bf16.msra.mxu0 %v3653
        %3724 = vmatpush.bf16.msra.mxu0 %v3652
        %3725 = vmatpush.bf16.msra.mxu0 %v3651
        %3726 = vmatpush.bf16.msra.mxu0 %v3650
        %3727 = vmatpush.bf16.msra.mxu0 %v3649
        %3728 = vmatpush.bf16.msra.mxu0 %v3648
        %3729 = vmatmul.bf16.gmra.mxu0 %v3528
        %v3730 = vpop.f32.mrf.mxu0
        %v3731 = vadd.f32 %v3682, %v3730
        %v3732 = vpop.f32.mrf.mxu0
        %v3733 = vadd.f32 %v3684, %v3732
        %3734 = vmatmul.bf16.gmra.mxu0 %v3530
        %v3735 = vpop.f32.mrf.mxu0
        %v3736 = vadd.f32 %v3687, %v3735
        %v3737 = vpop.f32.mrf.mxu0
        %v3738 = vadd.f32 %v3689, %v3737
        %3739 = vmatmul.bf16.gmra.mxu0 %v3532
        %v3740 = vpop.f32.mrf.mxu0
        %v3741 = vadd.f32 %v3692, %v3740
        %v3742 = vpop.f32.mrf.mxu0
        %v3743 = vadd.f32 %v3694, %v3742
        %3744 = vmatmul.bf16.gmra.mxu0 %v3534
        %v3745 = vpop.f32.mrf.mxu0
        %v3746 = vadd.f32 %v3697, %v3745
        %v3747 = vpop.f32.mrf.mxu0
        %v3748 = vadd.f32 %v3699, %v3747
        %3749 = vmatmul.bf16.gmra.mxu0 %v3536
        %v3750 = vpop.f32.mrf.mxu0
        %v3751 = vadd.f32 %v3702, %v3750
        %v3752 = vpop.f32.mrf.mxu0
        %v3753 = vadd.f32 %v3704, %v3752
        %3754 = vmatmul.bf16.gmra.mxu0 %v3538
        %v3755 = vpop.f32.mrf.mxu0
        %v3756 = vadd.f32 %v3707, %v3755
        %v3757 = vpop.f32.mrf.mxu0
        %v3758 = vadd.f32 %v3709, %v3757
        %3759 = vmatmul.bf16.gmra.mxu0 %v3540
        %v3760 = vpop.f32.mrf.mxu0
        %v3761 = vadd.f32 %v3712, %v3760
        %v3762 = vpop.f32.mrf.mxu0
        %v3763 = vadd.f32 %v3714, %v3762
        %3764 = vmatmul.bf16.gmra.mxu0 %v3542
        %v3765 = vpop.f32.mrf.mxu0
        %v3766 = vadd.f32 %v3717, %v3765
        %v3767 = vpop.f32.mrf.mxu0
        %v3768 = vadd.f32 %v3719, %v3767
        %3769 = vdwg.mxu0
        %v3770 = vadd.f32 %v3511, %v3731
        %v3771 = vadd.f32 %v3512, %v3733
        %v3772 = vadd.f32 %v3513, %v3736
        %v3773 = vadd.f32 %v3514, %v3738
        %v3774 = vadd.f32 %v3515, %v3741
        %v3775 = vadd.f32 %v3516, %v3743
        %v3776 = vadd.f32 %v3517, %v3746
        %v3777 = vadd.f32 %v3518, %v3748
        %v3778 = vadd.f32 %v3519, %v3751
        %v3779 = vadd.f32 %v3520, %v3753
        %v3780 = vadd.f32 %v3521, %v3756
        %v3781 = vadd.f32 %v3522, %v3758
        %v3782 = vadd.f32 %v3523, %v3761
        %v3783 = vadd.f32 %v3524, %v3763
        %v3784 = vadd.f32 %v3525, %v3766
        %v3785 = vadd.f32 %v3526, %v3768
        %3786 = vst.msk [vmem:[%s3414] sm:$0xff] %vm1681, %v3770
        %3787 = vst.msk [vmem:[%s3414 + $0x8] sm:$0xff] %vm1681, %v3771
        %3788 = vst.msk [vmem:[%s3414 + $0x10] sm:$0xff] %vm1681, %v3772
        %3789 = vst.msk [vmem:[%s3414 + $0x18] sm:$0xff] %vm1681, %v3773
        %3790 = vst.msk [vmem:[%s3414 + $0x20] sm:$0xff] %vm1681, %v3774
        %3791 = vst.msk [vmem:[%s3414 + $0x28] sm:$0xff] %vm1681, %v3775
        %3792 = vst.msk [vmem:[%s3414 + $0x30] sm:$0xff] %vm1681, %v3776
        %3793 = vst.msk [vmem:[%s3414 + $0x38] sm:$0xff] %vm1681, %v3777
        %3794 = vst.msk [vmem:[%s3414 + $0x40] sm:$0xff] %vm1681, %v3778
        %3795 = vst.msk [vmem:[%s3414 + $0x48] sm:$0xff] %vm1681, %v3779
        %3796 = vst.msk [vmem:[%s3414 + $0x50] sm:$0xff] %vm1681, %v3780
        %3797 = vst.msk [vmem:[%s3414 + $0x58] sm:$0xff] %vm1681, %v3781
        %3798 = vst.msk [vmem:[%s3414 + $0x60] sm:$0xff] %vm1681, %v3782
        %3799 = vst.msk [vmem:[%s3414 + $0x68] sm:$0xff] %vm1681, %v3783
        %3800 = vst.msk [vmem:[%s3414 + $0x70] sm:$0xff] %vm1681, %v3784
        %3801 = vst.msk [vmem:[%s3414 + $0x78] sm:$0xff] %vm1681, %v3785
        %3802 = vst.msk [vmem:[%s2996] sm:$0xff] %vm1294, %v3061
        %3803 = vst.msk [vmem:[%s2996 + $0x8] sm:$0xff] %vm1294, %v3062
        %3804 = vst.msk [vmem:[%s2996 + $0x10] sm:$0xff] %vm1294, %v3063
        %3805 = vst.msk [vmem:[%s2996 + $0x18] sm:$0xff] %vm1294, %v3064
        %3806 = vst.msk [vmem:[%s2996 + $0x20] sm:$0xff] %vm1294, %v3065
        %3807 = vst.msk [vmem:[%s2996 + $0x28] sm:$0xff] %vm1294, %v3066
        %3808 = vst.msk [vmem:[%s2996 + $0x30] sm:$0xff] %vm1294, %v3067
        %3809 = vst.msk [vmem:[%s2996 + $0x38] sm:$0xff] %vm1294, %v3068
        %3810 = vst.msk [vmem:[%s2996 + $0x40] sm:$0xff] %vm1294, %v3069
        %3811 = vst.msk [vmem:[%s2996 + $0x48] sm:$0xff] %vm1294, %v3070
        %3812 = vst.msk [vmem:[%s2996 + $0x50] sm:$0xff] %vm1294, %v3071
        %3813 = vst.msk [vmem:[%s2996 + $0x58] sm:$0xff] %vm1294, %v3072
        %3814 = vst.msk [vmem:[%s2996 + $0x60] sm:$0xff] %vm1294, %v3073
        %3815 = vst.msk [vmem:[%s2996 + $0x68] sm:$0xff] %vm1294, %v3074
        %3816 = vst.msk [vmem:[%s2996 + $0x70] sm:$0xff] %vm1294, %v3075
        %3817 = vst.msk [vmem:[%s2996 + $0x78] sm:$0xff] %vm1294, %v3076
        %3818 = vset.pattern.permute.xlu0 3
        %3819 = vperm.xlu0 %3818, %v630
        %v3820 = vpop.permute.xlu0 %3819
        %3822 = vset.pattern.permute.xlu0 3
        %3823 = vperm.xlu0 %3822, %v631
        %v3824 = vpop.permute.xlu0 %3823
        %3826 = vset.pattern.permute.xlu0 3
        %3827 = vperm.xlu0 %3826, %v632
        %v3828 = vpop.permute.xlu0 %3827
        %3830 = vset.pattern.permute.xlu0 3
        %3831 = vperm.xlu0 %3830, %v633
        %v3832 = vpop.permute.xlu0 %3831
        %3834 = vset.pattern.permute.xlu0 3
        %3835 = vperm.xlu0 %3834, %v634
        %v3836 = vpop.permute.xlu0 %3835
        %3838 = vset.pattern.permute.xlu0 3
        %3839 = vperm.xlu0 %3838, %v635
        %v3840 = vpop.permute.xlu0 %3839
        %3842 = vset.pattern.permute.xlu0 3
        %3843 = vperm.xlu0 %3842, %v636
        %v3844 = vpop.permute.xlu0 %3843
        %3846 = vset.pattern.permute.xlu0 3
        %3847 = vperm.xlu0 %3846, %v637
        %v3848 = vpop.permute.xlu0 %3847
        %3850 = vset.pattern.permute.xlu0 3
        %3851 = vperm.xlu0 %3850, %v638
        %v3852 = vpop.permute.xlu0 %3851
        %3854 = vset.pattern.permute.xlu0 3
        %3855 = vperm.xlu0 %3854, %v639
        %v3856 = vpop.permute.xlu0 %3855
        %3858 = vset.pattern.permute.xlu0 3
        %3859 = vperm.xlu0 %3858, %v640
        %v3860 = vpop.permute.xlu0 %3859
        %3862 = vset.pattern.permute.xlu0 3
        %3863 = vperm.xlu0 %3862, %v641
        %v3864 = vpop.permute.xlu0 %3863
        %3866 = vset.pattern.permute.xlu0 3
        %3867 = vperm.xlu0 %3866, %v642
        %v3868 = vpop.permute.xlu0 %3867
        %3870 = vset.pattern.permute.xlu0 3
        %3871 = vperm.xlu0 %3870, %v643
        %v3872 = vpop.permute.xlu0 %3871
        %3874 = vset.pattern.permute.xlu0 3
        %3875 = vperm.xlu0 %3874, %v644
        %v3876 = vpop.permute.xlu0 %3875
        %3878 = vset.pattern.permute.xlu0 3
        %3879 = vperm.xlu0 %3878, %v645
        %v3880 = vpop.permute.xlu0 %3879
        %v3882 = vperm.slane %v646, 3
        %v3883 = vperm.slane %v646, 7
        %v3886 = vperm.slane %v3882, 3
        %v3887 = vperm.slane %v3883, 3
        %v3888 = vadd.f32 %v3820, %v3886
        %v3889 = vadd.f32 %v3820, %v3887
        %v3890 = vadd.f32 %v3824, %v3886
        %v3891 = vadd.f32 %v3824, %v3887
        %v3892 = vadd.f32 %v3828, %v3886
        %v3893 = vadd.f32 %v3828, %v3887
        %v3894 = vadd.f32 %v3832, %v3886
        %v3895 = vadd.f32 %v3832, %v3887
        %v3896 = vadd.f32 %v3836, %v3886
        %v3897 = vadd.f32 %v3836, %v3887
        %v3898 = vadd.f32 %v3840, %v3886
        %v3899 = vadd.f32 %v3840, %v3887
        %v3900 = vadd.f32 %v3844, %v3886
        %v3901 = vadd.f32 %v3844, %v3887
        %v3902 = vadd.f32 %v3848, %v3886
        %v3903 = vadd.f32 %v3848, %v3887
        %v3904 = vadd.f32 %v3852, %v3886
        %v3905 = vadd.f32 %v3852, %v3887
        %v3906 = vadd.f32 %v3856, %v3886
        %v3907 = vadd.f32 %v3856, %v3887
        %v3908 = vadd.f32 %v3860, %v3886
        %v3909 = vadd.f32 %v3860, %v3887
        %v3910 = vadd.f32 %v3864, %v3886
        %v3911 = vadd.f32 %v3864, %v3887
        %v3912 = vadd.f32 %v3868, %v3886
        %v3913 = vadd.f32 %v3868, %v3887
        %v3914 = vadd.f32 %v3872, %v3886
        %v3915 = vadd.f32 %v3872, %v3887
        %v3916 = vadd.f32 %v3876, %v3886
        %v3917 = vadd.f32 %v3876, %v3887
        %v3918 = vadd.f32 %v3880, %v3886
        %v3919 = vadd.f32 %v3880, %v3887
        %vm3920 = vcmp.gt.f32.partialorder %v3888, 0.0
        %vm3921 = vcmp.gt.f32.partialorder %v3889, 0.0
        %vm3922 = vcmp.gt.f32.partialorder %v3890, 0.0
        %vm3923 = vcmp.gt.f32.partialorder %v3891, 0.0
        %vm3924 = vcmp.gt.f32.partialorder %v3892, 0.0
        %vm3925 = vcmp.gt.f32.partialorder %v3893, 0.0
        %vm3926 = vcmp.gt.f32.partialorder %v3894, 0.0
        %vm3927 = vcmp.gt.f32.partialorder %v3895, 0.0
        %vm3928 = vcmp.gt.f32.partialorder %v3896, 0.0
        %vm3929 = vcmp.gt.f32.partialorder %v3897, 0.0
        %vm3930 = vcmp.gt.f32.partialorder %v3898, 0.0
        %vm3931 = vcmp.gt.f32.partialorder %v3899, 0.0
        %vm3932 = vcmp.gt.f32.partialorder %v3900, 0.0
        %vm3933 = vcmp.gt.f32.partialorder %v3901, 0.0
        %vm3934 = vcmp.gt.f32.partialorder %v3902, 0.0
        %vm3935 = vcmp.gt.f32.partialorder %v3903, 0.0
        %vm3936 = vcmp.gt.f32.partialorder %v3904, 0.0
        %vm3937 = vcmp.gt.f32.partialorder %v3905, 0.0
        %vm3938 = vcmp.gt.f32.partialorder %v3906, 0.0
        %vm3939 = vcmp.gt.f32.partialorder %v3907, 0.0
        %vm3940 = vcmp.gt.f32.partialorder %v3908, 0.0
        %vm3941 = vcmp.gt.f32.partialorder %v3909, 0.0
        %vm3942 = vcmp.gt.f32.partialorder %v3910, 0.0
        %vm3943 = vcmp.gt.f32.partialorder %v3911, 0.0
        %vm3944 = vcmp.gt.f32.partialorder %v3912, 0.0
        %vm3945 = vcmp.gt.f32.partialorder %v3913, 0.0
        %vm3946 = vcmp.gt.f32.partialorder %v3914, 0.0
        %vm3947 = vcmp.gt.f32.partialorder %v3915, 0.0
        %vm3948 = vcmp.gt.f32.partialorder %v3916, 0.0
        %vm3949 = vcmp.gt.f32.partialorder %v3917, 0.0
        %vm3950 = vcmp.gt.f32.partialorder %v3918, 0.0
        %vm3951 = vcmp.gt.f32.partialorder %v3919, 0.0
        %v3952 = vmul.f32 %v3888, 0.01
        %v3953 = vmul.f32 %v3889, 0.01
        %v3954 = vmul.f32 %v3890, 0.01
        %v3955 = vmul.f32 %v3891, 0.01
        %v3956 = vmul.f32 %v3892, 0.01
        %v3957 = vmul.f32 %v3893, 0.01
        %v3958 = vmul.f32 %v3894, 0.01
        %v3959 = vmul.f32 %v3895, 0.01
        %v3960 = vmul.f32 %v3896, 0.01
        %v3961 = vmul.f32 %v3897, 0.01
        %v3962 = vmul.f32 %v3898, 0.01
        %v3963 = vmul.f32 %v3899, 0.01
        %v3964 = vmul.f32 %v3900, 0.01
        %v3965 = vmul.f32 %v3901, 0.01
        %v3966 = vmul.f32 %v3902, 0.01
        %v3967 = vmul.f32 %v3903, 0.01
        %v3968 = vmul.f32 %v3904, 0.01
        %v3969 = vmul.f32 %v3905, 0.01
        %v3970 = vmul.f32 %v3906, 0.01
        %v3971 = vmul.f32 %v3907, 0.01
        %v3972 = vmul.f32 %v3908, 0.01
        %v3973 = vmul.f32 %v3909, 0.01
        %v3974 = vmul.f32 %v3910, 0.01
        %v3975 = vmul.f32 %v3911, 0.01
        %v3976 = vmul.f32 %v3912, 0.01
        %v3977 = vmul.f32 %v3913, 0.01
        %v3978 = vmul.f32 %v3914, 0.01
        %v3979 = vmul.f32 %v3915, 0.01
        %v3980 = vmul.f32 %v3916, 0.01
        %v3981 = vmul.f32 %v3917, 0.01
        %v3982 = vmul.f32 %v3918, 0.01
        %v3983 = vmul.f32 %v3919, 0.01
        %v3984 = vsel %vm3920, %v3888, %v3952
        %v3985 = vsel %vm3921, %v3889, %v3953
        %v3986 = vsel %vm3922, %v3890, %v3954
        %v3987 = vsel %vm3923, %v3891, %v3955
        %v3988 = vsel %vm3924, %v3892, %v3956
        %v3989 = vsel %vm3925, %v3893, %v3957
        %v3990 = vsel %vm3926, %v3894, %v3958
        %v3991 = vsel %vm3927, %v3895, %v3959
        %v3992 = vsel %vm3928, %v3896, %v3960
        %v3993 = vsel %vm3929, %v3897, %v3961
        %v3994 = vsel %vm3930, %v3898, %v3962
        %v3995 = vsel %vm3931, %v3899, %v3963
        %v3996 = vsel %vm3932, %v3900, %v3964
        %v3997 = vsel %vm3933, %v3901, %v3965
        %v3998 = vsel %vm3934, %v3902, %v3966
        %v3999 = vsel %vm3935, %v3903, %v3967
        %v4000 = vsel %vm3936, %v3904, %v3968
        %v4001 = vsel %vm3937, %v3905, %v3969
        %v4002 = vsel %vm3938, %v3906, %v3970
        %v4003 = vsel %vm3939, %v3907, %v3971
        %v4004 = vsel %vm3940, %v3908, %v3972
        %v4005 = vsel %vm3941, %v3909, %v3973
        %v4006 = vsel %vm3942, %v3910, %v3974
        %v4007 = vsel %vm3943, %v3911, %v3975
        %v4008 = vsel %vm3944, %v3912, %v3976
        %v4009 = vsel %vm3945, %v3913, %v3977
        %v4010 = vsel %vm3946, %v3914, %v3978
        %v4011 = vsel %vm3947, %v3915, %v3979
        %v4012 = vsel %vm3948, %v3916, %v3980
        %v4013 = vsel %vm3949, %v3917, %v3981
        %v4014 = vsel %vm3950, %v3918, %v3982
        %v4015 = vsel %vm3951, %v3919, %v3983
        %v4016 = vadd.f32 %v3984, %v598
        %v4017 = vadd.f32 %v3985, %v599
        %v4018 = vadd.f32 %v3986, %v600
        %v4019 = vadd.f32 %v3987, %v601
        %v4020 = vadd.f32 %v3988, %v602
        %v4021 = vadd.f32 %v3989, %v603
        %v4022 = vadd.f32 %v3990, %v604
        %v4023 = vadd.f32 %v3991, %v605
        %v4024 = vadd.f32 %v3992, %v606
        %v4025 = vadd.f32 %v3993, %v607
        %v4026 = vadd.f32 %v3994, %v608
        %v4027 = vadd.f32 %v3995, %v609
        %v4028 = vadd.f32 %v3996, %v610
        %v4029 = vadd.f32 %v3997, %v611
        %v4030 = vadd.f32 %v3998, %v612
        %v4031 = vadd.f32 %v3999, %v613
        %v4032 = vadd.f32 %v4000, %v614
        %v4033 = vadd.f32 %v4001, %v615
        %v4034 = vadd.f32 %v4002, %v616
        %v4035 = vadd.f32 %v4003, %v617
        %v4036 = vadd.f32 %v4004, %v618
        %v4037 = vadd.f32 %v4005, %v619
        %v4038 = vadd.f32 %v4006, %v620
        %v4039 = vadd.f32 %v4007, %v621
        %v4040 = vadd.f32 %v4008, %v622
        %v4041 = vadd.f32 %v4009, %v623
        %v4042 = vadd.f32 %v4010, %v624
        %v4043 = vadd.f32 %v4011, %v625
        %v4044 = vadd.f32 %v4012, %v626
        %v4045 = vadd.f32 %v4013, %v627
        %v4046 = vadd.f32 %v4014, %v628
        %v4047 = vadd.f32 %v4015, %v629
        %s4048 = scalar_lea.vmem [#allocation2], 384
        %v4049 = vld [vmem:[%s4048] sm:$0xff]
        %v4050 = vld [vmem:[%s4048 + $0x8] sm:$0xff]
        %v4051 = vld [vmem:[%s4048 + $0x10] sm:$0xff]
        %v4052 = vld [vmem:[%s4048 + $0x18] sm:$0xff]
        %v4053 = vld [vmem:[%s4048 + $0x20] sm:$0xff]
        %v4054 = vld [vmem:[%s4048 + $0x28] sm:$0xff]
        %v4055 = vld [vmem:[%s4048 + $0x30] sm:$0xff]
        %v4056 = vld [vmem:[%s4048 + $0x38] sm:$0xff]
        %v4057 = vld [vmem:[%s4048 + $0x40] sm:$0xff]
        %v4058 = vld [vmem:[%s4048 + $0x48] sm:$0xff]
        %v4059 = vld [vmem:[%s4048 + $0x50] sm:$0xff]
        %v4060 = vld [vmem:[%s4048 + $0x58] sm:$0xff]
        %v4061 = vld [vmem:[%s4048 + $0x60] sm:$0xff]
        %v4062 = vld [vmem:[%s4048 + $0x68] sm:$0xff]
        %v4063 = vld [vmem:[%s4048 + $0x70] sm:$0xff]
        %v4064 = vld [vmem:[%s4048 + $0x78] sm:$0xff]
        %v4065 = vmax.f32 %v4016, %v4017
        %4066 = vmax.xlane.f32.xlu0 %v4065
        %v4067 = vpop.xlane.xlu0 %4066
        %v4068 = vmax.f32 %v4018, %v4019
        %4069 = vmax.xlane.f32.xlu0 %v4068
        %v4070 = vpop.xlane.xlu0 %4069
        %v4071 = vmax.f32 %v4020, %v4021
        %4072 = vmax.xlane.f32.xlu0 %v4071
        %v4073 = vpop.xlane.xlu0 %4072
        %v4074 = vmax.f32 %v4022, %v4023
        %4075 = vmax.xlane.f32.xlu0 %v4074
        %v4076 = vpop.xlane.xlu0 %4075
        %v4077 = vmax.f32 %v4024, %v4025
        %4078 = vmax.xlane.f32.xlu0 %v4077
        %v4079 = vpop.xlane.xlu0 %4078
        %v4080 = vmax.f32 %v4026, %v4027
        %4081 = vmax.xlane.f32.xlu0 %v4080
        %v4082 = vpop.xlane.xlu0 %4081
        %v4083 = vmax.f32 %v4028, %v4029
        %4084 = vmax.xlane.f32.xlu0 %v4083
        %v4085 = vpop.xlane.xlu0 %4084
        %v4086 = vmax.f32 %v4030, %v4031
        %4087 = vmax.xlane.f32.xlu0 %v4086
        %v4088 = vpop.xlane.xlu0 %4087
        %v4089 = vmax.f32 %v4032, %v4033
        %4090 = vmax.xlane.f32.xlu0 %v4089
        %v4091 = vpop.xlane.xlu0 %4090
        %v4092 = vmax.f32 %v4034, %v4035
        %4093 = vmax.xlane.f32.xlu0 %v4092
        %v4094 = vpop.xlane.xlu0 %4093
        %v4095 = vmax.f32 %v4036, %v4037
        %4096 = vmax.xlane.f32.xlu0 %v4095
        %v4097 = vpop.xlane.xlu0 %4096
        %v4098 = vmax.f32 %v4038, %v4039
        %4099 = vmax.xlane.f32.xlu0 %v4098
        %v4100 = vpop.xlane.xlu0 %4099
        %v4101 = vmax.f32 %v4040, %v4041
        %4102 = vmax.xlane.f32.xlu0 %v4101
        %v4103 = vpop.xlane.xlu0 %4102
        %v4104 = vmax.f32 %v4042, %v4043
        %4105 = vmax.xlane.f32.xlu0 %v4104
        %v4106 = vpop.xlane.xlu0 %4105
        %v4107 = vmax.f32 %v4044, %v4045
        %4108 = vmax.xlane.f32.xlu0 %v4107
        %v4109 = vpop.xlane.xlu0 %4108
        %v4110 = vmax.f32 %v4046, %v4047
        %4111 = vmax.xlane.f32.xlu0 %v4110
        %v4112 = vpop.xlane.xlu0 %4111
        %v4113 = vmax.f32 %v4049, %v4067
        %v4114 = vmax.f32 %v4050, %v4070
        %v4115 = vmax.f32 %v4051, %v4073
        %v4116 = vmax.f32 %v4052, %v4076
        %v4117 = vmax.f32 %v4053, %v4079
        %v4118 = vmax.f32 %v4054, %v4082
        %v4119 = vmax.f32 %v4055, %v4085
        %v4120 = vmax.f32 %v4056, %v4088
        %v4121 = vmax.f32 %v4057, %v4091
        %v4122 = vmax.f32 %v4058, %v4094
        %v4123 = vmax.f32 %v4059, %v4097
        %v4124 = vmax.f32 %v4060, %v4100
        %v4125 = vmax.f32 %v4061, %v4103
        %v4126 = vmax.f32 %v4062, %v4106
        %v4127 = vmax.f32 %v4063, %v4109
        %v4128 = vmax.f32 %v4064, %v4112
        %v4129 = vsub.f32 %v4049, %v4113
        %v4130 = vsub.f32 %v4050, %v4114
        %v4131 = vsub.f32 %v4051, %v4115
        %v4132 = vsub.f32 %v4052, %v4116
        %v4133 = vsub.f32 %v4053, %v4117
        %v4134 = vsub.f32 %v4054, %v4118
        %v4135 = vsub.f32 %v4055, %v4119
        %v4136 = vsub.f32 %v4056, %v4120
        %v4137 = vsub.f32 %v4057, %v4121
        %v4138 = vsub.f32 %v4058, %v4122
        %v4139 = vsub.f32 %v4059, %v4123
        %v4140 = vsub.f32 %v4060, %v4124
        %v4141 = vsub.f32 %v4061, %v4125
        %v4142 = vsub.f32 %v4062, %v4126
        %v4143 = vsub.f32 %v4063, %v4127
        %v4144 = vsub.f32 %v4064, %v4128
        %v4145 = vmul.f32 %v4129, 1.442695
        %v4146 = vpow.pop %v4145
        %v4147 = vmul.f32 %v4130, 1.442695
        %v4148 = vpow.pop %v4147
        %v4149 = vmul.f32 %v4131, 1.442695
        %v4150 = vpow.pop %v4149
        %v4151 = vmul.f32 %v4132, 1.442695
        %v4152 = vpow.pop %v4151
        %v4153 = vmul.f32 %v4133, 1.442695
        %v4154 = vpow.pop %v4153
        %v4155 = vmul.f32 %v4134, 1.442695
        %v4156 = vpow.pop %v4155
        %v4157 = vmul.f32 %v4135, 1.442695
        %v4158 = vpow.pop %v4157
        %v4159 = vmul.f32 %v4136, 1.442695
        %v4160 = vpow.pop %v4159
        %v4161 = vmul.f32 %v4137, 1.442695
        %v4162 = vpow.pop %v4161
        %v4163 = vmul.f32 %v4138, 1.442695
        %v4164 = vpow.pop %v4163
        %v4165 = vmul.f32 %v4139, 1.442695
        %v4166 = vpow.pop %v4165
        %v4167 = vmul.f32 %v4140, 1.442695
        %v4168 = vpow.pop %v4167
        %v4169 = vmul.f32 %v4141, 1.442695
        %v4170 = vpow.pop %v4169
        %v4171 = vmul.f32 %v4142, 1.442695
        %v4172 = vpow.pop %v4171
        %v4173 = vmul.f32 %v4143, 1.442695
        %v4174 = vpow.pop %v4173
        %v4175 = vmul.f32 %v4144, 1.442695
        %v4176 = vpow.pop %v4175
        %4178 = vset.pattern.permute.xlu0 0
        %4179 = vperm.xlu0 %4178, %v4113
        %v4180 = vpop.permute.xlu0 %4179
        %4183 = vset.pattern.permute.xlu0 0
        %4184 = vperm.xlu0 %4183, %v4114
        %v4185 = vpop.permute.xlu0 %4184
        %4188 = vset.pattern.permute.xlu0 0
        %4189 = vperm.xlu0 %4188, %v4115
        %v4190 = vpop.permute.xlu0 %4189
        %4193 = vset.pattern.permute.xlu0 0
        %4194 = vperm.xlu0 %4193, %v4116
        %v4195 = vpop.permute.xlu0 %4194
        %4198 = vset.pattern.permute.xlu0 0
        %4199 = vperm.xlu0 %4198, %v4117
        %v4200 = vpop.permute.xlu0 %4199
        %4203 = vset.pattern.permute.xlu0 0
        %4204 = vperm.xlu0 %4203, %v4118
        %v4205 = vpop.permute.xlu0 %4204
        %4208 = vset.pattern.permute.xlu0 0
        %4209 = vperm.xlu0 %4208, %v4119
        %v4210 = vpop.permute.xlu0 %4209
        %4213 = vset.pattern.permute.xlu0 0
        %4214 = vperm.xlu0 %4213, %v4120
        %v4215 = vpop.permute.xlu0 %4214
        %4218 = vset.pattern.permute.xlu0 0
        %4219 = vperm.xlu0 %4218, %v4121
        %v4220 = vpop.permute.xlu0 %4219
        %4223 = vset.pattern.permute.xlu0 0
        %4224 = vperm.xlu0 %4223, %v4122
        %v4225 = vpop.permute.xlu0 %4224
        %4228 = vset.pattern.permute.xlu0 0
        %4229 = vperm.xlu0 %4228, %v4123
        %v4230 = vpop.permute.xlu0 %4229
        %4233 = vset.pattern.permute.xlu0 0
        %4234 = vperm.xlu0 %4233, %v4124
        %v4235 = vpop.permute.xlu0 %4234
        %4238 = vset.pattern.permute.xlu0 0
        %4239 = vperm.xlu0 %4238, %v4125
        %v4240 = vpop.permute.xlu0 %4239
        %4243 = vset.pattern.permute.xlu0 0
        %4244 = vperm.xlu0 %4243, %v4126
        %v4245 = vpop.permute.xlu0 %4244
        %4248 = vset.pattern.permute.xlu0 0
        %4249 = vperm.xlu0 %4248, %v4127
        %v4250 = vpop.permute.xlu0 %4249
        %4253 = vset.pattern.permute.xlu0 0
        %4254 = vperm.xlu0 %4253, %v4128
        %v4255 = vpop.permute.xlu0 %4254
        %v4257 = vsub.f32 %v4016, %v4180
        %v4258 = vsub.f32 %v4017, %v4180
        %v4259 = vsub.f32 %v4018, %v4185
        %v4260 = vsub.f32 %v4019, %v4185
        %v4261 = vsub.f32 %v4020, %v4190
        %v4262 = vsub.f32 %v4021, %v4190
        %v4263 = vsub.f32 %v4022, %v4195
        %v4264 = vsub.f32 %v4023, %v4195
        %v4265 = vsub.f32 %v4024, %v4200
        %v4266 = vsub.f32 %v4025, %v4200
        %v4267 = vsub.f32 %v4026, %v4205
        %v4268 = vsub.f32 %v4027, %v4205
        %v4269 = vsub.f32 %v4028, %v4210
        %v4270 = vsub.f32 %v4029, %v4210
        %v4271 = vsub.f32 %v4030, %v4215
        %v4272 = vsub.f32 %v4031, %v4215
        %v4273 = vsub.f32 %v4032, %v4220
        %v4274 = vsub.f32 %v4033, %v4220
        %v4275 = vsub.f32 %v4034, %v4225
        %v4276 = vsub.f32 %v4035, %v4225
        %v4277 = vsub.f32 %v4036, %v4230
        %v4278 = vsub.f32 %v4037, %v4230
        %v4279 = vsub.f32 %v4038, %v4235
        %v4280 = vsub.f32 %v4039, %v4235
        %v4281 = vsub.f32 %v4040, %v4240
        %v4282 = vsub.f32 %v4041, %v4240
        %v4283 = vsub.f32 %v4042, %v4245
        %v4284 = vsub.f32 %v4043, %v4245
        %v4285 = vsub.f32 %v4044, %v4250
        %v4286 = vsub.f32 %v4045, %v4250
        %v4287 = vsub.f32 %v4046, %v4255
        %v4288 = vsub.f32 %v4047, %v4255
        %v4289 = vmul.f32 %v4257, 1.442695
        %v4290 = vpow.pop %v4289
        %v4291 = vmul.f32 %v4258, 1.442695
        %v4292 = vpow.pop %v4291
        %v4293 = vmul.f32 %v4259, 1.442695
        %v4294 = vpow.pop %v4293
        %v4295 = vmul.f32 %v4260, 1.442695
        %v4296 = vpow.pop %v4295
        %v4297 = vmul.f32 %v4261, 1.442695
        %v4298 = vpow.pop %v4297
        %v4299 = vmul.f32 %v4262, 1.442695
        %v4300 = vpow.pop %v4299
        %v4301 = vmul.f32 %v4263, 1.442695
        %v4302 = vpow.pop %v4301
        %v4303 = vmul.f32 %v4264, 1.442695
        %v4304 = vpow.pop %v4303
        %v4305 = vmul.f32 %v4265, 1.442695
        %v4306 = vpow.pop %v4305
        %v4307 = vmul.f32 %v4266, 1.442695
        %v4308 = vpow.pop %v4307
        %v4309 = vmul.f32 %v4267, 1.442695
        %v4310 = vpow.pop %v4309
        %v4311 = vmul.f32 %v4268, 1.442695
        %v4312 = vpow.pop %v4311
        %v4313 = vmul.f32 %v4269, 1.442695
        %v4314 = vpow.pop %v4313
        %v4315 = vmul.f32 %v4270, 1.442695
        %v4316 = vpow.pop %v4315
        %v4317 = vmul.f32 %v4271, 1.442695
        %v4318 = vpow.pop %v4317
        %v4319 = vmul.f32 %v4272, 1.442695
        %v4320 = vpow.pop %v4319
        %v4321 = vmul.f32 %v4273, 1.442695
        %v4322 = vpow.pop %v4321
        %v4323 = vmul.f32 %v4274, 1.442695
        %v4324 = vpow.pop %v4323
        %v4325 = vmul.f32 %v4275, 1.442695
        %v4326 = vpow.pop %v4325
        %v4327 = vmul.f32 %v4276, 1.442695
        %v4328 = vpow.pop %v4327
        %v4329 = vmul.f32 %v4277, 1.442695
        %v4330 = vpow.pop %v4329
        %v4331 = vmul.f32 %v4278, 1.442695
        %v4332 = vpow.pop %v4331
        %v4333 = vmul.f32 %v4279, 1.442695
        %v4334 = vpow.pop %v4333
        %v4335 = vmul.f32 %v4280, 1.442695
        %v4336 = vpow.pop %v4335
        %v4337 = vmul.f32 %v4281, 1.442695
        %v4338 = vpow.pop %v4337
        %v4339 = vmul.f32 %v4282, 1.442695
        %v4340 = vpow.pop %v4339
        %v4341 = vmul.f32 %v4283, 1.442695
        %v4342 = vpow.pop %v4341
        %v4343 = vmul.f32 %v4284, 1.442695
        %v4344 = vpow.pop %v4343
        %v4345 = vmul.f32 %v4285, 1.442695
        %v4346 = vpow.pop %v4345
        %v4347 = vmul.f32 %v4286, 1.442695
        %v4348 = vpow.pop %v4347
        %v4349 = vmul.f32 %v4287, 1.442695
        %v4350 = vpow.pop %v4349
        %v4351 = vmul.f32 %v4288, 1.442695
        %v4352 = vpow.pop %v4351
        %s4353 = scalar_lea.vmem [#allocation3], 384
        %v4354 = vld [vmem:[%s4353] sm:$0xff]
        %v4355 = vld [vmem:[%s4353 + $0x8] sm:$0xff]
        %v4356 = vld [vmem:[%s4353 + $0x10] sm:$0xff]
        %v4357 = vld [vmem:[%s4353 + $0x18] sm:$0xff]
        %v4358 = vld [vmem:[%s4353 + $0x20] sm:$0xff]
        %v4359 = vld [vmem:[%s4353 + $0x28] sm:$0xff]
        %v4360 = vld [vmem:[%s4353 + $0x30] sm:$0xff]
        %v4361 = vld [vmem:[%s4353 + $0x38] sm:$0xff]
        %v4362 = vld [vmem:[%s4353 + $0x40] sm:$0xff]
        %v4363 = vld [vmem:[%s4353 + $0x48] sm:$0xff]
        %v4364 = vld [vmem:[%s4353 + $0x50] sm:$0xff]
        %v4365 = vld [vmem:[%s4353 + $0x58] sm:$0xff]
        %v4366 = vld [vmem:[%s4353 + $0x60] sm:$0xff]
        %v4367 = vld [vmem:[%s4353 + $0x68] sm:$0xff]
        %v4368 = vld [vmem:[%s4353 + $0x70] sm:$0xff]
        %v4369 = vld [vmem:[%s4353 + $0x78] sm:$0xff]
        %v4370 = vmul.f32 %v4146, %v4354
        %v4371 = vmul.f32 %v4148, %v4355
        %v4372 = vmul.f32 %v4150, %v4356
        %v4373 = vmul.f32 %v4152, %v4357
        %v4374 = vmul.f32 %v4154, %v4358
        %v4375 = vmul.f32 %v4156, %v4359
        %v4376 = vmul.f32 %v4158, %v4360
        %v4377 = vmul.f32 %v4160, %v4361
        %v4378 = vmul.f32 %v4162, %v4362
        %v4379 = vmul.f32 %v4164, %v4363
        %v4380 = vmul.f32 %v4166, %v4364
        %v4381 = vmul.f32 %v4168, %v4365
        %v4382 = vmul.f32 %v4170, %v4366
        %v4383 = vmul.f32 %v4172, %v4367
        %v4384 = vmul.f32 %v4174, %v4368
        %v4385 = vmul.f32 %v4176, %v4369
        %v4386 = vadd.f32 %v4290, %v4292
        %4387 = vadd.xlane.f32.xlu0 %v4386
        %v4388 = vpop.xlane.xlu0 %4387
        %v4389 = vadd.f32 %v4294, %v4296
        %4390 = vadd.xlane.f32.xlu0 %v4389
        %v4391 = vpop.xlane.xlu0 %4390
        %v4392 = vadd.f32 %v4298, %v4300
        %4393 = vadd.xlane.f32.xlu0 %v4392
        %v4394 = vpop.xlane.xlu0 %4393
        %v4395 = vadd.f32 %v4302, %v4304
        %4396 = vadd.xlane.f32.xlu0 %v4395
        %v4397 = vpop.xlane.xlu0 %4396
        %v4398 = vadd.f32 %v4306, %v4308
        %4399 = vadd.xlane.f32.xlu0 %v4398
        %v4400 = vpop.xlane.xlu0 %4399
        %v4401 = vadd.f32 %v4310, %v4312
        %4402 = vadd.xlane.f32.xlu0 %v4401
        %v4403 = vpop.xlane.xlu0 %4402
        %v4404 = vadd.f32 %v4314, %v4316
        %4405 = vadd.xlane.f32.xlu0 %v4404
        %v4406 = vpop.xlane.xlu0 %4405
        %v4407 = vadd.f32 %v4318, %v4320
        %4408 = vadd.xlane.f32.xlu0 %v4407
        %v4409 = vpop.xlane.xlu0 %4408
        %v4410 = vadd.f32 %v4322, %v4324
        %4411 = vadd.xlane.f32.xlu0 %v4410
        %v4412 = vpop.xlane.xlu0 %4411
        %v4413 = vadd.f32 %v4326, %v4328
        %4414 = vadd.xlane.f32.xlu0 %v4413
        %v4415 = vpop.xlane.xlu0 %4414
        %v4416 = vadd.f32 %v4330, %v4332
        %4417 = vadd.xlane.f32.xlu0 %v4416
        %v4418 = vpop.xlane.xlu0 %4417
        %v4419 = vadd.f32 %v4334, %v4336
        %4420 = vadd.xlane.f32.xlu0 %v4419
        %v4421 = vpop.xlane.xlu0 %4420
        %v4422 = vadd.f32 %v4338, %v4340
        %4423 = vadd.xlane.f32.xlu0 %v4422
        %v4424 = vpop.xlane.xlu0 %4423
        %v4425 = vadd.f32 %v4342, %v4344
        %4426 = vadd.xlane.f32.xlu0 %v4425
        %v4427 = vpop.xlane.xlu0 %4426
        %v4428 = vadd.f32 %v4346, %v4348
        %4429 = vadd.xlane.f32.xlu0 %v4428
        %v4430 = vpop.xlane.xlu0 %4429
        %v4431 = vadd.f32 %v4350, %v4352
        %4432 = vadd.xlane.f32.xlu0 %v4431
        %v4433 = vpop.xlane.xlu0 %4432
        %v4434 = vadd.f32 %v4370, %v4388
        %v4435 = vadd.f32 %v4371, %v4391
        %v4436 = vadd.f32 %v4372, %v4394
        %v4437 = vadd.f32 %v4373, %v4397
        %v4438 = vadd.f32 %v4374, %v4400
        %v4439 = vadd.f32 %v4375, %v4403
        %v4440 = vadd.f32 %v4376, %v4406
        %v4441 = vadd.f32 %v4377, %v4409
        %v4442 = vadd.f32 %v4378, %v4412
        %v4443 = vadd.f32 %v4379, %v4415
        %v4444 = vadd.f32 %v4380, %v4418
        %v4445 = vadd.f32 %v4381, %v4421
        %v4446 = vadd.f32 %v4382, %v4424
        %v4447 = vadd.f32 %v4383, %v4427
        %v4448 = vadd.f32 %v4384, %v4430
        %v4449 = vadd.f32 %v4385, %v4433
        %4450 = vst.msk [vmem:[%s4353] sm:$0xff] %vm1294, %v4434
        %4451 = vst.msk [vmem:[%s4353 + $0x8] sm:$0xff] %vm1294, %v4435
        %4452 = vst.msk [vmem:[%s4353 + $0x10] sm:$0xff] %vm1294, %v4436
        %4453 = vst.msk [vmem:[%s4353 + $0x18] sm:$0xff] %vm1294, %v4437
        %4454 = vst.msk [vmem:[%s4353 + $0x20] sm:$0xff] %vm1294, %v4438
        %4455 = vst.msk [vmem:[%s4353 + $0x28] sm:$0xff] %vm1294, %v4439
        %4456 = vst.msk [vmem:[%s4353 + $0x30] sm:$0xff] %vm1294, %v4440
        %4457 = vst.msk [vmem:[%s4353 + $0x38] sm:$0xff] %vm1294, %v4441
        %4458 = vst.msk [vmem:[%s4353 + $0x40] sm:$0xff] %vm1294, %v4442
        %4459 = vst.msk [vmem:[%s4353 + $0x48] sm:$0xff] %vm1294, %v4443
        %4460 = vst.msk [vmem:[%s4353 + $0x50] sm:$0xff] %vm1294, %v4444
        %4461 = vst.msk [vmem:[%s4353 + $0x58] sm:$0xff] %vm1294, %v4445
        %4462 = vst.msk [vmem:[%s4353 + $0x60] sm:$0xff] %vm1294, %v4446
        %4463 = vst.msk [vmem:[%s4353 + $0x68] sm:$0xff] %vm1294, %v4447
        %4464 = vst.msk [vmem:[%s4353 + $0x70] sm:$0xff] %vm1294, %v4448
        %4465 = vst.msk [vmem:[%s4353 + $0x78] sm:$0xff] %vm1294, %v4449
        %s4466 = scalar_lea.vmem [#allocation4], 384
        %v4467 = vld [vmem:[%s4466] sm:$0xff]
        %v4468 = vld [vmem:[%s4466 + $0x8] sm:$0xff]
        %v4469 = vld [vmem:[%s4466 + $0x10] sm:$0xff]
        %v4470 = vld [vmem:[%s4466 + $0x18] sm:$0xff]
        %v4471 = vld [vmem:[%s4466 + $0x20] sm:$0xff]
        %v4472 = vld [vmem:[%s4466 + $0x28] sm:$0xff]
        %v4473 = vld [vmem:[%s4466 + $0x30] sm:$0xff]
        %v4474 = vld [vmem:[%s4466 + $0x38] sm:$0xff]
        %v4475 = vld [vmem:[%s4466 + $0x40] sm:$0xff]
        %v4476 = vld [vmem:[%s4466 + $0x48] sm:$0xff]
        %v4477 = vld [vmem:[%s4466 + $0x50] sm:$0xff]
        %v4478 = vld [vmem:[%s4466 + $0x58] sm:$0xff]
        %v4479 = vld [vmem:[%s4466 + $0x60] sm:$0xff]
        %v4480 = vld [vmem:[%s4466 + $0x68] sm:$0xff]
        %v4481 = vld [vmem:[%s4466 + $0x70] sm:$0xff]
        %v4482 = vld [vmem:[%s4466 + $0x78] sm:$0xff]
        %4484 = vset.pattern.permute.xlu0 0
        %4485 = vperm.xlu0 %4484, %v4146
        %v4486 = vpop.permute.xlu0 %4485
        %4489 = vset.pattern.permute.xlu0 0
        %4490 = vperm.xlu0 %4489, %v4148
        %v4491 = vpop.permute.xlu0 %4490
        %4494 = vset.pattern.permute.xlu0 0
        %4495 = vperm.xlu0 %4494, %v4150
        %v4496 = vpop.permute.xlu0 %4495
        %4499 = vset.pattern.permute.xlu0 0
        %4500 = vperm.xlu0 %4499, %v4152
        %v4501 = vpop.permute.xlu0 %4500
        %4504 = vset.pattern.permute.xlu0 0
        %4505 = vperm.xlu0 %4504, %v4154
        %v4506 = vpop.permute.xlu0 %4505
        %4509 = vset.pattern.permute.xlu0 0
        %4510 = vperm.xlu0 %4509, %v4156
        %v4511 = vpop.permute.xlu0 %4510
        %4514 = vset.pattern.permute.xlu0 0
        %4515 = vperm.xlu0 %4514, %v4158
        %v4516 = vpop.permute.xlu0 %4515
        %4519 = vset.pattern.permute.xlu0 0
        %4520 = vperm.xlu0 %4519, %v4160
        %v4521 = vpop.permute.xlu0 %4520
        %4524 = vset.pattern.permute.xlu0 0
        %4525 = vperm.xlu0 %4524, %v4162
        %v4526 = vpop.permute.xlu0 %4525
        %4529 = vset.pattern.permute.xlu0 0
        %4530 = vperm.xlu0 %4529, %v4164
        %v4531 = vpop.permute.xlu0 %4530
        %4534 = vset.pattern.permute.xlu0 0
        %4535 = vperm.xlu0 %4534, %v4166
        %v4536 = vpop.permute.xlu0 %4535
        %4539 = vset.pattern.permute.xlu0 0
        %4540 = vperm.xlu0 %4539, %v4168
        %v4541 = vpop.permute.xlu0 %4540
        %4544 = vset.pattern.permute.xlu0 0
        %4545 = vperm.xlu0 %4544, %v4170
        %v4546 = vpop.permute.xlu0 %4545
        %4549 = vset.pattern.permute.xlu0 0
        %4550 = vperm.xlu0 %4549, %v4172
        %v4551 = vpop.permute.xlu0 %4550
        %4554 = vset.pattern.permute.xlu0 0
        %4555 = vperm.xlu0 %4554, %v4174
        %v4556 = vpop.permute.xlu0 %4555
        %4559 = vset.pattern.permute.xlu0 0
        %4560 = vperm.xlu0 %4559, %v4176
        %v4561 = vpop.permute.xlu0 %4560
        %v4563 = vmul.f32 %v4486, %v4467
        %v4564 = vmul.f32 %v4491, %v4468
        %v4565 = vmul.f32 %v4496, %v4469
        %v4566 = vmul.f32 %v4501, %v4470
        %v4567 = vmul.f32 %v4506, %v4471
        %v4568 = vmul.f32 %v4511, %v4472
        %v4569 = vmul.f32 %v4516, %v4473
        %v4570 = vmul.f32 %v4521, %v4474
        %v4571 = vmul.f32 %v4526, %v4475
        %v4572 = vmul.f32 %v4531, %v4476
        %v4573 = vmul.f32 %v4536, %v4477
        %v4574 = vmul.f32 %v4541, %v4478
        %v4575 = vmul.f32 %v4546, %v4479
        %v4576 = vmul.f32 %v4551, %v4480
        %v4577 = vmul.f32 %v4556, %v4481
        %v4578 = vmul.f32 %v4561, %v4482
        %v4579 = vpack.c.bf16 %v4294, %v4290
        %v4580 = vpack.c.bf16 %v4296, %v4292
        %v4581 = vpack.c.bf16 %v4302, %v4298
        %v4582 = vpack.c.bf16 %v4304, %v4300
        %v4583 = vpack.c.bf16 %v4310, %v4306
        %v4584 = vpack.c.bf16 %v4312, %v4308
        %v4585 = vpack.c.bf16 %v4318, %v4314
        %v4586 = vpack.c.bf16 %v4320, %v4316
        %v4587 = vpack.c.bf16 %v4326, %v4322
        %v4588 = vpack.c.bf16 %v4328, %v4324
        %v4589 = vpack.c.bf16 %v4334, %v4330
        %v4590 = vpack.c.bf16 %v4336, %v4332
        %v4591 = vpack.c.bf16 %v4342, %v4338
        %v4592 = vpack.c.bf16 %v4344, %v4340
        %v4593 = vpack.c.bf16 %v4350, %v4346
        %v4594 = vpack.c.bf16 %v4352, %v4348
        %s4595 = scalar_lea.vmem %s281, 384
        %v4596 = vld [vmem:[%s4595] sm:$0xf]
        %v4597 = vld [vmem:[%s4595 + $0x4] sm:$0xf]
        %v4598 = vld [vmem:[%s4595 + $0x8] sm:$0xf]
        %v4599 = vld [vmem:[%s4595 + $0xc] sm:$0xf]
        %v4600 = vld [vmem:[%s4595 + $0x10] sm:$0xf]
        %v4601 = vld [vmem:[%s4595 + $0x14] sm:$0xf]
        %v4602 = vld [vmem:[%s4595 + $0x18] sm:$0xf]
        %v4603 = vld [vmem:[%s4595 + $0x1c] sm:$0xf]
        %v4604 = vld [vmem:[%s4595 + $0x20] sm:$0xf]
        %v4605 = vld [vmem:[%s4595 + $0x24] sm:$0xf]
        %v4606 = vld [vmem:[%s4595 + $0x28] sm:$0xf]
        %v4607 = vld [vmem:[%s4595 + $0x2c] sm:$0xf]
        %v4608 = vld [vmem:[%s4595 + $0x30] sm:$0xf]
        %v4609 = vld [vmem:[%s4595 + $0x34] sm:$0xf]
        %v4610 = vld [vmem:[%s4595 + $0x38] sm:$0xf]
        %v4611 = vld [vmem:[%s4595 + $0x3c] sm:$0xf]
        %v4612 = vld [vmem:[%s4595 + $0x40] sm:$0xf]
        %v4613 = vld [vmem:[%s4595 + $0x44] sm:$0xf]
        %v4614 = vld [vmem:[%s4595 + $0x48] sm:$0xf]
        %v4615 = vld [vmem:[%s4595 + $0x4c] sm:$0xf]
        %v4616 = vld [vmem:[%s4595 + $0x50] sm:$0xf]
        %v4617 = vld [vmem:[%s4595 + $0x54] sm:$0xf]
        %v4618 = vld [vmem:[%s4595 + $0x58] sm:$0xf]
        %v4619 = vld [vmem:[%s4595 + $0x5c] sm:$0xf]
        %v4620 = vld [vmem:[%s4595 + $0x60] sm:$0xf]
        %v4621 = vld [vmem:[%s4595 + $0x64] sm:$0xf]
        %v4622 = vld [vmem:[%s4595 + $0x68] sm:$0xf]
        %v4623 = vld [vmem:[%s4595 + $0x6c] sm:$0xf]
        %v4624 = vld [vmem:[%s4595 + $0x70] sm:$0xf]
        %v4625 = vld [vmem:[%s4595 + $0x74] sm:$0xf]
        %v4626 = vld [vmem:[%s4595 + $0x78] sm:$0xf]
        %v4627 = vld [vmem:[%s4595 + $0x7c] sm:$0xf]
        %v4660 = vunpack.c.l.b16 %v4596
        %v4661 = vunpack.c.l.b16 %v4597
        %v4662 = vunpack.c.l.b16 %v4598
        %v4663 = vunpack.c.l.b16 %v4599
        %v4664 = vunpack.c.l.b16 %v4600
        %v4665 = vunpack.c.l.b16 %v4601
        %v4666 = vunpack.c.l.b16 %v4602
        %v4667 = vunpack.c.l.b16 %v4603
        %v4668 = vunpack.c.l.b16 %v4604
        %v4669 = vunpack.c.l.b16 %v4605
        %v4670 = vunpack.c.l.b16 %v4606
        %v4671 = vunpack.c.l.b16 %v4607
        %v4672 = vunpack.c.l.b16 %v4608
        %v4673 = vunpack.c.l.b16 %v4609
        %v4674 = vunpack.c.l.b16 %v4610
        %v4675 = vunpack.c.l.b16 %v4611
        %v4676 = vunpack.c.l.b16 %v4612
        %v4677 = vunpack.c.l.b16 %v4613
        %v4678 = vunpack.c.l.b16 %v4614
        %v4679 = vunpack.c.l.b16 %v4615
        %v4680 = vunpack.c.l.b16 %v4616
        %v4681 = vunpack.c.l.b16 %v4617
        %v4682 = vunpack.c.l.b16 %v4618
        %v4683 = vunpack.c.l.b16 %v4619
        %v4684 = vunpack.c.l.b16 %v4620
        %v4685 = vunpack.c.l.b16 %v4621
        %v4686 = vunpack.c.l.b16 %v4622
        %v4687 = vunpack.c.l.b16 %v4623
        %v4688 = vunpack.c.l.b16 %v4624
        %v4689 = vunpack.c.l.b16 %v4625
        %v4690 = vunpack.c.l.b16 %v4626
        %v4691 = vunpack.c.l.b16 %v4627
        %v4692 = vpack.c.b16 %v4661, %v4660
        %v4693 = vpack.c.b16 %v4663, %v4662
        %v4694 = vpack.c.b16 %v4665, %v4664
        %v4695 = vpack.c.b16 %v4667, %v4666
        %v4696 = vpack.c.b16 %v4669, %v4668
        %v4697 = vpack.c.b16 %v4671, %v4670
        %v4698 = vpack.c.b16 %v4673, %v4672
        %v4699 = vpack.c.b16 %v4675, %v4674
        %v4700 = vpack.c.b16 %v4677, %v4676
        %v4701 = vpack.c.b16 %v4679, %v4678
        %v4702 = vpack.c.b16 %v4681, %v4680
        %v4703 = vpack.c.b16 %v4683, %v4682
        %v4704 = vpack.c.b16 %v4685, %v4684
        %v4705 = vpack.c.b16 %v4687, %v4686
        %v4706 = vpack.c.b16 %v4689, %v4688
        %v4707 = vpack.c.b16 %v4691, %v4690
        %4724 = vmatpush.bf16.msra.mxu0 %v4699
        %4725 = vmatpush.bf16.msra.mxu0 %v4698
        %4726 = vmatpush.bf16.msra.mxu0 %v4697
        %4727 = vmatpush.bf16.msra.mxu0 %v4696
        %4728 = vmatpush.bf16.msra.mxu0 %v4695
        %4729 = vmatpush.bf16.msra.mxu0 %v4694
        %4730 = vmatpush.bf16.msra.mxu0 %v4693
        %4731 = vmatpush.bf16.msra.mxu0 %v4692
        %4732 = vmatmul.bf16.gmra.mxu0 %v4579
        %v4733 = vpop.f32.mrf.mxu0
        %v4734 = vadd.f32 0.0, %v4733
        %v4735 = vpop.f32.mrf.mxu0
        %v4736 = vadd.f32 0.0, %v4735
        %4737 = vmatmul.bf16.gmra.mxu0 %v4581
        %v4738 = vpop.f32.mrf.mxu0
        %v4739 = vadd.f32 0.0, %v4738
        %v4740 = vpop.f32.mrf.mxu0
        %v4741 = vadd.f32 0.0, %v4740
        %4742 = vmatmul.bf16.gmra.mxu0 %v4583
        %v4743 = vpop.f32.mrf.mxu0
        %v4744 = vadd.f32 0.0, %v4743
        %v4745 = vpop.f32.mrf.mxu0
        %v4746 = vadd.f32 0.0, %v4745
        %4747 = vmatmul.bf16.gmra.mxu0 %v4585
        %v4748 = vpop.f32.mrf.mxu0
        %v4749 = vadd.f32 0.0, %v4748
        %v4750 = vpop.f32.mrf.mxu0
        %v4751 = vadd.f32 0.0, %v4750
        %4752 = vmatmul.bf16.gmra.mxu0 %v4587
        %v4753 = vpop.f32.mrf.mxu0
        %v4754 = vadd.f32 0.0, %v4753
        %v4755 = vpop.f32.mrf.mxu0
        %v4756 = vadd.f32 0.0, %v4755
        %4757 = vmatmul.bf16.gmra.mxu0 %v4589
        %v4758 = vpop.f32.mrf.mxu0
        %v4759 = vadd.f32 0.0, %v4758
        %v4760 = vpop.f32.mrf.mxu0
        %v4761 = vadd.f32 0.0, %v4760
        %4762 = vmatmul.bf16.gmra.mxu0 %v4591
        %v4763 = vpop.f32.mrf.mxu0
        %v4764 = vadd.f32 0.0, %v4763
        %v4765 = vpop.f32.mrf.mxu0
        %v4766 = vadd.f32 0.0, %v4765
        %4767 = vmatmul.bf16.gmra.mxu0 %v4593
        %v4768 = vpop.f32.mrf.mxu0
        %v4769 = vadd.f32 0.0, %v4768
        %v4770 = vpop.f32.mrf.mxu0
        %v4771 = vadd.f32 0.0, %v4770
        %4772 = vdwg.mxu0
        %4773 = vmatpush.bf16.msra.mxu0 %v4707
        %4774 = vmatpush.bf16.msra.mxu0 %v4706
        %4775 = vmatpush.bf16.msra.mxu0 %v4705
        %4776 = vmatpush.bf16.msra.mxu0 %v4704
        %4777 = vmatpush.bf16.msra.mxu0 %v4703
        %4778 = vmatpush.bf16.msra.mxu0 %v4702
        %4779 = vmatpush.bf16.msra.mxu0 %v4701
        %4780 = vmatpush.bf16.msra.mxu0 %v4700
        %4781 = vmatmul.bf16.gmra.mxu0 %v4580
        %v4782 = vpop.f32.mrf.mxu0
        %v4783 = vadd.f32 %v4734, %v4782
        %v4784 = vpop.f32.mrf.mxu0
        %v4785 = vadd.f32 %v4736, %v4784
        %4786 = vmatmul.bf16.gmra.mxu0 %v4582
        %v4787 = vpop.f32.mrf.mxu0
        %v4788 = vadd.f32 %v4739, %v4787
        %v4789 = vpop.f32.mrf.mxu0
        %v4790 = vadd.f32 %v4741, %v4789
        %4791 = vmatmul.bf16.gmra.mxu0 %v4584
        %v4792 = vpop.f32.mrf.mxu0
        %v4793 = vadd.f32 %v4744, %v4792
        %v4794 = vpop.f32.mrf.mxu0
        %v4795 = vadd.f32 %v4746, %v4794
        %4796 = vmatmul.bf16.gmra.mxu0 %v4586
        %v4797 = vpop.f32.mrf.mxu0
        %v4798 = vadd.f32 %v4749, %v4797
        %v4799 = vpop.f32.mrf.mxu0
        %v4800 = vadd.f32 %v4751, %v4799
        %4801 = vmatmul.bf16.gmra.mxu0 %v4588
        %v4802 = vpop.f32.mrf.mxu0
        %v4803 = vadd.f32 %v4754, %v4802
        %v4804 = vpop.f32.mrf.mxu0
        %v4805 = vadd.f32 %v4756, %v4804
        %4806 = vmatmul.bf16.gmra.mxu0 %v4590
        %v4807 = vpop.f32.mrf.mxu0
        %v4808 = vadd.f32 %v4759, %v4807
        %v4809 = vpop.f32.mrf.mxu0
        %v4810 = vadd.f32 %v4761, %v4809
        %4811 = vmatmul.bf16.gmra.mxu0 %v4592
        %v4812 = vpop.f32.mrf.mxu0
        %v4813 = vadd.f32 %v4764, %v4812
        %v4814 = vpop.f32.mrf.mxu0
        %v4815 = vadd.f32 %v4766, %v4814
        %4816 = vmatmul.bf16.gmra.mxu0 %v4594
        %v4817 = vpop.f32.mrf.mxu0
        %v4818 = vadd.f32 %v4769, %v4817
        %v4819 = vpop.f32.mrf.mxu0
        %v4820 = vadd.f32 %v4771, %v4819
        %4821 = vdwg.mxu0
        %v4822 = vadd.f32 %v4563, %v4783
        %v4823 = vadd.f32 %v4564, %v4785
        %v4824 = vadd.f32 %v4565, %v4788
        %v4825 = vadd.f32 %v4566, %v4790
        %v4826 = vadd.f32 %v4567, %v4793
        %v4827 = vadd.f32 %v4568, %v4795
        %v4828 = vadd.f32 %v4569, %v4798
        %v4829 = vadd.f32 %v4570, %v4800
        %v4830 = vadd.f32 %v4571, %v4803
        %v4831 = vadd.f32 %v4572, %v4805
        %v4832 = vadd.f32 %v4573, %v4808
        %v4833 = vadd.f32 %v4574, %v4810
        %v4834 = vadd.f32 %v4575, %v4813
        %v4835 = vadd.f32 %v4576, %v4815
        %v4836 = vadd.f32 %v4577, %v4818
        %v4837 = vadd.f32 %v4578, %v4820
        %4838 = vst.msk [vmem:[%s4466] sm:$0xff] %vm1681, %v4822
        %4839 = vst.msk [vmem:[%s4466 + $0x8] sm:$0xff] %vm1681, %v4823
        %4840 = vst.msk [vmem:[%s4466 + $0x10] sm:$0xff] %vm1681, %v4824
        %4841 = vst.msk [vmem:[%s4466 + $0x18] sm:$0xff] %vm1681, %v4825
        %4842 = vst.msk [vmem:[%s4466 + $0x20] sm:$0xff] %vm1681, %v4826
        %4843 = vst.msk [vmem:[%s4466 + $0x28] sm:$0xff] %vm1681, %v4827
        %4844 = vst.msk [vmem:[%s4466 + $0x30] sm:$0xff] %vm1681, %v4828
        %4845 = vst.msk [vmem:[%s4466 + $0x38] sm:$0xff] %vm1681, %v4829
        %4846 = vst.msk [vmem:[%s4466 + $0x40] sm:$0xff] %vm1681, %v4830
        %4847 = vst.msk [vmem:[%s4466 + $0x48] sm:$0xff] %vm1681, %v4831
        %4848 = vst.msk [vmem:[%s4466 + $0x50] sm:$0xff] %vm1681, %v4832
        %4849 = vst.msk [vmem:[%s4466 + $0x58] sm:$0xff] %vm1681, %v4833
        %4850 = vst.msk [vmem:[%s4466 + $0x60] sm:$0xff] %vm1681, %v4834
        %4851 = vst.msk [vmem:[%s4466 + $0x68] sm:$0xff] %vm1681, %v4835
        %4852 = vst.msk [vmem:[%s4466 + $0x70] sm:$0xff] %vm1681, %v4836
        %4853 = vst.msk [vmem:[%s4466 + $0x78] sm:$0xff] %vm1681, %v4837
        %4854 = vst.msk [vmem:[%s4048] sm:$0xff] %vm1294, %v4113
        %4855 = vst.msk [vmem:[%s4048 + $0x8] sm:$0xff] %vm1294, %v4114
        %4856 = vst.msk [vmem:[%s4048 + $0x10] sm:$0xff] %vm1294, %v4115
        %4857 = vst.msk [vmem:[%s4048 + $0x18] sm:$0xff] %vm1294, %v4116
        %4858 = vst.msk [vmem:[%s4048 + $0x20] sm:$0xff] %vm1294, %v4117
        %4859 = vst.msk [vmem:[%s4048 + $0x28] sm:$0xff] %vm1294, %v4118
        %4860 = vst.msk [vmem:[%s4048 + $0x30] sm:$0xff] %vm1294, %v4119
        %4861 = vst.msk [vmem:[%s4048 + $0x38] sm:$0xff] %vm1294, %v4120
        %4862 = vst.msk [vmem:[%s4048 + $0x40] sm:$0xff] %vm1294, %v4121
        %4863 = vst.msk [vmem:[%s4048 + $0x48] sm:$0xff] %vm1294, %v4122
        %4864 = vst.msk [vmem:[%s4048 + $0x50] sm:$0xff] %vm1294, %v4123
        %4865 = vst.msk [vmem:[%s4048 + $0x58] sm:$0xff] %vm1294, %v4124
        %4866 = vst.msk [vmem:[%s4048 + $0x60] sm:$0xff] %vm1294, %v4125
        %4867 = vst.msk [vmem:[%s4048 + $0x68] sm:$0xff] %vm1294, %v4126
        %4868 = vst.msk [vmem:[%s4048 + $0x70] sm:$0xff] %vm1294, %v4127
        %4869 = vst.msk [vmem:[%s4048 + $0x78] sm:$0xff] %vm1294, %v4128
        // Predicated region
        $region41: #{tpu_custom_call.1} parent=35 // pred_check
          %p4870 = pneg %p296
        $region42: #{tpu_custom_call.1} parent=35 // pred_check_branch
          %4872 = sbr.rel (%p4870) target = $region44
        $region43: #{tpu_custom_call.1} parent=35 // pred_region
          %v4873 = vld [vmem:[#allocation3] sm:$0xff]
          %v4874 = vld [vmem:[#allocation3 + $0x8] sm:$0xff]
          %v4875 = vld [vmem:[#allocation3 + $0x10] sm:$0xff]
          %v4876 = vld [vmem:[#allocation3 + $0x18] sm:$0xff]
          %v4877 = vld [vmem:[#allocation3 + $0x20] sm:$0xff]
          %v4878 = vld [vmem:[#allocation3 + $0x28] sm:$0xff]
          %v4879 = vld [vmem:[#allocation3 + $0x30] sm:$0xff]
          %v4880 = vld [vmem:[#allocation3 + $0x38] sm:$0xff]
          %v4881 = vld [vmem:[#allocation3 + $0x40] sm:$0xff]
          %v4882 = vld [vmem:[#allocation3 + $0x48] sm:$0xff]
          %v4883 = vld [vmem:[#allocation3 + $0x50] sm:$0xff]
          %v4884 = vld [vmem:[#allocation3 + $0x58] sm:$0xff]
          %v4885 = vld [vmem:[#allocation3 + $0x60] sm:$0xff]
          %v4886 = vld [vmem:[#allocation3 + $0x68] sm:$0xff]
          %v4887 = vld [vmem:[#allocation3 + $0x70] sm:$0xff]
          %v4888 = vld [vmem:[#allocation3 + $0x78] sm:$0xff]
          %v4889 = vmax.f32 %v4873, 1e-30
          %v4890 = vmax.f32 %v4874, 1e-30
          %v4891 = vmax.f32 %v4875, 1e-30
          %v4892 = vmax.f32 %v4876, 1e-30
          %v4893 = vmax.f32 %v4877, 1e-30
          %v4894 = vmax.f32 %v4878, 1e-30
          %v4895 = vmax.f32 %v4879, 1e-30
          %v4896 = vmax.f32 %v4880, 1e-30
          %v4897 = vmax.f32 %v4881, 1e-30
          %v4898 = vmax.f32 %v4882, 1e-30
          %v4899 = vmax.f32 %v4883, 1e-30
          %v4900 = vmax.f32 %v4884, 1e-30
          %v4901 = vmax.f32 %v4885, 1e-30
          %v4902 = vmax.f32 %v4886, 1e-30
          %v4903 = vmax.f32 %v4887, 1e-30
          %v4904 = vmax.f32 %v4888, 1e-30
          %v4905 = vrcp.pop %v4889
          %v4906 = vrcp.pop %v4890
          %v4907 = vrcp.pop %v4891
          %v4908 = vrcp.pop %v4892
          %v4909 = vrcp.pop %v4893
          %v4910 = vrcp.pop %v4894
          %v4911 = vrcp.pop %v4895
          %v4912 = vrcp.pop %v4896
          %v4913 = vrcp.pop %v4897
          %v4914 = vrcp.pop %v4898
          %v4915 = vrcp.pop %v4899
          %v4916 = vrcp.pop %v4900
          %v4917 = vrcp.pop %v4901
          %v4918 = vrcp.pop %v4902
          %v4919 = vrcp.pop %v4903
          %v4920 = vrcp.pop %v4904
          %v4921 = vld [vmem:[#allocation4] sm:$0xff]
          %v4922 = vld [vmem:[#allocation4 + $0x8] sm:$0xff]
          %v4923 = vld [vmem:[#allocation4 + $0x10] sm:$0xff]
          %v4924 = vld [vmem:[#allocation4 + $0x18] sm:$0xff]
          %v4925 = vld [vmem:[#allocation4 + $0x20] sm:$0xff]
          %v4926 = vld [vmem:[#allocation4 + $0x28] sm:$0xff]
          %v4927 = vld [vmem:[#allocation4 + $0x30] sm:$0xff]
          %v4928 = vld [vmem:[#allocation4 + $0x38] sm:$0xff]
          %v4929 = vld [vmem:[#allocation4 + $0x40] sm:$0xff]
          %v4930 = vld [vmem:[#allocation4 + $0x48] sm:$0xff]
          %v4931 = vld [vmem:[#allocation4 + $0x50] sm:$0xff]
          %v4932 = vld [vmem:[#allocation4 + $0x58] sm:$0xff]
          %v4933 = vld [vmem:[#allocation4 + $0x60] sm:$0xff]
          %v4934 = vld [vmem:[#allocation4 + $0x68] sm:$0xff]
          %v4935 = vld [vmem:[#allocation4 + $0x70] sm:$0xff]
          %v4936 = vld [vmem:[#allocation4 + $0x78] sm:$0xff]
          %4938 = vset.pattern.permute.xlu0 0
          %4939 = vperm.xlu0 %4938, %v4905
          %v4940 = vpop.permute.xlu0 %4939
          %4943 = vset.pattern.permute.xlu0 0
          %4944 = vperm.xlu0 %4943, %v4906
          %v4945 = vpop.permute.xlu0 %4944
          %4948 = vset.pattern.permute.xlu0 0
          %4949 = vperm.xlu0 %4948, %v4907
          %v4950 = vpop.permute.xlu0 %4949
          %4953 = vset.pattern.permute.xlu0 0
          %4954 = vperm.xlu0 %4953, %v4908
          %v4955 = vpop.permute.xlu0 %4954
          %4958 = vset.pattern.permute.xlu0 0
          %4959 = vperm.xlu0 %4958, %v4909
          %v4960 = vpop.permute.xlu0 %4959
          %4963 = vset.pattern.permute.xlu0 0
          %4964 = vperm.xlu0 %4963, %v4910
          %v4965 = vpop.permute.xlu0 %4964
          %4968 = vset.pattern.permute.xlu0 0
          %4969 = vperm.xlu0 %4968, %v4911
          %v4970 = vpop.permute.xlu0 %4969
          %4973 = vset.pattern.permute.xlu0 0
          %4974 = vperm.xlu0 %4973, %v4912
          %v4975 = vpop.permute.xlu0 %4974
          %4978 = vset.pattern.permute.xlu0 0
          %4979 = vperm.xlu0 %4978, %v4913
          %v4980 = vpop.permute.xlu0 %4979
          %4983 = vset.pattern.permute.xlu0 0
          %4984 = vperm.xlu0 %4983, %v4914
          %v4985 = vpop.permute.xlu0 %4984
          %4988 = vset.pattern.permute.xlu0 0
          %4989 = vperm.xlu0 %4988, %v4915
          %v4990 = vpop.permute.xlu0 %4989
          %4993 = vset.pattern.permute.xlu0 0
          %4994 = vperm.xlu0 %4993, %v4916
          %v4995 = vpop.permute.xlu0 %4994
          %4998 = vset.pattern.permute.xlu0 0
          %4999 = vperm.xlu0 %4998, %v4917
          %v5000 = vpop.permute.xlu0 %4999
          %5003 = vset.pattern.permute.xlu0 0
          %5004 = vperm.xlu0 %5003, %v4918
          %v5005 = vpop.permute.xlu0 %5004
          %5008 = vset.pattern.permute.xlu0 0
          %5009 = vperm.xlu0 %5008, %v4919
          %v5010 = vpop.permute.xlu0 %5009
          %5013 = vset.pattern.permute.xlu0 0
          %5014 = vperm.xlu0 %5013, %v4920
          %v5015 = vpop.permute.xlu0 %5014
          %v5017 = vmul.f32 %v4921, %v4940
          %v5018 = vmul.f32 %v4922, %v4945
          %v5019 = vmul.f32 %v4923, %v4950
          %v5020 = vmul.f32 %v4924, %v4955
          %v5021 = vmul.f32 %v4925, %v4960
          %v5022 = vmul.f32 %v4926, %v4965
          %v5023 = vmul.f32 %v4927, %v4970
          %v5024 = vmul.f32 %v4928, %v4975
          %v5025 = vmul.f32 %v4929, %v4980
          %v5026 = vmul.f32 %v4930, %v4985
          %v5027 = vmul.f32 %v4931, %v4990
          %v5028 = vmul.f32 %v4932, %v4995
          %v5029 = vmul.f32 %v4933, %v5000
          %v5030 = vmul.f32 %v4934, %v5005
          %v5031 = vmul.f32 %v4935, %v5010
          %v5032 = vmul.f32 %v4936, %v5015
          %v5033 = vld [vmem:[%s2249] sm:$0xff]
          %v5034 = vld [vmem:[%s2249 + $0x8] sm:$0xff]
          %v5035 = vld [vmem:[%s2249 + $0x10] sm:$0xff]
          %v5036 = vld [vmem:[%s2249 + $0x18] sm:$0xff]
          %v5037 = vld [vmem:[%s2249 + $0x20] sm:$0xff]
          %v5038 = vld [vmem:[%s2249 + $0x28] sm:$0xff]
          %v5039 = vld [vmem:[%s2249 + $0x30] sm:$0xff]
          %v5040 = vld [vmem:[%s2249 + $0x38] sm:$0xff]
          %v5041 = vld [vmem:[%s2249 + $0x40] sm:$0xff]
          %v5042 = vld [vmem:[%s2249 + $0x48] sm:$0xff]
          %v5043 = vld [vmem:[%s2249 + $0x50] sm:$0xff]
          %v5044 = vld [vmem:[%s2249 + $0x58] sm:$0xff]
          %v5045 = vld [vmem:[%s2249 + $0x60] sm:$0xff]
          %v5046 = vld [vmem:[%s2249 + $0x68] sm:$0xff]
          %v5047 = vld [vmem:[%s2249 + $0x70] sm:$0xff]
          %v5048 = vld [vmem:[%s2249 + $0x78] sm:$0xff]
          %v5049 = vmax.f32 %v5033, 1e-30
          %v5050 = vmax.f32 %v5034, 1e-30
          %v5051 = vmax.f32 %v5035, 1e-30
          %v5052 = vmax.f32 %v5036, 1e-30
          %v5053 = vmax.f32 %v5037, 1e-30
          %v5054 = vmax.f32 %v5038, 1e-30
          %v5055 = vmax.f32 %v5039, 1e-30
          %v5056 = vmax.f32 %v5040, 1e-30
          %v5057 = vmax.f32 %v5041, 1e-30
          %v5058 = vmax.f32 %v5042, 1e-30
          %v5059 = vmax.f32 %v5043, 1e-30
          %v5060 = vmax.f32 %v5044, 1e-30
          %v5061 = vmax.f32 %v5045, 1e-30
          %v5062 = vmax.f32 %v5046, 1e-30
          %v5063 = vmax.f32 %v5047, 1e-30
          %v5064 = vmax.f32 %v5048, 1e-30
          %v5065 = vrcp.pop %v5049
          %v5066 = vrcp.pop %v5050
          %v5067 = vrcp.pop %v5051
          %v5068 = vrcp.pop %v5052
          %v5069 = vrcp.pop %v5053
          %v5070 = vrcp.pop %v5054
          %v5071 = vrcp.pop %v5055
          %v5072 = vrcp.pop %v5056
          %v5073 = vrcp.pop %v5057
          %v5074 = vrcp.pop %v5058
          %v5075 = vrcp.pop %v5059
          %v5076 = vrcp.pop %v5060
          %v5077 = vrcp.pop %v5061
          %v5078 = vrcp.pop %v5062
          %v5079 = vrcp.pop %v5063
          %v5080 = vrcp.pop %v5064
          %v5081 = vld [vmem:[%s2362] sm:$0xff]
          %v5082 = vld [vmem:[%s2362 + $0x8] sm:$0xff]
          %v5083 = vld [vmem:[%s2362 + $0x10] sm:$0xff]
          %v5084 = vld [vmem:[%s2362 + $0x18] sm:$0xff]
          %v5085 = vld [vmem:[%s2362 + $0x20] sm:$0xff]
          %v5086 = vld [vmem:[%s2362 + $0x28] sm:$0xff]
          %v5087 = vld [vmem:[%s2362 + $0x30] sm:$0xff]
          %v5088 = vld [vmem:[%s2362 + $0x38] sm:$0xff]
          %v5089 = vld [vmem:[%s2362 + $0x40] sm:$0xff]
          %v5090 = vld [vmem:[%s2362 + $0x48] sm:$0xff]
          %v5091 = vld [vmem:[%s2362 + $0x50] sm:$0xff]
          %v5092 = vld [vmem:[%s2362 + $0x58] sm:$0xff]
          %v5093 = vld [vmem:[%s2362 + $0x60] sm:$0xff]
          %v5094 = vld [vmem:[%s2362 + $0x68] sm:$0xff]
          %v5095 = vld [vmem:[%s2362 + $0x70] sm:$0xff]
          %v5096 = vld [vmem:[%s2362 + $0x78] sm:$0xff]
          %5098 = vset.pattern.permute.xlu0 0
          %5099 = vperm.xlu0 %5098, %v5065
          %v5100 = vpop.permute.xlu0 %5099
          %5103 = vset.pattern.permute.xlu0 0
          %5104 = vperm.xlu0 %5103, %v5066
          %v5105 = vpop.permute.xlu0 %5104
          %5108 = vset.pattern.permute.xlu0 0
          %5109 = vperm.xlu0 %5108, %v5067
          %v5110 = vpop.permute.xlu0 %5109
          %5113 = vset.pattern.permute.xlu0 0
          %5114 = vperm.xlu0 %5113, %v5068
          %v5115 = vpop.permute.xlu0 %5114
          %5118 = vset.pattern.permute.xlu0 0
          %5119 = vperm.xlu0 %5118, %v5069
          %v5120 = vpop.permute.xlu0 %5119
          %5123 = vset.pattern.permute.xlu0 0
          %5124 = vperm.xlu0 %5123, %v5070
          %v5125 = vpop.permute.xlu0 %5124
          %5128 = vset.pattern.permute.xlu0 0
          %5129 = vperm.xlu0 %5128, %v5071
          %v5130 = vpop.permute.xlu0 %5129
          %5133 = vset.pattern.permute.xlu0 0
          %5134 = vperm.xlu0 %5133, %v5072
          %v5135 = vpop.permute.xlu0 %5134
          %5138 = vset.pattern.permute.xlu0 0
          %5139 = vperm.xlu0 %5138, %v5073
          %v5140 = vpop.permute.xlu0 %5139
          %5143 = vset.pattern.permute.xlu0 0
          %5144 = vperm.xlu0 %5143, %v5074
          %v5145 = vpop.permute.xlu0 %5144
          %5148 = vset.pattern.permute.xlu0 0
          %5149 = vperm.xlu0 %5148, %v5075
          %v5150 = vpop.permute.xlu0 %5149
          %5153 = vset.pattern.permute.xlu0 0
          %5154 = vperm.xlu0 %5153, %v5076
          %v5155 = vpop.permute.xlu0 %5154
          %5158 = vset.pattern.permute.xlu0 0
          %5159 = vperm.xlu0 %5158, %v5077
          %v5160 = vpop.permute.xlu0 %5159
          %5163 = vset.pattern.permute.xlu0 0
          %5164 = vperm.xlu0 %5163, %v5078
          %v5165 = vpop.permute.xlu0 %5164
          %5168 = vset.pattern.permute.xlu0 0
          %5169 = vperm.xlu0 %5168, %v5079
          %v5170 = vpop.permute.xlu0 %5169
          %5173 = vset.pattern.permute.xlu0 0
          %5174 = vperm.xlu0 %5173, %v5080
          %v5175 = vpop.permute.xlu0 %5174
          %v5177 = vmul.f32 %v5081, %v5100
          %v5178 = vmul.f32 %v5082, %v5105
          %v5179 = vmul.f32 %v5083, %v5110
          %v5180 = vmul.f32 %v5084, %v5115
          %v5181 = vmul.f32 %v5085, %v5120
          %v5182 = vmul.f32 %v5086, %v5125
          %v5183 = vmul.f32 %v5087, %v5130
          %v5184 = vmul.f32 %v5088, %v5135
          %v5185 = vmul.f32 %v5089, %v5140
          %v5186 = vmul.f32 %v5090, %v5145
          %v5187 = vmul.f32 %v5091, %v5150
          %v5188 = vmul.f32 %v5092, %v5155
          %v5189 = vmul.f32 %v5093, %v5160
          %v5190 = vmul.f32 %v5094, %v5165
          %v5191 = vmul.f32 %v5095, %v5170
          %v5192 = vmul.f32 %v5096, %v5175
          %v5193 = vld [vmem:[%s3301] sm:$0xff]
          %v5194 = vld [vmem:[%s3301 + $0x8] sm:$0xff]
          %v5195 = vld [vmem:[%s3301 + $0x10] sm:$0xff]
          %v5196 = vld [vmem:[%s3301 + $0x18] sm:$0xff]
          %v5197 = vld [vmem:[%s3301 + $0x20] sm:$0xff]
          %v5198 = vld [vmem:[%s3301 + $0x28] sm:$0xff]
          %v5199 = vld [vmem:[%s3301 + $0x30] sm:$0xff]
          %v5200 = vld [vmem:[%s3301 + $0x38] sm:$0xff]
          %v5201 = vld [vmem:[%s3301 + $0x40] sm:$0xff]
          %v5202 = vld [vmem:[%s3301 + $0x48] sm:$0xff]
          %v5203 = vld [vmem:[%s3301 + $0x50] sm:$0xff]
          %v5204 = vld [vmem:[%s3301 + $0x58] sm:$0xff]
          %v5205 = vld [vmem:[%s3301 + $0x60] sm:$0xff]
          %v5206 = vld [vmem:[%s3301 + $0x68] sm:$0xff]
          %v5207 = vld [vmem:[%s3301 + $0x70] sm:$0xff]
          %v5208 = vld [vmem:[%s3301 + $0x78] sm:$0xff]
          %v5209 = vmax.f32 %v5193, 1e-30
          %v5210 = vmax.f32 %v5194, 1e-30
          %v5211 = vmax.f32 %v5195, 1e-30
          %v5212 = vmax.f32 %v5196, 1e-30
          %v5213 = vmax.f32 %v5197, 1e-30
          %v5214 = vmax.f32 %v5198, 1e-30
          %v5215 = vmax.f32 %v5199, 1e-30
          %v5216 = vmax.f32 %v5200, 1e-30
          %v5217 = vmax.f32 %v5201, 1e-30
          %v5218 = vmax.f32 %v5202, 1e-30
          %v5219 = vmax.f32 %v5203, 1e-30
          %v5220 = vmax.f32 %v5204, 1e-30
          %v5221 = vmax.f32 %v5205, 1e-30
          %v5222 = vmax.f32 %v5206, 1e-30
          %v5223 = vmax.f32 %v5207, 1e-30
          %v5224 = vmax.f32 %v5208, 1e-30
          %v5225 = vrcp.pop %v5209
          %v5226 = vrcp.pop %v5210
          %v5227 = vrcp.pop %v5211
          %v5228 = vrcp.pop %v5212
          %v5229 = vrcp.pop %v5213
          %v5230 = vrcp.pop %v5214
          %v5231 = vrcp.pop %v5215
          %v5232 = vrcp.pop %v5216
          %v5233 = vrcp.pop %v5217
          %v5234 = vrcp.pop %v5218
          %v5235 = vrcp.pop %v5219
          %v5236 = vrcp.pop %v5220
          %v5237 = vrcp.pop %v5221
          %v5238 = vrcp.pop %v5222
          %v5239 = vrcp.pop %v5223
          %v5240 = vrcp.pop %v5224
          %v5241 = vld [vmem:[%s3414] sm:$0xff]
          %v5242 = vld [vmem:[%s3414 + $0x8] sm:$0xff]
          %v5243 = vld [vmem:[%s3414 + $0x10] sm:$0xff]
          %v5244 = vld [vmem:[%s3414 + $0x18] sm:$0xff]
          %v5245 = vld [vmem:[%s3414 + $0x20] sm:$0xff]
          %v5246 = vld [vmem:[%s3414 + $0x28] sm:$0xff]
          %v5247 = vld [vmem:[%s3414 + $0x30] sm:$0xff]
          %v5248 = vld [vmem:[%s3414 + $0x38] sm:$0xff]
          %v5249 = vld [vmem:[%s3414 + $0x40] sm:$0xff]
          %v5250 = vld [vmem:[%s3414 + $0x48] sm:$0xff]
          %v5251 = vld [vmem:[%s3414 + $0x50] sm:$0xff]
          %v5252 = vld [vmem:[%s3414 + $0x58] sm:$0xff]
          %v5253 = vld [vmem:[%s3414 + $0x60] sm:$0xff]
          %v5254 = vld [vmem:[%s3414 + $0x68] sm:$0xff]
          %v5255 = vld [vmem:[%s3414 + $0x70] sm:$0xff]
          %v5256 = vld [vmem:[%s3414 + $0x78] sm:$0xff]
          %5258 = vset.pattern.permute.xlu0 0
          %5259 = vperm.xlu0 %5258, %v5225
          %v5260 = vpop.permute.xlu0 %5259
          %5263 = vset.pattern.permute.xlu0 0
          %5264 = vperm.xlu0 %5263, %v5226
          %v5265 = vpop.permute.xlu0 %5264
          %5268 = vset.pattern.permute.xlu0 0
          %5269 = vperm.xlu0 %5268, %v5227
          %v5270 = vpop.permute.xlu0 %5269
          %5273 = vset.pattern.permute.xlu0 0
          %5274 = vperm.xlu0 %5273, %v5228
          %v5275 = vpop.permute.xlu0 %5274
          %5278 = vset.pattern.permute.xlu0 0
          %5279 = vperm.xlu0 %5278, %v5229
          %v5280 = vpop.permute.xlu0 %5279
          %5283 = vset.pattern.permute.xlu0 0
          %5284 = vperm.xlu0 %5283, %v5230
          %v5285 = vpop.permute.xlu0 %5284
          %5288 = vset.pattern.permute.xlu0 0
          %5289 = vperm.xlu0 %5288, %v5231
          %v5290 = vpop.permute.xlu0 %5289
          %5293 = vset.pattern.permute.xlu0 0
          %5294 = vperm.xlu0 %5293, %v5232
          %v5295 = vpop.permute.xlu0 %5294
          %5298 = vset.pattern.permute.xlu0 0
          %5299 = vperm.xlu0 %5298, %v5233
          %v5300 = vpop.permute.xlu0 %5299
          %5303 = vset.pattern.permute.xlu0 0
          %5304 = vperm.xlu0 %5303, %v5234
          %v5305 = vpop.permute.xlu0 %5304
          %5308 = vset.pattern.permute.xlu0 0
          %5309 = vperm.xlu0 %5308, %v5235
          %v5310 = vpop.permute.xlu0 %5309
          %5313 = vset.pattern.permute.xlu0 0
          %5314 = vperm.xlu0 %5313, %v5236
          %v5315 = vpop.permute.xlu0 %5314
          %5318 = vset.pattern.permute.xlu0 0
          %5319 = vperm.xlu0 %5318, %v5237
          %v5320 = vpop.permute.xlu0 %5319
          %5323 = vset.pattern.permute.xlu0 0
          %5324 = vperm.xlu0 %5323, %v5238
          %v5325 = vpop.permute.xlu0 %5324
          %5328 = vset.pattern.permute.xlu0 0
          %5329 = vperm.xlu0 %5328, %v5239
          %v5330 = vpop.permute.xlu0 %5329
          %5333 = vset.pattern.permute.xlu0 0
          %5334 = vperm.xlu0 %5333, %v5240
          %v5335 = vpop.permute.xlu0 %5334
          %v5337 = vmul.f32 %v5241, %v5260
          %v5338 = vmul.f32 %v5242, %v5265
          %v5339 = vmul.f32 %v5243, %v5270
          %v5340 = vmul.f32 %v5244, %v5275
          %v5341 = vmul.f32 %v5245, %v5280
          %v5342 = vmul.f32 %v5246, %v5285
          %v5343 = vmul.f32 %v5247, %v5290
          %v5344 = vmul.f32 %v5248, %v5295
          %v5345 = vmul.f32 %v5249, %v5300
          %v5346 = vmul.f32 %v5250, %v5305
          %v5347 = vmul.f32 %v5251, %v5310
          %v5348 = vmul.f32 %v5252, %v5315
          %v5349 = vmul.f32 %v5253, %v5320
          %v5350 = vmul.f32 %v5254, %v5325
          %v5351 = vmul.f32 %v5255, %v5330
          %v5352 = vmul.f32 %v5256, %v5335
          %v5353 = vld [vmem:[%s4353] sm:$0xff]
          %v5354 = vld [vmem:[%s4353 + $0x8] sm:$0xff]
          %v5355 = vld [vmem:[%s4353 + $0x10] sm:$0xff]
          %v5356 = vld [vmem:[%s4353 + $0x18] sm:$0xff]
          %v5357 = vld [vmem:[%s4353 + $0x20] sm:$0xff]
          %v5358 = vld [vmem:[%s4353 + $0x28] sm:$0xff]
          %v5359 = vld [vmem:[%s4353 + $0x30] sm:$0xff]
          %v5360 = vld [vmem:[%s4353 + $0x38] sm:$0xff]
          %v5361 = vld [vmem:[%s4353 + $0x40] sm:$0xff]
          %v5362 = vld [vmem:[%s4353 + $0x48] sm:$0xff]
          %v5363 = vld [vmem:[%s4353 + $0x50] sm:$0xff]
          %v5364 = vld [vmem:[%s4353 + $0x58] sm:$0xff]
          %v5365 = vld [vmem:[%s4353 + $0x60] sm:$0xff]
          %v5366 = vld [vmem:[%s4353 + $0x68] sm:$0xff]
          %v5367 = vld [vmem:[%s4353 + $0x70] sm:$0xff]
          %v5368 = vld [vmem:[%s4353 + $0x78] sm:$0xff]
          %v5369 = vmax.f32 %v5353, 1e-30
          %v5370 = vmax.f32 %v5354, 1e-30
          %v5371 = vmax.f32 %v5355, 1e-30
          %v5372 = vmax.f32 %v5356, 1e-30
          %v5373 = vmax.f32 %v5357, 1e-30
          %v5374 = vmax.f32 %v5358, 1e-30
          %v5375 = vmax.f32 %v5359, 1e-30
          %v5376 = vmax.f32 %v5360, 1e-30
          %v5377 = vmax.f32 %v5361, 1e-30
          %v5378 = vmax.f32 %v5362, 1e-30
          %v5379 = vmax.f32 %v5363, 1e-30
          %v5380 = vmax.f32 %v5364, 1e-30
          %v5381 = vmax.f32 %v5365, 1e-30
          %v5382 = vmax.f32 %v5366, 1e-30
          %v5383 = vmax.f32 %v5367, 1e-30
          %v5384 = vmax.f32 %v5368, 1e-30
          %v5385 = vrcp.pop %v5369
          %v5386 = vrcp.pop %v5370
          %v5387 = vrcp.pop %v5371
          %v5388 = vrcp.pop %v5372
          %v5389 = vrcp.pop %v5373
          %v5390 = vrcp.pop %v5374
          %v5391 = vrcp.pop %v5375
          %v5392 = vrcp.pop %v5376
          %v5393 = vrcp.pop %v5377
          %v5394 = vrcp.pop %v5378
          %v5395 = vrcp.pop %v5379
          %v5396 = vrcp.pop %v5380
          %v5397 = vrcp.pop %v5381
          %v5398 = vrcp.pop %v5382
          %v5399 = vrcp.pop %v5383
          %v5400 = vrcp.pop %v5384
          %v5401 = vld [vmem:[%s4466] sm:$0xff]
          %v5402 = vld [vmem:[%s4466 + $0x8] sm:$0xff]
          %v5403 = vld [vmem:[%s4466 + $0x10] sm:$0xff]
          %v5404 = vld [vmem:[%s4466 + $0x18] sm:$0xff]
          %v5405 = vld [vmem:[%s4466 + $0x20] sm:$0xff]
          %v5406 = vld [vmem:[%s4466 + $0x28] sm:$0xff]
          %v5407 = vld [vmem:[%s4466 + $0x30] sm:$0xff]
          %v5408 = vld [vmem:[%s4466 + $0x38] sm:$0xff]
          %v5409 = vld [vmem:[%s4466 + $0x40] sm:$0xff]
          %v5410 = vld [vmem:[%s4466 + $0x48] sm:$0xff]
          %v5411 = vld [vmem:[%s4466 + $0x50] sm:$0xff]
          %v5412 = vld [vmem:[%s4466 + $0x58] sm:$0xff]
          %v5413 = vld [vmem:[%s4466 + $0x60] sm:$0xff]
          %v5414 = vld [vmem:[%s4466 + $0x68] sm:$0xff]
          %v5415 = vld [vmem:[%s4466 + $0x70] sm:$0xff]
          %v5416 = vld [vmem:[%s4466 + $0x78] sm:$0xff]
          %5418 = vset.pattern.permute.xlu0 0
          %5419 = vperm.xlu0 %5418, %v5385
          %v5420 = vpop.permute.xlu0 %5419
          %5423 = vset.pattern.permute.xlu0 0
          %5424 = vperm.xlu0 %5423, %v5386
          %v5425 = vpop.permute.xlu0 %5424
          %5428 = vset.pattern.permute.xlu0 0
          %5429 = vperm.xlu0 %5428, %v5387
          %v5430 = vpop.permute.xlu0 %5429
          %5433 = vset.pattern.permute.xlu0 0
          %5434 = vperm.xlu0 %5433, %v5388
          %v5435 = vpop.permute.xlu0 %5434
          %5438 = vset.pattern.permute.xlu0 0
          %5439 = vperm.xlu0 %5438, %v5389
          %v5440 = vpop.permute.xlu0 %5439
          %5443 = vset.pattern.permute.xlu0 0
          %5444 = vperm.xlu0 %5443, %v5390
          %v5445 = vpop.permute.xlu0 %5444
          %5448 = vset.pattern.permute.xlu0 0
          %5449 = vperm.xlu0 %5448, %v5391
          %v5450 = vpop.permute.xlu0 %5449
          %5453 = vset.pattern.permute.xlu0 0
          %5454 = vperm.xlu0 %5453, %v5392
          %v5455 = vpop.permute.xlu0 %5454
          %5458 = vset.pattern.permute.xlu0 0
          %5459 = vperm.xlu0 %5458, %v5393
          %v5460 = vpop.permute.xlu0 %5459
          %5463 = vset.pattern.permute.xlu0 0
          %5464 = vperm.xlu0 %5463, %v5394
          %v5465 = vpop.permute.xlu0 %5464
          %5468 = vset.pattern.permute.xlu0 0
          %5469 = vperm.xlu0 %5468, %v5395
          %v5470 = vpop.permute.xlu0 %5469
          %5473 = vset.pattern.permute.xlu0 0
          %5474 = vperm.xlu0 %5473, %v5396
          %v5475 = vpop.permute.xlu0 %5474
          %5478 = vset.pattern.permute.xlu0 0
          %5479 = vperm.xlu0 %5478, %v5397
          %v5480 = vpop.permute.xlu0 %5479
          %5483 = vset.pattern.permute.xlu0 0
          %5484 = vperm.xlu0 %5483, %v5398
          %v5485 = vpop.permute.xlu0 %5484
          %5488 = vset.pattern.permute.xlu0 0
          %5489 = vperm.xlu0 %5488, %v5399
          %v5490 = vpop.permute.xlu0 %5489
          %5493 = vset.pattern.permute.xlu0 0
          %5494 = vperm.xlu0 %5493, %v5400
          %v5495 = vpop.permute.xlu0 %5494
          %v5497 = vmul.f32 %v5401, %v5420
          %v5498 = vmul.f32 %v5402, %v5425
          %v5499 = vmul.f32 %v5403, %v5430
          %v5500 = vmul.f32 %v5404, %v5435
          %v5501 = vmul.f32 %v5405, %v5440
          %v5502 = vmul.f32 %v5406, %v5445
          %v5503 = vmul.f32 %v5407, %v5450
          %v5504 = vmul.f32 %v5408, %v5455
          %v5505 = vmul.f32 %v5409, %v5460
          %v5506 = vmul.f32 %v5410, %v5465
          %v5507 = vmul.f32 %v5411, %v5470
          %v5508 = vmul.f32 %v5412, %v5475
          %v5509 = vmul.f32 %v5413, %v5480
          %v5510 = vmul.f32 %v5414, %v5485
          %v5511 = vmul.f32 %v5415, %v5490
          %v5512 = vmul.f32 %v5416, %v5495
          %5529 = vrot.lane.b32.xlu0 %v5177, 32
          %v5530 = vpop.permute.xlu0 %5529
          %5531 = vrot.lane.b32.xlu0 %v5178, 32
          %v5532 = vpop.permute.xlu0 %5531
          %5533 = vrot.lane.b32.xlu0 %v5179, 32
          %v5534 = vpop.permute.xlu0 %5533
          %5535 = vrot.lane.b32.xlu0 %v5180, 32
          %v5536 = vpop.permute.xlu0 %5535
          %5537 = vrot.lane.b32.xlu0 %v5181, 32
          %v5538 = vpop.permute.xlu0 %5537
          %5539 = vrot.lane.b32.xlu0 %v5182, 32
          %v5540 = vpop.permute.xlu0 %5539
          %5541 = vrot.lane.b32.xlu0 %v5183, 32
          %v5542 = vpop.permute.xlu0 %5541
          %5543 = vrot.lane.b32.xlu0 %v5184, 32
          %v5544 = vpop.permute.xlu0 %5543
          %5545 = vrot.lane.b32.xlu0 %v5185, 32
          %v5546 = vpop.permute.xlu0 %5545
          %5547 = vrot.lane.b32.xlu0 %v5186, 32
          %v5548 = vpop.permute.xlu0 %5547
          %5549 = vrot.lane.b32.xlu0 %v5187, 32
          %v5550 = vpop.permute.xlu0 %5549
          %5551 = vrot.lane.b32.xlu0 %v5188, 32
          %v5552 = vpop.permute.xlu0 %5551
          %5553 = vrot.lane.b32.xlu0 %v5189, 32
          %v5554 = vpop.permute.xlu0 %5553
          %5555 = vrot.lane.b32.xlu0 %v5190, 32
          %v5556 = vpop.permute.xlu0 %5555
          %5557 = vrot.lane.b32.xlu0 %v5191, 32
          %v5558 = vpop.permute.xlu0 %5557
          %5559 = vrot.lane.b32.xlu0 %v5192, 32
          %v5560 = vpop.permute.xlu0 %5559
          %5593 = vrot.lane.b32.xlu0 %v5337, 64
          %v5594 = vpop.permute.xlu0 %5593
          %5595 = vrot.lane.b32.xlu0 %v5338, 64
          %v5596 = vpop.permute.xlu0 %5595
          %5597 = vrot.lane.b32.xlu0 %v5339, 64
          %v5598 = vpop.permute.xlu0 %5597
          %5599 = vrot.lane.b32.xlu0 %v5340, 64
          %v5600 = vpop.permute.xlu0 %5599
          %5601 = vrot.lane.b32.xlu0 %v5341, 64
          %v5602 = vpop.permute.xlu0 %5601
          %5603 = vrot.lane.b32.xlu0 %v5342, 64
          %v5604 = vpop.permute.xlu0 %5603
          %5605 = vrot.lane.b32.xlu0 %v5343, 64
          %v5606 = vpop.permute.xlu0 %5605
          %5607 = vrot.lane.b32.xlu0 %v5344, 64
          %v5608 = vpop.permute.xlu0 %5607
          %5609 = vrot.lane.b32.xlu0 %v5345, 64
          %v5610 = vpop.permute.xlu0 %5609
          %5611 = vrot.lane.b32.xlu0 %v5346, 64
          %v5612 = vpop.permute.xlu0 %5611
          %5613 = vrot.lane.b32.xlu0 %v5347, 64
          %v5614 = vpop.permute.xlu0 %5613
          %5615 = vrot.lane.b32.xlu0 %v5348, 64
          %v5616 = vpop.permute.xlu0 %5615
          %5617 = vrot.lane.b32.xlu0 %v5349, 64
          %v5618 = vpop.permute.xlu0 %5617
          %5619 = vrot.lane.b32.xlu0 %v5350, 64
          %v5620 = vpop.permute.xlu0 %5619
          %5621 = vrot.lane.b32.xlu0 %v5351, 64
          %v5622 = vpop.permute.xlu0 %5621
          %5623 = vrot.lane.b32.xlu0 %v5352, 64
          %v5624 = vpop.permute.xlu0 %5623
          %5657 = vrot.lane.b32.xlu0 %v5497, 96
          %v5658 = vpop.permute.xlu0 %5657
          %5659 = vrot.lane.b32.xlu0 %v5498, 96
          %v5660 = vpop.permute.xlu0 %5659
          %5661 = vrot.lane.b32.xlu0 %v5499, 96
          %v5662 = vpop.permute.xlu0 %5661
          %5663 = vrot.lane.b32.xlu0 %v5500, 96
          %v5664 = vpop.permute.xlu0 %5663
          %5665 = vrot.lane.b32.xlu0 %v5501, 96
          %v5666 = vpop.permute.xlu0 %5665
          %5667 = vrot.lane.b32.xlu0 %v5502, 96
          %v5668 = vpop.permute.xlu0 %5667
          %5669 = vrot.lane.b32.xlu0 %v5503, 96
          %v5670 = vpop.permute.xlu0 %5669
          %5671 = vrot.lane.b32.xlu0 %v5504, 96
          %v5672 = vpop.permute.xlu0 %5671
          %5673 = vrot.lane.b32.xlu0 %v5505, 96
          %v5674 = vpop.permute.xlu0 %5673
          %5675 = vrot.lane.b32.xlu0 %v5506, 96
          %v5676 = vpop.permute.xlu0 %5675
          %5677 = vrot.lane.b32.xlu0 %v5507, 96
          %v5678 = vpop.permute.xlu0 %5677
          %5679 = vrot.lane.b32.xlu0 %v5508, 96
          %v5680 = vpop.permute.xlu0 %5679
          %5681 = vrot.lane.b32.xlu0 %v5509, 96
          %v5682 = vpop.permute.xlu0 %5681
          %5683 = vrot.lane.b32.xlu0 %v5510, 96
          %v5684 = vpop.permute.xlu0 %5683
          %5685 = vrot.lane.b32.xlu0 %v5511, 96
          %v5686 = vpop.permute.xlu0 %5685
          %5687 = vrot.lane.b32.xlu0 %v5512, 96
          %v5688 = vpop.permute.xlu0 %5687
          %v5705 = vsel %vm1681, %v5017, %v5530
          %v5706 = vsel %vm1681, %v5018, %v5532
          %v5707 = vsel %vm1681, %v5019, %v5534
          %v5708 = vsel %vm1681, %v5020, %v5536
          %v5709 = vsel %vm1681, %v5021, %v5538
          %v5710 = vsel %vm1681, %v5022, %v5540
          %v5711 = vsel %vm1681, %v5023, %v5542
          %v5712 = vsel %vm1681, %v5024, %v5544
          %v5713 = vsel %vm1681, %v5025, %v5546
          %v5714 = vsel %vm1681, %v5026, %v5548
          %v5715 = vsel %vm1681, %v5027, %v5550
          %v5716 = vsel %vm1681, %v5028, %v5552
          %v5717 = vsel %vm1681, %v5029, %v5554
          %v5718 = vsel %vm1681, %v5030, %v5556
          %v5719 = vsel %vm1681, %v5031, %v5558
          %v5720 = vsel %vm1681, %v5032, %v5560
          %vm5721 = vcmask 523264
          %v5722 = vsel %vm5721, %v5705, %v5594
          %v5723 = vsel %vm5721, %v5706, %v5596
          %v5724 = vsel %vm5721, %v5707, %v5598
          %v5725 = vsel %vm5721, %v5708, %v5600
          %v5726 = vsel %vm5721, %v5709, %v5602
          %v5727 = vsel %vm5721, %v5710, %v5604
          %v5728 = vsel %vm5721, %v5711, %v5606
          %v5729 = vsel %vm5721, %v5712, %v5608
          %v5730 = vsel %vm5721, %v5713, %v5610
          %v5731 = vsel %vm5721, %v5714, %v5612
          %v5732 = vsel %vm5721, %v5715, %v5614
          %v5733 = vsel %vm5721, %v5716, %v5616
          %v5734 = vsel %vm5721, %v5717, %v5618
          %v5735 = vsel %vm5721, %v5718, %v5620
          %v5736 = vsel %vm5721, %v5719, %v5622
          %v5737 = vsel %vm5721, %v5720, %v5624
          %vm5738 = vcmask 785408
          %v5739 = vsel %vm5738, %v5722, %v5658
          %v5740 = vsel %vm5738, %v5723, %v5660
          %v5741 = vsel %vm5738, %v5724, %v5662
          %v5742 = vsel %vm5738, %v5725, %v5664
          %v5743 = vsel %vm5738, %v5726, %v5666
          %v5744 = vsel %vm5738, %v5727, %v5668
          %v5745 = vsel %vm5738, %v5728, %v5670
          %v5746 = vsel %vm5738, %v5729, %v5672
          %v5747 = vsel %vm5738, %v5730, %v5674
          %v5748 = vsel %vm5738, %v5731, %v5676
          %v5749 = vsel %vm5738, %v5732, %v5678
          %v5750 = vsel %vm5738, %v5733, %v5680
          %v5751 = vsel %vm5738, %v5734, %v5682
          %v5752 = vsel %vm5738, %v5735, %v5684
          %v5753 = vsel %vm5738, %v5736, %v5686
          %v5754 = vsel %vm5738, %v5737, %v5688
          %5755 = vst [vmem:[%s264] sm:$0xff] %v5739
          %5756 = vst [vmem:[%s264 + $0x8] sm:$0xff] %v5740
          %5757 = vst [vmem:[%s264 + $0x10] sm:$0xff] %v5741
          %5758 = vst [vmem:[%s264 + $0x18] sm:$0xff] %v5742
          %5759 = vst [vmem:[%s264 + $0x20] sm:$0xff] %v5743
          %5760 = vst [vmem:[%s264 + $0x28] sm:$0xff] %v5744
          %5761 = vst [vmem:[%s264 + $0x30] sm:$0xff] %v5745
          %5762 = vst [vmem:[%s264 + $0x38] sm:$0xff] %v5746
          %5763 = vst [vmem:[%s264 + $0x40] sm:$0xff] %v5747
          %5764 = vst [vmem:[%s264 + $0x48] sm:$0xff] %v5748
          %5765 = vst [vmem:[%s264 + $0x50] sm:$0xff] %v5749
          %5766 = vst [vmem:[%s264 + $0x58] sm:$0xff] %v5750
          %5767 = vst [vmem:[%s264 + $0x60] sm:$0xff] %v5751
          %5768 = vst [vmem:[%s264 + $0x68] sm:$0xff] %v5752
          %5769 = vst [vmem:[%s264 + $0x70] sm:$0xff] %v5753
          %5770 = vst [vmem:[%s264 + $0x78] sm:$0xff] %v5754
        $region44: #{tpu_custom_call.1} parent=35 // pred_fallthru
          _
        %s5771 = sand.u32 %s144, 1
        %s5772 = scalar_lea.sflag [#allocation6], %s5771
        %s5773 = sand.u32 %s144, 1
        %s5774 = smul.addr %s5773, 128
        %s5775 = scalar_lea.vmem [#allocation5], %s5774
        // Predicated region
        $region45: #{tpu_custom_call.1} parent=35 // pred_check
          %p5776 = pneg %p154
        $region46: #{tpu_custom_call.1} parent=35 // pred_check_branch
          %5778 = sbr.rel (%p5776) target = $region48
        $region47: #{tpu_custom_call.1} parent=35 // pred_region
          %s5779 = smul.u32 16, %s22
          %5781 = vsyncadd %s5772, 0
          %s5782 = smul.addr %s5779, 8
          %s5783 = scalar_lea.hbm %s4, %s5782
          %s5784 = sshll.u32 %s5775, 4
          %s5785 = int_to_ptr.vmem [resolvable:$true] %s5784
          %s5786 = sshll.u32 %s5783, 4
          %s5787 = int_to_ptr.hbm [resolvable:$true] %s5786
          %5792 = dma.vmem_to_hbm [thread:$0]  %s5785, 2048, %s5787, %s5772, 128, 128, 8
        $region48: #{tpu_custom_call.1} parent=35 // pred_fallthru
          _
      $region36: #{tpu_custom_call.1} parent=5 // pred_fallthru
        _
      %p5793 = scmp.le.s32.totalorder 2, %s13
      // Predicated region
      $region49: #{tpu_custom_call.1} parent=5 // pred_check
        %p5794 = pneg %p5793
      $region50: #{tpu_custom_call.1} parent=5 // pred_check_branch
        %5796 = sbr.rel (%p5794) target = $region52
      $region51: #{tpu_custom_call.1} parent=5 // pred_region
        %s5797 = ssub.s32 %s13, 2
        // Predicated region
        $region53: #{tpu_custom_call.1} parent=51 // pred_check
          %p5798 = pneg %p160
        $region54: #{tpu_custom_call.1} parent=51 // pred_check_branch
          %5800 = sbr.rel (%p5798) target = $region56
        $region55: #{tpu_custom_call.1} parent=51 // pred_region
          %s5801 = sand.u32 %s145, 1
          %s5802 = scalar_lea.sflag [#allocation6], %s5801
          %s5803 = sand.u32 %s145, 1
          %s5804 = smul.addr %s5803, 128
          %s5805 = scalar_lea.vmem [#allocation5], %s5804
          %5807 = dma.done %s5802, 2048
        $region56: #{tpu_custom_call.1} parent=51 // pred_fallthru
          _
      $region52: #{tpu_custom_call.1} parent=5 // pred_fallthru
        _
    $region6: #{tpu_custom_call.1} parent=1 // loop_footer
      %s17 = sadd.s32 1, %s13
    $region7: #{tpu_custom_call.1} parent=1 // loop_footer_branch
      %12 = sbr.rel target = $region3
    $region8: #{tpu_custom_call.1} parent=1 // loop_exit
      _
    %5808 = vsyncpa [#allocation6], 1
    %s5809 = scalar_lea.sflag [#allocation6], 1
    %5810 = vsyncpa %s5809, 1

</llo_original>
